<compile_context>
chip_gen: v5e
topology: v5e:2x2
jax: 0.10.0
libtpu: 0.0.40
codegen_flags: <defaults>
</compile_context>

<pallas_src>
import functools

import jax
import jax.numpy as jnp
from jax.experimental import pallas as pl
from jax.experimental.pallas import tpu as pltpu


def _round_up(x, m):
    return (x + m - 1) // m * m


# ----------------------------------------------------------------------------
# Fused tiled matmul (+ per-feature affine, + optional ReLU) kernels
# ----------------------------------------------------------------------------

def _mm_scale_shift_kernel(x_ref, w_ref, s_ref, t_ref, o_ref, acc_ref, *, relu):
    """o = relu?(x @ w * s + t), accumulated over the K grid axis."""
    @pl.when(pl.program_id(2) == 0)
    def _():
        acc_ref[...] = jnp.zeros_like(acc_ref)

    acc_ref[...] += jnp.dot(x_ref[...], w_ref[...],
                            preferred_element_type=jnp.float32)

    @pl.when(pl.program_id(2) == pl.num_programs(2) - 1)
    def _():
        out = acc_ref[...] * s_ref[...] + t_ref[...]
        if relu:
            out = jnp.maximum(out, 0.0)
        o_ref[...] = out.astype(o_ref.dtype)


def _mm_shift_kernel(x_ref, w_ref, t_ref, o_ref, acc_ref, *, relu):
    """o = relu?(x @ w + t)  (bias-only epilogue; no scale multiply)."""
    @pl.when(pl.program_id(2) == 0)
    def _():
        acc_ref[...] = jnp.zeros_like(acc_ref)

    acc_ref[...] += jnp.dot(x_ref[...], w_ref[...],
                            preferred_element_type=jnp.float32)

    @pl.when(pl.program_id(2) == pl.num_programs(2) - 1)
    def _():
        out = acc_ref[...] + t_ref[...]
        if relu:
            out = jnp.maximum(out, 0.0)
        o_ref[...] = out.astype(o_ref.dtype)


def matmul_affine(x, w, shift, scale=None, *, relu=False,
                  tm=256, tn=256, tk=512):
    """y = relu?(x @ w [* scale] + shift).

    x: (M, K) f32, w: (K, N) f32, scale/shift: (N,) f32  ->  (M, N) f32.
    MXU inputs are cast to bf16; accumulation + epilogue stay in f32.
    M/N/K are zero-padded to tile multiples; N padding keeps the output
    lane-dense (multiple of 128) so stores are unmasked.
    """
    M, K = x.shape
    Kw, N = w.shape
    assert K == Kw, (x.shape, w.shape)

    # Clamp tiles to the (aligned) problem size; keep sublane/lane alignment.
    tm = min(tm, _round_up(M, 16))      # 16 sublanes: bf16-friendly
    tn = min(tn, _round_up(N, 128))     # lane-dense outputs
    tk = min(tk, _round_up(K, 128))
    Mp, Np, Kp = _round_up(M, tm), _round_up(N, tn), _round_up(K, tk)

    xp = jnp.zeros((Mp, Kp), jnp.bfloat16).at[:M, :K].set(
        x.astype(jnp.bfloat16))
    wp = jnp.zeros((Kp, Np), jnp.bfloat16).at[:K, :N].set(
        w.astype(jnp.bfloat16))
    tp = jnp.zeros((1, Np), jnp.float32).at[0, :N].set(
        shift.astype(jnp.float32))

    x_spec = pl.BlockSpec((tm, tk), lambda i, j, k: (i, k))
    w_spec = pl.BlockSpec((tk, tn), lambda i, j, k: (k, j))
    v_spec = pl.BlockSpec((1, tn), lambda i, j, k: (0, j))

    if scale is not None:
        sp = jnp.ones((1, Np), jnp.float32).at[0, :N].set(
            scale.astype(jnp.float32))
        kernel = functools.partial(_mm_scale_shift_kernel, relu=relu)
        in_specs = [x_spec, w_spec, v_spec, v_spec]
        operands = (xp, wp, sp, tp)
    else:
        kernel = functools.partial(_mm_shift_kernel, relu=relu)
        in_specs = [x_spec, w_spec, v_spec]
        operands = (xp, wp, tp)

    out = pl.pallas_call(
        kernel,
        out_shape=jax.ShapeDtypeStruct((Mp, Np), jnp.float32),
        grid=(Mp // tm, Np // tn, Kp // tk),
        in_specs=in_specs,
        out_specs=pl.BlockSpec((tm, tn), lambda i, j, k: (i, j)),
        scratch_shapes=[pltpu.VMEM((tm, tn), jnp.float32)],
        compiler_params=pltpu.CompilerParams(
            dimension_semantics=("parallel", "parallel", "arbitrary"),
            vmem_limit_bytes=32 * 1024 * 1024,
        ),
    )(*operands)
    return out[:M, :N]


# ----------------------------------------------------------------------------
# ResClassifier forward (inference path)
# ----------------------------------------------------------------------------

def res_classifier_forward(x, params, *, reverse=False):
    """x: (batch, num_unit) -> logits (batch, num_classes)."""
    # GradReverse is identity in the forward pass (it only negates gradients).
    # nn.Dropout is identity at inference time.
    # TODO(synk): training-mode dropout (RNG masking) not implemented.
    del reverse
    h = x.astype(jnp.float32)
    for lyr in params['hidden']:
        # Linear + folded BatchNorm1d + ReLU in one fused kernel.
        h = matmul_affine(h, lyr['w'], lyr['shift'], scale=lyr['scale'],
                          relu=True)
    # Final Linear: bias-only epilogue (no scale multiply).
    return matmul_affine(h, params['fc_w'], params['fc_b'], scale=None,
                         relu=False)


def reference_forward(x, params):
    """Pure-JAX f32 reference for validation."""
    h = x.astype(jnp.float32)
    for lyr in params['hidden']:
        h = jnp.maximum(h @ lyr['w'] * lyr['scale'] + lyr['shift'], 0.0)
    return h @ params['fc_w'] + params['fc_b']


# ----------------------------------------------------------------------------
# Deterministic synthetic parameter init (no checkpoint loading)
# ----------------------------------------------------------------------------

class KeyGen:
    def __init__(self, seed=0):
        self._key = jax.random.PRNGKey(seed)
        self._i = 0

    def __call__(self):
        self._i += 1
        return jax.random.fold_in(self._key, self._i)


def init_params(kg, num_unit, middle, num_classes, num_layer=2, eps=1e-5):
    hidden = []
    in_f = num_unit
    for _ in range(num_layer):
        w = (jax.random.normal(kg(), (in_f, middle), jnp.float32)
             * (2.0 / in_f) ** 0.5)
        b = 0.01 * jax.random.normal(kg(), (middle,), jnp.float32)
        gamma = 1.0 + 0.1 * jax.random.normal(kg(), (middle,), jnp.float32)
        beta = 0.05 * jax.random.normal(kg(), (middle,), jnp.float32)
        mean = 0.05 * jax.random.normal(kg(), (middle,), jnp.float32)
        var = 1.0 + 0.1 * jnp.abs(
            jax.random.normal(kg(), (middle,), jnp.float32))
        # Fold inference-mode BatchNorm1d around the Linear:
        #   BN(x @ W + b) = (x @ W) * scale + ((b - mean) * scale + beta)
        scale = gamma / jnp.sqrt(var + eps)
        shift = (b - mean) * scale + beta
        hidden.append({'w': w, 'scale': scale, 'shift': shift})
        in_f = middle
    fc_w = (jax.random.normal(kg(), (in_f, num_classes), jnp.float32)
            * (1.0 / in_f) ** 0.5)
    fc_b = 0.01 * jax.random.normal(kg(), (num_classes,), jnp.float32)
    return {'hidden': hidden, 'fc_w': fc_w, 'fc_b': fc_b}


# ----------------------------------------------------------------------------
# Main
# ----------------------------------------------------------------------------

if __name__ == "__main__":
    # Small, lane-friendly stand-ins for the ResClassifier defaults
    # (num_unit=2048, middle=1000, num_classes=6, num_layer=2).  These shapes
    # still exercise the multi-step K accumulation and multi-tile N path.
    BATCH, NUM_UNIT, MIDDLE, NUM_CLASSES = 64, 1024, 512, 6

    kg = KeyGen(0)
    params = init_params(kg, NUM_UNIT, MIDDLE, NUM_CLASSES, num_layer=2)
    x = jax.random.normal(jax.random.PRNGKey(0), (BATCH, NUM_UNIT),
                          jnp.float32)

    fwd = jax.jit(functools.partial(res_classifier_forward, params=params))
    out = jax.block_until_ready(fwd(x))

    assert out.shape == (BATCH, NUM_CLASSES), out.shape
    assert bool(jnp.all(jnp.isfinite(out)))

    # Validate against the pure-JAX f32 reference (bf16 MXU inputs -> relaxed tol).
    ref = reference_forward(x, params)
    max_err = float(jnp.max(jnp.abs(out - ref)))
    assert bool(jnp.allclose(out, ref, rtol=1e-1, atol=1e-1)), max_err

    print("KERNEL_OK")
</pallas_src>

<mosaic_0001>
module attributes {stable_mosaic.version = 11 : i64} {
  func.func @_mm_scale_shift_kernel(%arg0: i32, %arg1: i32, %arg2: i32, %arg3: memref<64x512xbf16, #tpu.memory_space<vmem>>, %arg4: memref<512x256xbf16, #tpu.memory_space<vmem>>, %arg5: memref<1x256xf32, #tpu.memory_space<vmem>>, %arg6: memref<1x256xf32, #tpu.memory_space<vmem>>, %arg7: memref<64x256xf32, #tpu.memory_space<vmem>>, %arg8: memref<64x256xf32, #tpu.memory_space<vmem>>) attributes {dimension_semantics = [#tpu.dimension_semantics<parallel>, #tpu.dimension_semantics<parallel>, #tpu.dimension_semantics<arbitrary>], iteration_bounds = array<i64: 1, 2, 1>, scalar_prefetch = 0 : i64, scratch_operands = 1 : i64, tpu.core_type = #tpu.core_type<tc>, window_params = [{transform_indices = @transform_0, window_bounds = array<i64: 64, 512>}, {transform_indices = @transform_1, window_bounds = array<i64: 512, 256>}, {transform_indices = @transform_2, window_bounds = array<i64: 1, 256>}, {transform_indices = @transform_3, window_bounds = array<i64: 1, 256>}, {transform_indices = @transform_4, window_bounds = array<i64: 64, 256>}]} {
    %c0_i32 = arith.constant 0 : i32
    %0 = arith.cmpi eq, %arg2, %c0_i32 : i32
    %1 = arith.extui %0 : i1 to i32
    %c0_i32_0 = arith.constant 0 : i32
    %2 = arith.cmpi ne, %1, %c0_i32_0 : i32
    scf.if %2 {
      %cst_10 = arith.constant 0.000000e+00 : f32
      %12 = vector.broadcast %cst_10 : f32 to vector<64x256xf32>
      %c0_11 = arith.constant 0 : index
      %c0_12 = arith.constant 0 : index
      %13 = vector.load %arg8[%c0_11, %c0_12] : memref<64x256xf32, #tpu.memory_space<vmem>>, vector<64x256xf32>
      tpu.vector_store %arg8[%c0_11, %c0_12], %12 {strides = array<i32>} : memref<64x256xf32, #tpu.memory_space<vmem>>, vector<64x256xf32>,
    } else {
    }
    %c0 = arith.constant 0 : index
    %c0_1 = arith.constant 0 : index
    %3 = vector.load %arg8[%c0, %c0_1] : memref<64x256xf32, #tpu.memory_space<vmem>>, vector<64x256xf32>
    %c0_2 = arith.constant 0 : index
    %c0_3 = arith.constant 0 : index
    %4 = vector.load %arg3[%c0_2, %c0_3] : memref<64x512xbf16, #tpu.memory_space<vmem>>, vector<64x512xbf16>
    %c0_4 = arith.constant 0 : index
    %c0_5 = arith.constant 0 : index
    %5 = vector.load %arg4[%c0_4, %c0_5] : memref<512x256xbf16, #tpu.memory_space<vmem>>, vector<512x256xbf16>
    %cst = arith.constant dense<0.000000e+00> : vector<64x256xf32>
    %6 = tpu.matmul %4, %5, %cst {dimension_numbers = #tpu.dot_dimension_numbers<[1], [0], [0], [1], [0, 0, 1, 1], [], []>} : vector<64x512xbf16>, vector<512x256xbf16>, vector<64x256xf32> -> vector<64x256xf32>
    %7 = arith.addf %3, %6 : vector<64x256xf32>
    %c0_6 = arith.constant 0 : index
    %c0_7 = arith.constant 0 : index
    %8 = vector.load %arg8[%c0_6, %c0_7] : memref<64x256xf32, #tpu.memory_space<vmem>>, vector<64x256xf32>
    tpu.vector_store %arg8[%c0_6, %c0_7], %7 {strides = array<i32>} : memref<64x256xf32, #tpu.memory_space<vmem>>, vector<64x256xf32>,
    %c0_i32_8 = arith.constant 0 : i32
    %9 = arith.cmpi eq, %arg2, %c0_i32_8 : i32
    %10 = arith.extui %9 : i1 to i32
    %c0_i32_9 = arith.constant 0 : i32
    %11 = arith.cmpi ne, %10, %c0_i32_9 : i32
    scf.if %11 {
      %c0_10 = arith.constant 0 : index
      %c0_11 = arith.constant 0 : index
      %12 = vector.load %arg8[%c0_10, %c0_11] : memref<64x256xf32, #tpu.memory_space<vmem>>, vector<64x256xf32>
      %c0_12 = arith.constant 0 : index
      %c0_13 = arith.constant 0 : index
      %13 = vector.load %arg5[%c0_12, %c0_13] : memref<1x256xf32, #tpu.memory_space<vmem>>, vector<1x256xf32>
      %14 = vector.broadcast %13 : vector<1x256xf32> to vector<64x256xf32>
      %15 = arith.mulf %12, %14 : vector<64x256xf32>
      %c0_14 = arith.constant 0 : index
      %c0_15 = arith.constant 0 : index
      %16 = vector.load %arg6[%c0_14, %c0_15] : memref<1x256xf32, #tpu.memory_space<vmem>>, vector<1x256xf32>
      %17 = vector.broadcast %16 : vector<1x256xf32> to vector<64x256xf32>
      %18 = arith.addf %15, %17 : vector<64x256xf32>
      %cst_16 = arith.constant 0.000000e+00 : f32
      %19 = vector.broadcast %cst_16 : f32 to vector<64x256xf32>
      %20 = arith.maximumf %18, %19 : vector<64x256xf32>
      %c0_17 = arith.constant 0 : index
      %c0_18 = arith.constant 0 : index
      %21 = vector.load %arg7[%c0_17, %c0_18] : memref<64x256xf32, #tpu.memory_space<vmem>>, vector<64x256xf32>
      tpu.vector_store %arg7[%c0_17, %c0_18], %20 {strides = array<i32>} : memref<64x256xf32, #tpu.memory_space<vmem>>, vector<64x256xf32>,
    } else {
    }
    return
  }
  func.func @transform_0(%arg0: i32, %arg1: i32, %arg2: i32) -> (i32, i32) {
    %c0_i32 = arith.constant 0 : i32
    return %arg0, %arg2 : i32, i32
  }
  func.func @transform_1(%arg0: i32, %arg1: i32, %arg2: i32) -> (i32, i32) {
    %c0_i32 = arith.constant 0 : i32
    return %arg2, %arg1 : i32, i32
  }
  func.func @transform_2(%arg0: i32, %arg1: i32, %arg2: i32) -> (i32, i32) {
    %c0_i32 = arith.constant 0 : i32
    %c0_i32_0 = arith.constant 0 : i32
    return %c0_i32, %arg1 : i32, i32
  }
  func.func @transform_3(%arg0: i32, %arg1: i32, %arg2: i32) -> (i32, i32) {
    %c0_i32 = arith.constant 0 : i32
    %c0_i32_0 = arith.constant 0 : i32
    return %c0_i32, %arg1 : i32, i32
  }
  func.func @transform_4(%arg0: i32, %arg1: i32, %arg2: i32) -> (i32, i32) {
    %c0_i32 = arith.constant 0 : i32
    return %arg0, %arg1 : i32, i32
  }
}

module attributes {stable_mosaic.version = 11 : i64} {
  func.func @_mm_scale_shift_kernel(%arg0: i32, %arg1: i32, %arg2: i32, %arg3: memref<64x512xbf16, #tpu.memory_space<vmem>>, %arg4: memref<512x256xbf16, #tpu.memory_space<vmem>>, %arg5: memref<1x256xf32, #tpu.memory_space<vmem>>, %arg6: memref<1x256xf32, #tpu.memory_space<vmem>>, %arg7: memref<64x256xf32, #tpu.memory_space<vmem>>, %arg8: memref<64x256xf32, #tpu.memory_space<vmem>>) attributes {dimension_semantics = [#tpu.dimension_semantics<parallel>, #tpu.dimension_semantics<parallel>, #tpu.dimension_semantics<arbitrary>], iteration_bounds = array<i64: 1, 2, 2>, scalar_prefetch = 0 : i64, scratch_operands = 1 : i64, tpu.core_type = #tpu.core_type<tc>, window_params = [{transform_indices = @transform_0, window_bounds = array<i64: 64, 512>}, {transform_indices = @transform_1, window_bounds = array<i64: 512, 256>}, {transform_indices = @transform_2, window_bounds = array<i64: 1, 256>}, {transform_indices = @transform_3, window_bounds = array<i64: 1, 256>}, {transform_indices = @transform_4, window_bounds = array<i64: 64, 256>}]} {
    %c0_i32 = arith.constant 0 : i32
    %0 = arith.cmpi eq, %arg2, %c0_i32 : i32
    %1 = arith.extui %0 : i1 to i32
    %c0_i32_0 = arith.constant 0 : i32
    %2 = arith.cmpi ne, %1, %c0_i32_0 : i32
    scf.if %2 {
      %cst_9 = arith.constant 0.000000e+00 : f32
      %12 = vector.broadcast %cst_9 : f32 to vector<64x256xf32>
      %c0_10 = arith.constant 0 : index
      %c0_11 = arith.constant 0 : index
      %13 = vector.load %arg8[%c0_10, %c0_11] : memref<64x256xf32, #tpu.memory_space<vmem>>, vector<64x256xf32>
      tpu.vector_store %arg8[%c0_10, %c0_11], %12 {strides = array<i32>} : memref<64x256xf32, #tpu.memory_space<vmem>>, vector<64x256xf32>,
    } else {
    }
    %c0 = arith.constant 0 : index
    %c0_1 = arith.constant 0 : index
    %3 = vector.load %arg8[%c0, %c0_1] : memref<64x256xf32, #tpu.memory_space<vmem>>, vector<64x256xf32>
    %c0_2 = arith.constant 0 : index
    %c0_3 = arith.constant 0 : index
    %4 = vector.load %arg3[%c0_2, %c0_3] : memref<64x512xbf16, #tpu.memory_space<vmem>>, vector<64x512xbf16>
    %c0_4 = arith.constant 0 : index
    %c0_5 = arith.constant 0 : index
    %5 = vector.load %arg4[%c0_4, %c0_5] : memref<512x256xbf16, #tpu.memory_space<vmem>>, vector<512x256xbf16>
    %cst = arith.constant dense<0.000000e+00> : vector<64x256xf32>
    %6 = tpu.matmul %4, %5, %cst {dimension_numbers = #tpu.dot_dimension_numbers<[1], [0], [0], [1], [0, 0, 1, 1], [], []>} : vector<64x512xbf16>, vector<512x256xbf16>, vector<64x256xf32> -> vector<64x256xf32>
    %7 = arith.addf %3, %6 : vector<64x256xf32>
    %c0_6 = arith.constant 0 : index
    %c0_7 = arith.constant 0 : index
    %8 = vector.load %arg8[%c0_6, %c0_7] : memref<64x256xf32, #tpu.memory_space<vmem>>, vector<64x256xf32>
    tpu.vector_store %arg8[%c0_6, %c0_7], %7 {strides = array<i32>} : memref<64x256xf32, #tpu.memory_space<vmem>>, vector<64x256xf32>,
    %c1_i32 = arith.constant 1 : i32
    %9 = arith.cmpi eq, %arg2, %c1_i32 : i32
    %10 = arith.extui %9 : i1 to i32
    %c0_i32_8 = arith.constant 0 : i32
    %11 = arith.cmpi ne, %10, %c0_i32_8 : i32
    scf.if %11 {
      %c0_9 = arith.constant 0 : index
      %c0_10 = arith.constant 0 : index
      %12 = vector.load %arg8[%c0_9, %c0_10] : memref<64x256xf32, #tpu.memory_space<vmem>>, vector<64x256xf32>
      %c0_11 = arith.constant 0 : index
      %c0_12 = arith.constant 0 : index
      %13 = vector.load %arg5[%c0_11, %c0_12] : memref<1x256xf32, #tpu.memory_space<vmem>>, vector<1x256xf32>
      %14 = vector.broadcast %13 : vector<1x256xf32> to vector<64x256xf32>
      %15 = arith.mulf %12, %14 : vector<64x256xf32>
      %c0_13 = arith.constant 0 : index
      %c0_14 = arith.constant 0 : index
      %16 = vector.load %arg6[%c0_13, %c0_14] : memref<1x256xf32, #tpu.memory_space<vmem>>, vector<1x256xf32>
      %17 = vector.broadcast %16 : vector<1x256xf32> to vector<64x256xf32>
      %18 = arith.addf %15, %17 : vector<64x256xf32>
      %cst_15 = arith.constant 0.000000e+00 : f32
      %19 = vector.broadcast %cst_15 : f32 to vector<64x256xf32>
      %20 = arith.maximumf %18, %19 : vector<64x256xf32>
      %c0_16 = arith.constant 0 : index
      %c0_17 = arith.constant 0 : index
      %21 = vector.load %arg7[%c0_16, %c0_17] : memref<64x256xf32, #tpu.memory_space<vmem>>, vector<64x256xf32>
      tpu.vector_store %arg7[%c0_16, %c0_17], %20 {strides = array<i32>} : memref<64x256xf32, #tpu.memory_space<vmem>>, vector<64x256xf32>,
    } else {
    }
    return
  }
  func.func @transform_0(%arg0: i32, %arg1: i32, %arg2: i32) -> (i32, i32) {
    %c0_i32 = arith.constant 0 : i32
    return %arg0, %arg2 : i32, i32
  }
  func.func @transform_1(%arg0: i32, %arg1: i32, %arg2: i32) -> (i32, i32) {
    %c0_i32 = arith.constant 0 : i32
    return %arg2, %arg1 : i32, i32
  }
  func.func @transform_2(%arg0: i32, %arg1: i32, %arg2: i32) -> (i32, i32) {
    %c0_i32 = arith.constant 0 : i32
    %c0_i32_0 = arith.constant 0 : i32
    return %c0_i32, %arg1 : i32, i32
  }
  func.func @transform_3(%arg0: i32, %arg1: i32, %arg2: i32) -> (i32, i32) {
    %c0_i32 = arith.constant 0 : i32
    %c0_i32_0 = arith.constant 0 : i32
    return %c0_i32, %arg1 : i32, i32
  }
  func.func @transform_4(%arg0: i32, %arg1: i32, %arg2: i32) -> (i32, i32) {
    %c0_i32 = arith.constant 0 : i32
    return %arg0, %arg1 : i32, i32
  }
}

module attributes {stable_mosaic.version = 11 : i64} {
  func.func @_mm_shift_kernel(%arg0: i32, %arg1: i32, %arg2: i32, %arg3: memref<64x512xbf16, #tpu.memory_space<vmem>>, %arg4: memref<512x128xbf16, #tpu.memory_space<vmem>>, %arg5: memref<1x128xf32, #tpu.memory_space<vmem>>, %arg6: memref<64x128xf32, #tpu.memory_space<vmem>>, %arg7: memref<64x128xf32, #tpu.memory_space<vmem>>) attributes {dimension_semantics = [#tpu.dimension_semantics<parallel>, #tpu.dimension_semantics<parallel>, #tpu.dimension_semantics<arbitrary>], iteration_bounds = array<i64: 1, 1, 1>, scalar_prefetch = 0 : i64, scratch_operands = 1 : i64, tpu.core_type = #tpu.core_type<tc>, window_params = [{transform_indices = @transform_0, window_bounds = array<i64: 64, 512>}, {transform_indices = @transform_1, window_bounds = array<i64: 512, 128>}, {transform_indices = @transform_2, window_bounds = array<i64: 1, 128>}, {transform_indices = @transform_3, window_bounds = array<i64: 64, 128>}]} {
    %c0_i32 = arith.constant 0 : i32
    %0 = arith.cmpi eq, %arg2, %c0_i32 : i32
    %1 = arith.extui %0 : i1 to i32
    %c0_i32_0 = arith.constant 0 : i32
    %2 = arith.cmpi ne, %1, %c0_i32_0 : i32
    scf.if %2 {
      %cst_10 = arith.constant 0.000000e+00 : f32
      %12 = vector.broadcast %cst_10 : f32 to vector<64x128xf32>
      %c0_11 = arith.constant 0 : index
      %c0_12 = arith.constant 0 : index
      %13 = vector.load %arg7[%c0_11, %c0_12] : memref<64x128xf32, #tpu.memory_space<vmem>>, vector<64x128xf32>
      tpu.vector_store %arg7[%c0_11, %c0_12], %12 {strides = array<i32>} : memref<64x128xf32, #tpu.memory_space<vmem>>, vector<64x128xf32>,
    } else {
    }
    %c0 = arith.constant 0 : index
    %c0_1 = arith.constant 0 : index
    %3 = vector.load %arg7[%c0, %c0_1] : memref<64x128xf32, #tpu.memory_space<vmem>>, vector<64x128xf32>
    %c0_2 = arith.constant 0 : index
    %c0_3 = arith.constant 0 : index
    %4 = vector.load %arg3[%c0_2, %c0_3] : memref<64x512xbf16, #tpu.memory_space<vmem>>, vector<64x512xbf16>
    %c0_4 = arith.constant 0 : index
    %c0_5 = arith.constant 0 : index
    %5 = vector.load %arg4[%c0_4, %c0_5] : memref<512x128xbf16, #tpu.memory_space<vmem>>, vector<512x128xbf16>
    %cst = arith.constant dense<0.000000e+00> : vector<64x128xf32>
    %6 = tpu.matmul %4, %5, %cst {dimension_numbers = #tpu.dot_dimension_numbers<[1], [0], [0], [1], [0, 0, 1, 1], [], []>} : vector<64x512xbf16>, vector<512x128xbf16>, vector<64x128xf32> -> vector<64x128xf32>
    %7 = arith.addf %3, %6 : vector<64x128xf32>
    %c0_6 = arith.constant 0 : index
    %c0_7 = arith.constant 0 : index
    %8 = vector.load %arg7[%c0_6, %c0_7] : memref<64x128xf32, #tpu.memory_space<vmem>>, vector<64x128xf32>
    tpu.vector_store %arg7[%c0_6, %c0_7], %7 {strides = array<i32>} : memref<64x128xf32, #tpu.memory_space<vmem>>, vector<64x128xf32>,
    %c0_i32_8 = arith.constant 0 : i32
    %9 = arith.cmpi eq, %arg2, %c0_i32_8 : i32
    %10 = arith.extui %9 : i1 to i32
    %c0_i32_9 = arith.constant 0 : i32
    %11 = arith.cmpi ne, %10, %c0_i32_9 : i32
    scf.if %11 {
      %c0_10 = arith.constant 0 : index
      %c0_11 = arith.constant 0 : index
      %12 = vector.load %arg7[%c0_10, %c0_11] : memref<64x128xf32, #tpu.memory_space<vmem>>, vector<64x128xf32>
      %c0_12 = arith.constant 0 : index
      %c0_13 = arith.constant 0 : index
      %13 = vector.load %arg5[%c0_12, %c0_13] : memref<1x128xf32, #tpu.memory_space<vmem>>, vector<1x128xf32>
      %14 = vector.broadcast %13 : vector<1x128xf32> to vector<64x128xf32>
      %15 = arith.addf %12, %14 : vector<64x128xf32>
      %c0_14 = arith.constant 0 : index
      %c0_15 = arith.constant 0 : index
      %16 = vector.load %arg6[%c0_14, %c0_15] : memref<64x128xf32, #tpu.memory_space<vmem>>, vector<64x128xf32>
      tpu.vector_store %arg6[%c0_14, %c0_15], %15 {strides = array<i32>} : memref<64x128xf32, #tpu.memory_space<vmem>>, vector<64x128xf32>,
    } else {
    }
    return
  }
  func.func @transform_0(%arg0: i32, %arg1: i32, %arg2: i32) -> (i32, i32) {
    %c0_i32 = arith.constant 0 : i32
    return %arg0, %arg2 : i32, i32
  }
  func.func @transform_1(%arg0: i32, %arg1: i32, %arg2: i32) -> (i32, i32) {
    %c0_i32 = arith.constant 0 : i32
    return %arg2, %arg1 : i32, i32
  }
  func.func @transform_2(%arg0: i32, %arg1: i32, %arg2: i32) -> (i32, i32) {
    %c0_i32 = arith.constant 0 : i32
    %c0_i32_0 = arith.constant 0 : i32
    return %c0_i32, %arg1 : i32, i32
  }
  func.func @transform_3(%arg0: i32, %arg1: i32, %arg2: i32) -> (i32, i32) {
    %c0_i32 = arith.constant 0 : i32
    return %arg0, %arg1 : i32, i32
  }
}

</mosaic_0001>

<llo_original>
// kernel: res_classifier_forward.3
$region0: #{res_classifier_forward.3}
  #allocation0 [shape = 'u32[]', space=smem, size = 0x4, offset = 0x4, fixed_abs, tag = 'smem constant byte address 0x4 - core index']
  #allocation1 [shape = 'u32[72,128]{1,0:T(1,128)}', space=vmem, size = 0x9000, scoped, tag = 'internal scratch']
  #allocation2 [shape = 'f32[64,256]{1,0:T(8,128)}', space=vmem, size = 0x10000, scoped, tag = 'scratch operand']
  %s0 = inlined_call_operand.vmem [shape: bf16[64,1024], index: 0, kind: input, shape index: {}]
  %s1 = inlined_call_operand.hbm [shape: bf16[1024,512], index: 1, kind: input, shape index: {}]
  %s2 = inlined_call_operand.vmem [shape: f32[1,512], index: 2, kind: input, shape index: {}]
  %s3 = inlined_call_operand.hbm [shape: f32[1,512], index: 3, kind: input, shape index: {}]
  %s4 = inlined_call_operand.vmem [shape: f32[64,512], index: 4, kind: output, shape index: {}]
  %s5 = sld [smem:[#allocation0]]
  $region107: #{res_classifier_forward.3} parent=0
    _
  %s7 = ssub.s32 1, %s5
  %s8 = scalar_select 0, %s7, %s5
  $region1: #{res_classifier_forward.3} parent=0
    #allocation3 [shape = 'u8[131072]{0}', space=vmem, size = 0x20000, scoped, tag = 'input window, operand 0']
    #allocation4 [shape = 'u8[524288]{0}', space=vmem, size = 0x80000, scoped, tag = 'input window, operand 1']
    #allocation5 [shape = 's32[2]{0}', space=sflag, size = 0x8, scoped, tag = 'scoped memory for res_classifier_forward.3']
    #allocation6 [shape = 'u8[2048]{0}', space=vmem, size = 0x800, scoped, tag = 'input window, operand 3']
    #allocation7 [shape = 's32[2]{0}', space=sflag, size = 0x8, scoped, tag = 'scoped memory for res_classifier_forward.3']
    #allocation8 [shape = 'u8[131072]{0}', space=vmem, size = 0x20000, scoped, tag = 'output window, operand 0']
    %9 = vsyncpa [#allocation5], 0
    %s10 = scalar_lea.sflag [#allocation5], 1
    %11 = vsyncpa %s10, 0
    %12 = vsyncpa [#allocation7], 0
    %s13 = scalar_lea.sflag [#allocation7], 1
    %14 = vsyncpa %s13, 0
    loop: start=0, step=1, limit=6
    $region2: #{res_classifier_forward.3} parent=1 // loop_pre_header
      _
    $region3: #{res_classifier_forward.3} parent=1 // loop_header
      %s16 = sphi 0, %s20
      %p17 = scmp.ge.s32.totalorder %s16, 6
      %s23 = sphi 0, %s42
      %s24 = sphi 0, %s38
      %s25 = sphi 0, %s34
      %s26 = sphi 0, %s23
      %s27 = sphi 0, %s24
      %s28 = sphi 0, %s25
      %s29 = sphi 0, %s26
      %s30 = sphi 0, %s27
      %s31 = sphi 0, %s28
      %s47 = sphi 0, %s49
      %s50 = sphi 0, %s47
      %s51 = sphi 0, %s50
      %s67 = sphi 0, %s51
      %s75 = sphi 0, %s77
      %s78 = sphi 0, %s75
      %s79 = sphi 0, %s78
      %s95 = sphi 0, %s79
      %s101 = sphi 0, %s103
      %s104 = sphi 0, %s101
      %s105 = sphi 0, %s104
      %s121 = sphi 0, %s105
      %s127 = sphi 0, %s129
      %s130 = sphi 0, %s127
      %s131 = sphi 0, %s130
      %s147 = sphi 0, %s131
      %s155 = sphi 0, %s157
      %s158 = sphi 0, %s155
      %s159 = sphi 0, %s158
      %s175 = sphi 0, %s159
    $region4: #{res_classifier_forward.3} parent=1 // loop_header_branch
      %19 = sbr.rel (%p17) target = $region8
    $region5: #{res_classifier_forward.3} parent=1 // loop_body
      %s21 = ssub.s32 %s16, 1
      %s22 = ssub.s32 %s16, 2
      %s32 = sadd.s32 1, %s25
      %p33 = scmp.ge.s32.totalorder %s32, 2
      %s34 = scalar_select %p33, 0, %s32
      %s35 = sadd.s32 1, %s24
      %s36 = scalar_select %p33, %s35, %s24
      %p37 = scmp.ge.s32.totalorder %s36, 2
      %s38 = scalar_select %p37, 0, %s36
      %s39 = sadd.s32 1, %s23
      %s40 = scalar_select %p37, %s39, %s23
      %p41 = scmp.ge.s32.totalorder %s40, 1
      %s42 = scalar_select %p41, 0, %s40
      %s43 = ssub.s32 %s23, %s42
      %s44 = ssub.s32 %s25, %s34
      %s45 = sor.u32 %s43, %s44
      %p46 = scmp.eq.s32.totalorder %s45, 0
      %s48 = sadd.s32 %s47, 1
      %s49 = scalar_select %p46, %s47, %s48
      %p52 = pneg %p46
      %p53 = scmp.eq.s32.totalorder %s16, 3
      %p54 = por %p52, %p53
      %p55 = scmp.ne.s32.totalorder %s47, %s50
      %p56 = scmp.eq.s32.totalorder %s16, 0
      %p57 = por %p55, %p56
      %p58 = scmp.ne.s32.totalorder %s47, %s50
      %p59 = scmp.eq.s32.totalorder %s21, 3
      %p60 = por %p58, %p59
      %p61 = scmp.ne.s32.totalorder %s50, %s51
      %p62 = scmp.eq.s32.totalorder %s21, 0
      %p63 = por %p61, %p62
      %p64 = scmp.ne.s32.totalorder %s50, %s51
      %p65 = scmp.eq.s32.totalorder %s22, 3
      %p66 = por %p64, %p65
      %p68 = scmp.ne.s32.totalorder %s51, %s67
      %p69 = scmp.eq.s32.totalorder %s22, 0
      %p70 = por %p68, %p69
      %s71 = ssub.s32 %s25, %s34
      %s72 = ssub.s32 %s24, %s38
      %s73 = sor.u32 %s71, %s72
      %p74 = scmp.eq.s32.totalorder %s73, 0
      %s76 = sadd.s32 %s75, 1
      %s77 = scalar_select %p74, %s75, %s76
      %p80 = pneg %p74
      %p81 = scmp.eq.s32.totalorder %s16, 3
      %p82 = por %p80, %p81
      %p83 = scmp.ne.s32.totalorder %s75, %s78
      %p84 = scmp.eq.s32.totalorder %s16, 0
      %p85 = por %p83, %p84
      %p86 = scmp.ne.s32.totalorder %s75, %s78
      %p87 = scmp.eq.s32.totalorder %s21, 3
      %p88 = por %p86, %p87
      %p89 = scmp.ne.s32.totalorder %s78, %s79
      %p90 = scmp.eq.s32.totalorder %s21, 0
      %p91 = por %p89, %p90
      %p92 = scmp.ne.s32.totalorder %s78, %s79
      %p93 = scmp.eq.s32.totalorder %s22, 3
      %p94 = por %p92, %p93
      %p96 = scmp.ne.s32.totalorder %s79, %s95
      %p97 = scmp.eq.s32.totalorder %s22, 0
      %p98 = por %p96, %p97
      %s99 = ssub.s32 %s24, %s38
      %p100 = scmp.eq.s32.totalorder %s99, 0
      %s102 = sadd.s32 %s101, 1
      %s103 = scalar_select %p100, %s101, %s102
      %p106 = pneg %p100
      %p107 = scmp.eq.s32.totalorder %s16, 3
      %p108 = por %p106, %p107
      %p109 = scmp.ne.s32.totalorder %s101, %s104
      %p110 = scmp.eq.s32.totalorder %s16, 0
      %p111 = por %p109, %p110
      %p112 = scmp.ne.s32.totalorder %s101, %s104
      %p113 = scmp.eq.s32.totalorder %s21, 3
      %p114 = por %p112, %p113
      %p115 = scmp.ne.s32.totalorder %s104, %s105
      %p116 = scmp.eq.s32.totalorder %s21, 0
      %p117 = por %p115, %p116
      %p118 = scmp.ne.s32.totalorder %s104, %s105
      %p119 = scmp.eq.s32.totalorder %s22, 3
      %p120 = por %p118, %p119
      %p122 = scmp.ne.s32.totalorder %s105, %s121
      %p123 = scmp.eq.s32.totalorder %s22, 0
      %p124 = por %p122, %p123
      %s125 = ssub.s32 %s24, %s38
      %p126 = scmp.eq.s32.totalorder %s125, 0
      %s128 = sadd.s32 %s127, 1
      %s129 = scalar_select %p126, %s127, %s128
      %p132 = pneg %p126
      %p133 = scmp.eq.s32.totalorder %s16, 3
      %p134 = por %p132, %p133
      %p135 = scmp.ne.s32.totalorder %s127, %s130
      %p136 = scmp.eq.s32.totalorder %s16, 0
      %p137 = por %p135, %p136
      %p138 = scmp.ne.s32.totalorder %s127, %s130
      %p139 = scmp.eq.s32.totalorder %s21, 3
      %p140 = por %p138, %p139
      %p141 = scmp.ne.s32.totalorder %s130, %s131
      %p142 = scmp.eq.s32.totalorder %s21, 0
      %p143 = por %p141, %p142
      %p144 = scmp.ne.s32.totalorder %s130, %s131
      %p145 = scmp.eq.s32.totalorder %s22, 3
      %p146 = por %p144, %p145
      %p148 = scmp.ne.s32.totalorder %s131, %s147
      %p149 = scmp.eq.s32.totalorder %s22, 0
      %p150 = por %p148, %p149
      %s151 = ssub.s32 %s23, %s42
      %s152 = ssub.s32 %s24, %s38
      %s153 = sor.u32 %s151, %s152
      %p154 = scmp.eq.s32.totalorder %s153, 0
      %s156 = sadd.s32 %s155, 1
      %s157 = scalar_select %p154, %s155, %s156
      %p160 = pneg %p154
      %p161 = scmp.eq.s32.totalorder %s16, 3
      %p162 = por %p160, %p161
      %p163 = scmp.ne.s32.totalorder %s155, %s158
      %p164 = scmp.eq.s32.totalorder %s16, 0
      %p165 = por %p163, %p164
      %p166 = scmp.ne.s32.totalorder %s155, %s158
      %p167 = scmp.eq.s32.totalorder %s21, 3
      %p168 = por %p166, %p167
      %p169 = scmp.ne.s32.totalorder %s158, %s159
      %p170 = scmp.eq.s32.totalorder %s21, 0
      %p171 = por %p169, %p170
      %p172 = scmp.ne.s32.totalorder %s158, %s159
      %p173 = scmp.eq.s32.totalorder %s22, 3
      %p174 = por %p172, %p173
      %p176 = scmp.ne.s32.totalorder %s159, %s175
      %p177 = scmp.eq.s32.totalorder %s22, 0
      %p178 = por %p176, %p177
      %p179 = scmp.le.s32.totalorder 1, %s16
      %p180 = scmp.lt.s32.totalorder %s16, 5
      %p181 = pnand %p179, %p180
      %p182 = pneg %p181
      // Predicated region
      $region9: #{res_classifier_forward.3} parent=5 // pred_check
        _
      $region10: #{res_classifier_forward.3} parent=5 // pred_check_branch
        %184 = sbr.rel (%p181) target = $region12
      $region11: #{res_classifier_forward.3} parent=5 // pred_region
        %s185 = ssub.s32 %s16, 1
      $region12: #{res_classifier_forward.3} parent=5 // pred_fallthru
        _
      %p186 = scmp.lt.s32.totalorder %s16, 4
      // Predicated region
      $region13: #{res_classifier_forward.3} parent=5 // pred_check
        %p187 = pneg %p186
      $region14: #{res_classifier_forward.3} parent=5 // pred_check_branch
        %189 = sbr.rel (%p187) target = $region16
      $region15: #{res_classifier_forward.3} parent=5 // pred_region
        // Predicated region
        $region17: #{res_classifier_forward.3} parent=15 // pred_check
          %p190 = pneg %p57
        $region18: #{res_classifier_forward.3} parent=15 // pred_check_branch
          %192 = sbr.rel (%p190) target = $region20
        $region19: #{res_classifier_forward.3} parent=15 // pred_region
          %s193 = sand.u32 %s47, 1
          %s194 = sand.u32 %s47, 1
          %s195 = smul.addr %s194, 128
          %s196 = scalar_lea.vmem [#allocation3], %s195
          %s197 = smul.u32 8, %s23
          %s198 = smul.u32 4, %s25
          %s199 = smul.addr %s197, 8
          %s200 = sadd.s32 %s198, %s199
          %s201 = smul.addr %s200, 4
          %s202 = scalar_lea.vmem %s0, %s201
          // Predicated region
          $region21: #{res_classifier_forward.3} parent=19 // pred_check
            _
          $region22: #{res_classifier_forward.3} parent=19 // pred_check_branch
            %204 = sbr.rel (0) target = $region24
          $region23: #{res_classifier_forward.3} parent=19 // pred_region
            // Predicated region
            $region25: #{res_classifier_forward.3} parent=23 // pred_check
              _
            $region26: #{res_classifier_forward.3} parent=23 // pred_check_branch
              %206 = sbr.rel (0) target = $region28
            $region27: #{res_classifier_forward.3} parent=23 // pred_region
              loop: start=0, step=1, limit=1
              $region29: #{res_classifier_forward.3} parent=27 // loop_pre_header
                _
              $region30: #{res_classifier_forward.3} parent=27 // loop_header
                %s208 = sphi 0, %s212
                %p209 = scmp.ge.s32.totalorder %s208, 1
                %s213 = sphi %s202, %s202
                %s214 = sphi %s196, %s196
              $region31: #{res_classifier_forward.3} parent=27 // loop_header_branch
                %211 = sbr.rel (%p209) target = $region35
              $region32: #{res_classifier_forward.3} parent=27 // loop_body
                %v215 = vld [vmem:[%s213] sm:$0xff]
                %216 = vst [vmem:[%s214] sm:$0xff] %v215
                %v217 = vld [vmem:[%s213 + $0x8] sm:$0xff]
                %218 = vst [vmem:[%s214 + $0x8] sm:$0xff] %v217
                %v219 = vld [vmem:[%s213 + $0x20] sm:$0xff]
                %220 = vst [vmem:[%s214 + $0x10] sm:$0xff] %v219
                %v221 = vld [vmem:[%s213 + $0x28] sm:$0xff]
                %222 = vst [vmem:[%s214 + $0x18] sm:$0xff] %v221
                %v223 = vld [vmem:[%s213 + $0x40] sm:$0xff]
                %224 = vst [vmem:[%s214 + $0x20] sm:$0xff] %v223
                %v225 = vld [vmem:[%s213 + $0x48] sm:$0xff]
                %226 = vst [vmem:[%s214 + $0x28] sm:$0xff] %v225
                %v227 = vld [vmem:[%s213 + $0x60] sm:$0xff]
                %228 = vst [vmem:[%s214 + $0x30] sm:$0xff] %v227
                %v229 = vld [vmem:[%s213 + $0x68] sm:$0xff]
                %230 = vst [vmem:[%s214 + $0x38] sm:$0xff] %v229
                %v231 = vld [vmem:[%s213 + $0x80] sm:$0xff]
                %232 = vst [vmem:[%s214 + $0x40] sm:$0xff] %v231
                %v233 = vld [vmem:[%s213 + $0x88] sm:$0xff]
                %234 = vst [vmem:[%s214 + $0x48] sm:$0xff] %v233
                %v235 = vld [vmem:[%s213 + $0xa0] sm:$0xff]
                %236 = vst [vmem:[%s214 + $0x50] sm:$0xff] %v235
                %v237 = vld [vmem:[%s213 + $0xa8] sm:$0xff]
                %238 = vst [vmem:[%s214 + $0x58] sm:$0xff] %v237
                %v239 = vld [vmem:[%s213 + $0xc0] sm:$0xff]
                %240 = vst [vmem:[%s214 + $0x60] sm:$0xff] %v239
                %v241 = vld [vmem:[%s213 + $0xc8] sm:$0xff]
                %242 = vst [vmem:[%s214 + $0x68] sm:$0xff] %v241
                %v243 = vld [vmem:[%s213 + $0xe0] sm:$0xff]
                %244 = vst [vmem:[%s214 + $0x70] sm:$0xff] %v243
                %v245 = vld [vmem:[%s213 + $0xe8] sm:$0xff]
                %246 = vst [vmem:[%s214 + $0x78] sm:$0xff] %v245
              $region33: #{res_classifier_forward.3} parent=27 // loop_footer
                %s212 = sadd.s32 1, %s208
              $region34: #{res_classifier_forward.3} parent=27 // loop_footer_branch
                %207 = sbr.rel target = $region30
              $region35: #{res_classifier_forward.3} parent=27 // loop_exit
                _
            $region28: #{res_classifier_forward.3} parent=23 // pred_fallthru
              _
            // Predicated region
            $region36: #{res_classifier_forward.3} parent=23 // pred_check
              _
            $region37: #{res_classifier_forward.3} parent=23 // pred_check_branch
              %248 = sbr.rel target = $region39
            $region38: #{res_classifier_forward.3} parent=23 // pred_region
              _
            $region39: #{res_classifier_forward.3} parent=23 // pred_fallthru
              _
          $region24: #{res_classifier_forward.3} parent=19 // pred_fallthru
            _
          %249 = vnop
        $region20: #{res_classifier_forward.3} parent=15 // pred_fallthru
          _
        // Predicated region
        $region40: #{res_classifier_forward.3} parent=15 // pred_check
          %p250 = pneg %p85
        $region41: #{res_classifier_forward.3} parent=15 // pred_check_branch
          %252 = sbr.rel (%p250) target = $region43
        $region42: #{res_classifier_forward.3} parent=15 // pred_region
          %s253 = sand.u32 %s75, 1
          %s254 = scalar_lea.sflag [#allocation5], %s253
          %s255 = sand.u32 %s75, 1
          %s256 = smul.addr %s255, 512
          %s257 = scalar_lea.vmem [#allocation4], %s256
          %s258 = smul.u32 64, %s25
          %s259 = smul.u32 2, %s24
          %261 = vsyncadd %s254, 0
          %s262 = smul.addr %s258, 4
          %s263 = sadd.s32 %s259, %s262
          %s264 = smul.addr %s263, 4
          %s265 = scalar_lea.hbm %s1, %s264
          %s266 = sshll.u32 %s265, 4
          %s267 = int_to_ptr.hbm [resolvable:$true] %s266
          %s268 = sshll.u32 %s257, 4
          %s269 = int_to_ptr.vmem [resolvable:$true] %s268
          %274 = dma.hbm_to_vmem [thread:$0]  %s267, 8192, %s269, %s254, 256, 128, 8
        $region43: #{res_classifier_forward.3} parent=15 // pred_fallthru
          _
        // Predicated region
        $region44: #{res_classifier_forward.3} parent=15 // pred_check
          %p275 = pneg %p111
        $region45: #{res_classifier_forward.3} parent=15 // pred_check_branch
          %277 = sbr.rel (%p275) target = $region47
        $region46: #{res_classifier_forward.3} parent=15 // pred_region
          %s278 = smul.u32 2, %s24
          %p279 = scmp.lt.s32.totalorder %s278, 3
          %s280 = scalar_select %p279, %s278, 3
          %s281 = scalar_lea.vmem %s2, %s280
          %s282 = smul.u32 2, %s24
        $region47: #{res_classifier_forward.3} parent=15 // pred_fallthru
          _
        // Predicated region
        $region48: #{res_classifier_forward.3} parent=15 // pred_check
          %p283 = pneg %p137
        $region49: #{res_classifier_forward.3} parent=15 // pred_check_branch
          %285 = sbr.rel (%p283) target = $region51
        $region50: #{res_classifier_forward.3} parent=15 // pred_region
          %s286 = sand.u32 %s127, 1
          %s287 = scalar_lea.sflag [#allocation7], %s286
          %s288 = sand.u32 %s127, 1
          %s289 = smul.addr %s288, 2
          %s290 = scalar_lea.vmem [#allocation6], %s289
          %s291 = smul.u32 2, %s24
          %293 = vsyncadd %s287, 0
          %s294 = scalar_lea.hbm %s3, %s291
          %s296 = sshll.u32 %s294, 4
          %s297 = int_to_ptr.hbm [resolvable:$true] %s296
          %s298 = sshll.u32 %s290, 4
          %s299 = int_to_ptr.vmem [resolvable:$true] %s298
          %301 = dma.hbm_to_vmem [thread:$0]  %s297, 32, %s299, %s287
        $region51: #{res_classifier_forward.3} parent=15 // pred_fallthru
          _
      $region16: #{res_classifier_forward.3} parent=5 // pred_fallthru
        _
      %p302 = scmp.le.s32.totalorder 1, %s16
      %p303 = scmp.lt.s32.totalorder %s16, 5
      %p304 = pnand %p302, %p303
      %p305 = pneg %p304
      // Predicated region
      $region52: #{res_classifier_forward.3} parent=5 // pred_check
        _
      $region53: #{res_classifier_forward.3} parent=5 // pred_check_branch
        %307 = sbr.rel (%p304) target = $region55
      $region54: #{res_classifier_forward.3} parent=5 // pred_region
        %s308 = ssub.s32 %s16, 1
        %s309 = sand.u32 %s50, 1
        %s310 = sand.u32 %s50, 1
        %s311 = smul.addr %s310, 128
        %s312 = scalar_lea.vmem [#allocation3], %s311
        // Predicated region
        $region56: #{res_classifier_forward.3} parent=54 // pred_check
          %p313 = pneg %p63
        $region57: #{res_classifier_forward.3} parent=54 // pred_check_branch
          %315 = sbr.rel (%p313) target = $region59
        $region58: #{res_classifier_forward.3} parent=54 // pred_region
          _
        $region59: #{res_classifier_forward.3} parent=54 // pred_fallthru
          _
        %s316 = sand.u32 %s78, 1
        %s317 = scalar_lea.sflag [#allocation5], %s316
        %s318 = sand.u32 %s78, 1
        %s319 = smul.addr %s318, 512
        %s320 = scalar_lea.vmem [#allocation4], %s319
        // Predicated region
        $region60: #{res_classifier_forward.3} parent=54 // pred_check
          %p321 = pneg %p91
        $region61: #{res_classifier_forward.3} parent=54 // pred_check_branch
          %323 = sbr.rel (%p321) target = $region63
        $region62: #{res_classifier_forward.3} parent=54 // pred_region
          %325 = dma.done %s317, 8192
        $region63: #{res_classifier_forward.3} parent=54 // pred_fallthru
          _
        %s326 = sand.u32 %s130, 1
        %s327 = scalar_lea.sflag [#allocation7], %s326
        %s328 = sand.u32 %s130, 1
        %s329 = smul.addr %s328, 2
        %s330 = scalar_lea.vmem [#allocation6], %s329
        // Predicated region
        $region64: #{res_classifier_forward.3} parent=54 // pred_check
          %p331 = pneg %p143
        $region65: #{res_classifier_forward.3} parent=54 // pred_check_branch
          %333 = sbr.rel (%p331) target = $region67
        $region66: #{res_classifier_forward.3} parent=54 // pred_region
          %335 = dma.done %s327, 32
        $region67: #{res_classifier_forward.3} parent=54 // pred_fallthru
          _
        %s336 = sand.u32 %s50, 1
        %s337 = sand.u32 %s50, 1
        %s338 = smul.addr %s337, 128
        %s339 = scalar_lea.vmem [#allocation3], %s338
        %p340 = pneg %p63
        %p341 = pneg %p60
        %s342 = sand.u32 %s78, 1
        %s343 = scalar_lea.sflag [#allocation5], %s342
        %s344 = sand.u32 %s78, 1
        %s345 = smul.addr %s344, 512
        %s346 = scalar_lea.vmem [#allocation4], %s345
        %p347 = pneg %p91
        %p348 = pneg %p88
        %s349 = smul.u32 2, %s27
        %p350 = scmp.lt.s32.totalorder %s349, 3
        %s351 = scalar_select %p350, %s349, 3
        %s352 = scalar_lea.vmem %s2, %s351
        %p353 = pneg %p117
        %p354 = pneg %p114
        %s355 = sand.u32 %s130, 1
        %s356 = scalar_lea.sflag [#allocation7], %s355
        %s357 = sand.u32 %s130, 1
        %s358 = smul.addr %s357, 2
        %s359 = scalar_lea.vmem [#allocation6], %s358
        %p360 = pneg %p143
        %p361 = pneg %p140
        %p362 = pneg %p171
        %p363 = pneg %p168
        %s364 = sand.u32 %s158, 1
        %s365 = sand.u32 %s158, 1
        %s366 = smul.addr %s365, 128
        %s367 = scalar_lea.vmem [#allocation8], %s366
        %s368 = smul.u32 8, %s26
        %s369 = smul.u32 4, %s28
        %s370 = smul.u32 64, %s28
        %s371 = smul.u32 2, %s27
        %s372 = smul.u32 2, %s27
        %p373 = scmp.lt.s32.totalorder %s372, 3
        %s374 = scalar_select %p373, %s372, 3
        %s375 = scalar_lea.vmem %s2, %s374
        %s376 = smul.u32 2, %s27
        %s377 = smul.u32 2, %s27
        %s378 = smul.u32 8, %s26
        %s379 = smul.u32 2, %s27
        %p380 = scmp.eq.s32.totalorder %s28, 0
        // Predicated region
        $region68: #{res_classifier_forward.3} parent=54 // pred_check
          %p381 = pneg %p380
        $region69: #{res_classifier_forward.3} parent=54 // pred_check_branch
          %383 = sbr.rel (%p381) target = $region71
        $region70: #{res_classifier_forward.3} parent=54 // pred_region
          %384 = vst [vmem:[#allocation2] sm:$0xff] 0.0
          %385 = vst [vmem:[#allocation2 + $0x8] sm:$0xff] 0.0
          %386 = vst [vmem:[#allocation2 + $0x10] sm:$0xff] 0.0
          %387 = vst [vmem:[#allocation2 + $0x18] sm:$0xff] 0.0
          %388 = vst [vmem:[#allocation2 + $0x20] sm:$0xff] 0.0
          %389 = vst [vmem:[#allocation2 + $0x28] sm:$0xff] 0.0
          %390 = vst [vmem:[#allocation2 + $0x30] sm:$0xff] 0.0
          %391 = vst [vmem:[#allocation2 + $0x38] sm:$0xff] 0.0
          %392 = vst [vmem:[#allocation2 + $0x40] sm:$0xff] 0.0
          %393 = vst [vmem:[#allocation2 + $0x48] sm:$0xff] 0.0
          %394 = vst [vmem:[#allocation2 + $0x50] sm:$0xff] 0.0
          %395 = vst [vmem:[#allocation2 + $0x58] sm:$0xff] 0.0
          %396 = vst [vmem:[#allocation2 + $0x60] sm:$0xff] 0.0
          %397 = vst [vmem:[#allocation2 + $0x68] sm:$0xff] 0.0
          %398 = vst [vmem:[#allocation2 + $0x70] sm:$0xff] 0.0
          %399 = vst [vmem:[#allocation2 + $0x78] sm:$0xff] 0.0
        $region71: #{res_classifier_forward.3} parent=54 // pred_fallthru
          _
        %v400 = vld [vmem:[#allocation2] sm:$0xff]
        %v401 = vld [vmem:[#allocation2 + $0x8] sm:$0xff]
        %v402 = vld [vmem:[#allocation2 + $0x10] sm:$0xff]
        %v403 = vld [vmem:[#allocation2 + $0x18] sm:$0xff]
        %v404 = vld [vmem:[#allocation2 + $0x20] sm:$0xff]
        %v405 = vld [vmem:[#allocation2 + $0x28] sm:$0xff]
        %v406 = vld [vmem:[#allocation2 + $0x30] sm:$0xff]
        %v407 = vld [vmem:[#allocation2 + $0x38] sm:$0xff]
        %v408 = vld [vmem:[#allocation2 + $0x40] sm:$0xff]
        %v409 = vld [vmem:[#allocation2 + $0x48] sm:$0xff]
        %v410 = vld [vmem:[#allocation2 + $0x50] sm:$0xff]
        %v411 = vld [vmem:[#allocation2 + $0x58] sm:$0xff]
        %v412 = vld [vmem:[#allocation2 + $0x60] sm:$0xff]
        %v413 = vld [vmem:[#allocation2 + $0x68] sm:$0xff]
        %v414 = vld [vmem:[#allocation2 + $0x70] sm:$0xff]
        %v415 = vld [vmem:[#allocation2 + $0x78] sm:$0xff]
        %v416 = vld [vmem:[%s312] sm:$0xff]
        %v417 = vld [vmem:[%s312 + $0x8] sm:$0xff]
        %v418 = vld [vmem:[%s312 + $0x10] sm:$0xff]
        %v419 = vld [vmem:[%s312 + $0x18] sm:$0xff]
        %v420 = vld [vmem:[%s312 + $0x20] sm:$0xff]
        %v421 = vld [vmem:[%s312 + $0x28] sm:$0xff]
        %v422 = vld [vmem:[%s312 + $0x30] sm:$0xff]
        %v423 = vld [vmem:[%s312 + $0x38] sm:$0xff]
        %v424 = vld [vmem:[%s312 + $0x40] sm:$0xff]
        %v425 = vld [vmem:[%s312 + $0x48] sm:$0xff]
        %v426 = vld [vmem:[%s312 + $0x50] sm:$0xff]
        %v427 = vld [vmem:[%s312 + $0x58] sm:$0xff]
        %v428 = vld [vmem:[%s312 + $0x60] sm:$0xff]
        %v429 = vld [vmem:[%s312 + $0x68] sm:$0xff]
        %v430 = vld [vmem:[%s312 + $0x70] sm:$0xff]
        %v431 = vld [vmem:[%s312 + $0x78] sm:$0xff]
        %v432 = vld [vmem:[%s320] sm:$0xff]
        %v433 = vld [vmem:[%s320 + $0x8] sm:$0xff]
        %v434 = vld [vmem:[%s320 + $0x10] sm:$0xff]
        %v435 = vld [vmem:[%s320 + $0x18] sm:$0xff]
        %v436 = vld [vmem:[%s320 + $0x20] sm:$0xff]
        %v437 = vld [vmem:[%s320 + $0x28] sm:$0xff]
        %v438 = vld [vmem:[%s320 + $0x30] sm:$0xff]
        %v439 = vld [vmem:[%s320 + $0x38] sm:$0xff]
        %v440 = vld [vmem:[%s320 + $0x40] sm:$0xff]
        %v441 = vld [vmem:[%s320 + $0x48] sm:$0xff]
        %v442 = vld [vmem:[%s320 + $0x50] sm:$0xff]
        %v443 = vld [vmem:[%s320 + $0x58] sm:$0xff]
        %v444 = vld [vmem:[%s320 + $0x60] sm:$0xff]
        %v445 = vld [vmem:[%s320 + $0x68] sm:$0xff]
        %v446 = vld [vmem:[%s320 + $0x70] sm:$0xff]
        %v447 = vld [vmem:[%s320 + $0x78] sm:$0xff]
        %v448 = vld [vmem:[%s320 + $0x80] sm:$0xff]
        %v449 = vld [vmem:[%s320 + $0x88] sm:$0xff]
        %v450 = vld [vmem:[%s320 + $0x90] sm:$0xff]
        %v451 = vld [vmem:[%s320 + $0x98] sm:$0xff]
        %v452 = vld [vmem:[%s320 + $0xa0] sm:$0xff]
        %v453 = vld [vmem:[%s320 + $0xa8] sm:$0xff]
        %v454 = vld [vmem:[%s320 + $0xb0] sm:$0xff]
        %v455 = vld [vmem:[%s320 + $0xb8] sm:$0xff]
        %v456 = vld [vmem:[%s320 + $0xc0] sm:$0xff]
        %v457 = vld [vmem:[%s320 + $0xc8] sm:$0xff]
        %v458 = vld [vmem:[%s320 + $0xd0] sm:$0xff]
        %v459 = vld [vmem:[%s320 + $0xd8] sm:$0xff]
        %v460 = vld [vmem:[%s320 + $0xe0] sm:$0xff]
        %v461 = vld [vmem:[%s320 + $0xe8] sm:$0xff]
        %v462 = vld [vmem:[%s320 + $0xf0] sm:$0xff]
        %v463 = vld [vmem:[%s320 + $0xf8] sm:$0xff]
        %v464 = vld [vmem:[%s320 + $0x100] sm:$0xff]
        %v465 = vld [vmem:[%s320 + $0x108] sm:$0xff]
        %v466 = vld [vmem:[%s320 + $0x110] sm:$0xff]
        %v467 = vld [vmem:[%s320 + $0x118] sm:$0xff]
        %v468 = vld [vmem:[%s320 + $0x120] sm:$0xff]
        %v469 = vld [vmem:[%s320 + $0x128] sm:$0xff]
        %v470 = vld [vmem:[%s320 + $0x130] sm:$0xff]
        %v471 = vld [vmem:[%s320 + $0x138] sm:$0xff]
        %v472 = vld [vmem:[%s320 + $0x140] sm:$0xff]
        %v473 = vld [vmem:[%s320 + $0x148] sm:$0xff]
        %v474 = vld [vmem:[%s320 + $0x150] sm:$0xff]
        %v475 = vld [vmem:[%s320 + $0x158] sm:$0xff]
        %v476 = vld [vmem:[%s320 + $0x160] sm:$0xff]
        %v477 = vld [vmem:[%s320 + $0x168] sm:$0xff]
        %v478 = vld [vmem:[%s320 + $0x170] sm:$0xff]
        %v479 = vld [vmem:[%s320 + $0x178] sm:$0xff]
        %v480 = vld [vmem:[%s320 + $0x180] sm:$0xff]
        %v481 = vld [vmem:[%s320 + $0x188] sm:$0xff]
        %v482 = vld [vmem:[%s320 + $0x190] sm:$0xff]
        %v483 = vld [vmem:[%s320 + $0x198] sm:$0xff]
        %v484 = vld [vmem:[%s320 + $0x1a0] sm:$0xff]
        %v485 = vld [vmem:[%s320 + $0x1a8] sm:$0xff]
        %v486 = vld [vmem:[%s320 + $0x1b0] sm:$0xff]
        %v487 = vld [vmem:[%s320 + $0x1b8] sm:$0xff]
        %v488 = vld [vmem:[%s320 + $0x1c0] sm:$0xff]
        %v489 = vld [vmem:[%s320 + $0x1c8] sm:$0xff]
        %v490 = vld [vmem:[%s320 + $0x1d0] sm:$0xff]
        %v491 = vld [vmem:[%s320 + $0x1d8] sm:$0xff]
        %v492 = vld [vmem:[%s320 + $0x1e0] sm:$0xff]
        %v493 = vld [vmem:[%s320 + $0x1e8] sm:$0xff]
        %v494 = vld [vmem:[%s320 + $0x1f0] sm:$0xff]
        %v495 = vld [vmem:[%s320 + $0x1f8] sm:$0xff]
        %v512 = vunpack.c.l.b16 %v416
        %v513 = vunpack.c.h.b16 %v416
        %v514 = vunpack.c.l.b16 %v417
        %v515 = vunpack.c.h.b16 %v417
        %v516 = vunpack.c.l.b16 %v418
        %v517 = vunpack.c.h.b16 %v418
        %v518 = vunpack.c.l.b16 %v419
        %v519 = vunpack.c.h.b16 %v419
        %v520 = vunpack.c.l.b16 %v420
        %v521 = vunpack.c.h.b16 %v420
        %v522 = vunpack.c.l.b16 %v421
        %v523 = vunpack.c.h.b16 %v421
        %v524 = vunpack.c.l.b16 %v422
        %v525 = vunpack.c.h.b16 %v422
        %v526 = vunpack.c.l.b16 %v423
        %v527 = vunpack.c.h.b16 %v423
        %v528 = vunpack.c.l.b16 %v424
        %v529 = vunpack.c.h.b16 %v424
        %v530 = vunpack.c.l.b16 %v425
        %v531 = vunpack.c.h.b16 %v425
        %v532 = vunpack.c.l.b16 %v426
        %v533 = vunpack.c.h.b16 %v426
        %v534 = vunpack.c.l.b16 %v427
        %v535 = vunpack.c.h.b16 %v427
        %v536 = vunpack.c.l.b16 %v428
        %v537 = vunpack.c.h.b16 %v428
        %v538 = vunpack.c.l.b16 %v429
        %v539 = vunpack.c.h.b16 %v429
        %v540 = vunpack.c.l.b16 %v430
        %v541 = vunpack.c.h.b16 %v430
        %v542 = vunpack.c.l.b16 %v431
        %v543 = vunpack.c.h.b16 %v431
        %v544 = vpack.c.b16 %v516, %v512
        %v545 = vpack.c.b16 %v517, %v513
        %v546 = vpack.c.b16 %v518, %v514
        %v547 = vpack.c.b16 %v519, %v515
        %v548 = vpack.c.b16 %v524, %v520
        %v549 = vpack.c.b16 %v525, %v521
        %v550 = vpack.c.b16 %v526, %v522
        %v551 = vpack.c.b16 %v527, %v523
        %v552 = vpack.c.b16 %v532, %v528
        %v553 = vpack.c.b16 %v533, %v529
        %v554 = vpack.c.b16 %v534, %v530
        %v555 = vpack.c.b16 %v535, %v531
        %v556 = vpack.c.b16 %v540, %v536
        %v557 = vpack.c.b16 %v541, %v537
        %v558 = vpack.c.b16 %v542, %v538
        %v559 = vpack.c.b16 %v543, %v539
        %v640 = vunpack.c.l.b16 %v432
        %v641 = vunpack.c.h.b16 %v432
        %v642 = vunpack.c.l.b16 %v433
        %v643 = vunpack.c.h.b16 %v433
        %v644 = vunpack.c.l.b16 %v434
        %v645 = vunpack.c.h.b16 %v434
        %v646 = vunpack.c.l.b16 %v435
        %v647 = vunpack.c.h.b16 %v435
        %v648 = vunpack.c.l.b16 %v436
        %v649 = vunpack.c.h.b16 %v436
        %v650 = vunpack.c.l.b16 %v437
        %v651 = vunpack.c.h.b16 %v437
        %v652 = vunpack.c.l.b16 %v438
        %v653 = vunpack.c.h.b16 %v438
        %v654 = vunpack.c.l.b16 %v439
        %v655 = vunpack.c.h.b16 %v439
        %v656 = vunpack.c.l.b16 %v440
        %v657 = vunpack.c.h.b16 %v440
        %v658 = vunpack.c.l.b16 %v441
        %v659 = vunpack.c.h.b16 %v441
        %v660 = vunpack.c.l.b16 %v442
        %v661 = vunpack.c.h.b16 %v442
        %v662 = vunpack.c.l.b16 %v443
        %v663 = vunpack.c.h.b16 %v443
        %v664 = vunpack.c.l.b16 %v444
        %v665 = vunpack.c.h.b16 %v444
        %v666 = vunpack.c.l.b16 %v445
        %v667 = vunpack.c.h.b16 %v445
        %v668 = vunpack.c.l.b16 %v446
        %v669 = vunpack.c.h.b16 %v446
        %v670 = vunpack.c.l.b16 %v447
        %v671 = vunpack.c.h.b16 %v447
        %v672 = vunpack.c.l.b16 %v448
        %v673 = vunpack.c.h.b16 %v448
        %v674 = vunpack.c.l.b16 %v449
        %v675 = vunpack.c.h.b16 %v449
        %v676 = vunpack.c.l.b16 %v450
        %v677 = vunpack.c.h.b16 %v450
        %v678 = vunpack.c.l.b16 %v451
        %v679 = vunpack.c.h.b16 %v451
        %v680 = vunpack.c.l.b16 %v452
        %v681 = vunpack.c.h.b16 %v452
        %v682 = vunpack.c.l.b16 %v453
        %v683 = vunpack.c.h.b16 %v453
        %v684 = vunpack.c.l.b16 %v454
        %v685 = vunpack.c.h.b16 %v454
        %v686 = vunpack.c.l.b16 %v455
        %v687 = vunpack.c.h.b16 %v455
        %v688 = vunpack.c.l.b16 %v456
        %v689 = vunpack.c.h.b16 %v456
        %v690 = vunpack.c.l.b16 %v457
        %v691 = vunpack.c.h.b16 %v457
        %v692 = vunpack.c.l.b16 %v458
        %v693 = vunpack.c.h.b16 %v458
        %v694 = vunpack.c.l.b16 %v459
        %v695 = vunpack.c.h.b16 %v459
        %v696 = vunpack.c.l.b16 %v460
        %v697 = vunpack.c.h.b16 %v460
        %v698 = vunpack.c.l.b16 %v461
        %v699 = vunpack.c.h.b16 %v461
        %v700 = vunpack.c.l.b16 %v462
        %v701 = vunpack.c.h.b16 %v462
        %v702 = vunpack.c.l.b16 %v463
        %v703 = vunpack.c.h.b16 %v463
        %v704 = vunpack.c.l.b16 %v464
        %v705 = vunpack.c.h.b16 %v464
        %v706 = vunpack.c.l.b16 %v465
        %v707 = vunpack.c.h.b16 %v465
        %v708 = vunpack.c.l.b16 %v466
        %v709 = vunpack.c.h.b16 %v466
        %v710 = vunpack.c.l.b16 %v467
        %v711 = vunpack.c.h.b16 %v467
        %v712 = vunpack.c.l.b16 %v468
        %v713 = vunpack.c.h.b16 %v468
        %v714 = vunpack.c.l.b16 %v469
        %v715 = vunpack.c.h.b16 %v469
        %v716 = vunpack.c.l.b16 %v470
        %v717 = vunpack.c.h.b16 %v470
        %v718 = vunpack.c.l.b16 %v471
        %v719 = vunpack.c.h.b16 %v471
        %v720 = vunpack.c.l.b16 %v472
        %v721 = vunpack.c.h.b16 %v472
        %v722 = vunpack.c.l.b16 %v473
        %v723 = vunpack.c.h.b16 %v473
        %v724 = vunpack.c.l.b16 %v474
        %v725 = vunpack.c.h.b16 %v474
        %v726 = vunpack.c.l.b16 %v475
        %v727 = vunpack.c.h.b16 %v475
        %v728 = vunpack.c.l.b16 %v476
        %v729 = vunpack.c.h.b16 %v476
        %v730 = vunpack.c.l.b16 %v477
        %v731 = vunpack.c.h.b16 %v477
        %v732 = vunpack.c.l.b16 %v478
        %v733 = vunpack.c.h.b16 %v478
        %v734 = vunpack.c.l.b16 %v479
        %v735 = vunpack.c.h.b16 %v479
        %v736 = vunpack.c.l.b16 %v480
        %v737 = vunpack.c.h.b16 %v480
        %v738 = vunpack.c.l.b16 %v481
        %v739 = vunpack.c.h.b16 %v481
        %v740 = vunpack.c.l.b16 %v482
        %v741 = vunpack.c.h.b16 %v482
        %v742 = vunpack.c.l.b16 %v483
        %v743 = vunpack.c.h.b16 %v483
        %v744 = vunpack.c.l.b16 %v484
        %v745 = vunpack.c.h.b16 %v484
        %v746 = vunpack.c.l.b16 %v485
        %v747 = vunpack.c.h.b16 %v485
        %v748 = vunpack.c.l.b16 %v486
        %v749 = vunpack.c.h.b16 %v486
        %v750 = vunpack.c.l.b16 %v487
        %v751 = vunpack.c.h.b16 %v487
        %v752 = vunpack.c.l.b16 %v488
        %v753 = vunpack.c.h.b16 %v488
        %v754 = vunpack.c.l.b16 %v489
        %v755 = vunpack.c.h.b16 %v489
        %v756 = vunpack.c.l.b16 %v490
        %v757 = vunpack.c.h.b16 %v490
        %v758 = vunpack.c.l.b16 %v491
        %v759 = vunpack.c.h.b16 %v491
        %v760 = vunpack.c.l.b16 %v492
        %v761 = vunpack.c.h.b16 %v492
        %v762 = vunpack.c.l.b16 %v493
        %v763 = vunpack.c.h.b16 %v493
        %v764 = vunpack.c.l.b16 %v494
        %v765 = vunpack.c.h.b16 %v494
        %v766 = vunpack.c.l.b16 %v495
        %v767 = vunpack.c.h.b16 %v495
        %v768 = vpack.c.b16 %v642, %v640
        %v769 = vpack.c.b16 %v643, %v641
        %v770 = vpack.c.b16 %v646, %v644
        %v771 = vpack.c.b16 %v647, %v645
        %v772 = vpack.c.b16 %v650, %v648
        %v773 = vpack.c.b16 %v651, %v649
        %v774 = vpack.c.b16 %v654, %v652
        %v775 = vpack.c.b16 %v655, %v653
        %v776 = vpack.c.b16 %v658, %v656
        %v777 = vpack.c.b16 %v659, %v657
        %v778 = vpack.c.b16 %v662, %v660
        %v779 = vpack.c.b16 %v663, %v661
        %v780 = vpack.c.b16 %v666, %v664
        %v781 = vpack.c.b16 %v667, %v665
        %v782 = vpack.c.b16 %v670, %v668
        %v783 = vpack.c.b16 %v671, %v669
        %v784 = vpack.c.b16 %v674, %v672
        %v785 = vpack.c.b16 %v675, %v673
        %v786 = vpack.c.b16 %v678, %v676
        %v787 = vpack.c.b16 %v679, %v677
        %v788 = vpack.c.b16 %v682, %v680
        %v789 = vpack.c.b16 %v683, %v681
        %v790 = vpack.c.b16 %v686, %v684
        %v791 = vpack.c.b16 %v687, %v685
        %v792 = vpack.c.b16 %v690, %v688
        %v793 = vpack.c.b16 %v691, %v689
        %v794 = vpack.c.b16 %v694, %v692
        %v795 = vpack.c.b16 %v695, %v693
        %v796 = vpack.c.b16 %v698, %v696
        %v797 = vpack.c.b16 %v699, %v697
        %v798 = vpack.c.b16 %v702, %v700
        %v799 = vpack.c.b16 %v703, %v701
        %v800 = vpack.c.b16 %v706, %v704
        %v801 = vpack.c.b16 %v707, %v705
        %v802 = vpack.c.b16 %v710, %v708
        %v803 = vpack.c.b16 %v711, %v709
        %v804 = vpack.c.b16 %v714, %v712
        %v805 = vpack.c.b16 %v715, %v713
        %v806 = vpack.c.b16 %v718, %v716
        %v807 = vpack.c.b16 %v719, %v717
        %v808 = vpack.c.b16 %v722, %v720
        %v809 = vpack.c.b16 %v723, %v721
        %v810 = vpack.c.b16 %v726, %v724
        %v811 = vpack.c.b16 %v727, %v725
        %v812 = vpack.c.b16 %v730, %v728
        %v813 = vpack.c.b16 %v731, %v729
        %v814 = vpack.c.b16 %v734, %v732
        %v815 = vpack.c.b16 %v735, %v733
        %v816 = vpack.c.b16 %v738, %v736
        %v817 = vpack.c.b16 %v739, %v737
        %v818 = vpack.c.b16 %v742, %v740
        %v819 = vpack.c.b16 %v743, %v741
        %v820 = vpack.c.b16 %v746, %v744
        %v821 = vpack.c.b16 %v747, %v745
        %v822 = vpack.c.b16 %v750, %v748
        %v823 = vpack.c.b16 %v751, %v749
        %v824 = vpack.c.b16 %v754, %v752
        %v825 = vpack.c.b16 %v755, %v753
        %v826 = vpack.c.b16 %v758, %v756
        %v827 = vpack.c.b16 %v759, %v757
        %v828 = vpack.c.b16 %v762, %v760
        %v829 = vpack.c.b16 %v763, %v761
        %v830 = vpack.c.b16 %v766, %v764
        %v831 = vpack.c.b16 %v767, %v765
        %896 = vmatpush.bf16.msra.mxu0 %v782
        %897 = vmatpush.bf16.msra.mxu0 %v780
        %898 = vmatpush.bf16.msra.mxu0 %v778
        %899 = vmatpush.bf16.msra.mxu0 %v776
        %900 = vmatpush.bf16.msra.mxu0 %v774
        %901 = vmatpush.bf16.msra.mxu0 %v772
        %902 = vmatpush.bf16.msra.mxu0 %v770
        %903 = vmatpush.bf16.msra.mxu0 %v768
        %904 = vmatmul.bf16.gmra.mxu0 %v544
        %v905 = vpop.f32.mrf.mxu0
        %v906 = vadd.f32 0.0, %v905
        %v907 = vpop.f32.mrf.mxu0
        %v908 = vadd.f32 0.0, %v907
        %909 = vmatmul.bf16.gmra.mxu0 %v548
        %v910 = vpop.f32.mrf.mxu0
        %v911 = vadd.f32 0.0, %v910
        %v912 = vpop.f32.mrf.mxu0
        %v913 = vadd.f32 0.0, %v912
        %914 = vmatmul.bf16.gmra.mxu0 %v552
        %v915 = vpop.f32.mrf.mxu0
        %v916 = vadd.f32 0.0, %v915
        %v917 = vpop.f32.mrf.mxu0
        %v918 = vadd.f32 0.0, %v917
        %919 = vmatmul.bf16.gmra.mxu0 %v556
        %v920 = vpop.f32.mrf.mxu0
        %v921 = vadd.f32 0.0, %v920
        %v922 = vpop.f32.mrf.mxu0
        %v923 = vadd.f32 0.0, %v922
        %924 = vdwg.mxu0
        %925 = vmatpush.bf16.msra.mxu0 %v798
        %926 = vmatpush.bf16.msra.mxu0 %v796
        %927 = vmatpush.bf16.msra.mxu0 %v794
        %928 = vmatpush.bf16.msra.mxu0 %v792
        %929 = vmatpush.bf16.msra.mxu0 %v790
        %930 = vmatpush.bf16.msra.mxu0 %v788
        %931 = vmatpush.bf16.msra.mxu0 %v786
        %932 = vmatpush.bf16.msra.mxu0 %v784
        %933 = vmatmul.bf16.gmra.mxu0 %v545
        %v934 = vpop.f32.mrf.mxu0
        %v935 = vadd.f32 %v906, %v934
        %v936 = vpop.f32.mrf.mxu0
        %v937 = vadd.f32 %v908, %v936
        %938 = vmatmul.bf16.gmra.mxu0 %v549
        %v939 = vpop.f32.mrf.mxu0
        %v940 = vadd.f32 %v911, %v939
        %v941 = vpop.f32.mrf.mxu0
        %v942 = vadd.f32 %v913, %v941
        %943 = vmatmul.bf16.gmra.mxu0 %v553
        %v944 = vpop.f32.mrf.mxu0
        %v945 = vadd.f32 %v916, %v944
        %v946 = vpop.f32.mrf.mxu0
        %v947 = vadd.f32 %v918, %v946
        %948 = vmatmul.bf16.gmra.mxu0 %v557
        %v949 = vpop.f32.mrf.mxu0
        %v950 = vadd.f32 %v921, %v949
        %v951 = vpop.f32.mrf.mxu0
        %v952 = vadd.f32 %v923, %v951
        %953 = vdwg.mxu0
        %954 = vmatpush.bf16.msra.mxu0 %v814
        %955 = vmatpush.bf16.msra.mxu0 %v812
        %956 = vmatpush.bf16.msra.mxu0 %v810
        %957 = vmatpush.bf16.msra.mxu0 %v808
        %958 = vmatpush.bf16.msra.mxu0 %v806
        %959 = vmatpush.bf16.msra.mxu0 %v804
        %960 = vmatpush.bf16.msra.mxu0 %v802
        %961 = vmatpush.bf16.msra.mxu0 %v800
        %962 = vmatmul.bf16.gmra.mxu0 %v546
        %v963 = vpop.f32.mrf.mxu0
        %v964 = vadd.f32 %v935, %v963
        %v965 = vpop.f32.mrf.mxu0
        %v966 = vadd.f32 %v937, %v965
        %967 = vmatmul.bf16.gmra.mxu0 %v550
        %v968 = vpop.f32.mrf.mxu0
        %v969 = vadd.f32 %v940, %v968
        %v970 = vpop.f32.mrf.mxu0
        %v971 = vadd.f32 %v942, %v970
        %972 = vmatmul.bf16.gmra.mxu0 %v554
        %v973 = vpop.f32.mrf.mxu0
        %v974 = vadd.f32 %v945, %v973
        %v975 = vpop.f32.mrf.mxu0
        %v976 = vadd.f32 %v947, %v975
        %977 = vmatmul.bf16.gmra.mxu0 %v558
        %v978 = vpop.f32.mrf.mxu0
        %v979 = vadd.f32 %v950, %v978
        %v980 = vpop.f32.mrf.mxu0
        %v981 = vadd.f32 %v952, %v980
        %982 = vdwg.mxu0
        %983 = vmatpush.bf16.msra.mxu0 %v830
        %984 = vmatpush.bf16.msra.mxu0 %v828
        %985 = vmatpush.bf16.msra.mxu0 %v826
        %986 = vmatpush.bf16.msra.mxu0 %v824
        %987 = vmatpush.bf16.msra.mxu0 %v822
        %988 = vmatpush.bf16.msra.mxu0 %v820
        %989 = vmatpush.bf16.msra.mxu0 %v818
        %990 = vmatpush.bf16.msra.mxu0 %v816
        %991 = vmatmul.bf16.gmra.mxu0 %v547
        %v992 = vpop.f32.mrf.mxu0
        %v993 = vadd.f32 %v964, %v992
        %v994 = vpop.f32.mrf.mxu0
        %v995 = vadd.f32 %v966, %v994
        %996 = vmatmul.bf16.gmra.mxu0 %v551
        %v997 = vpop.f32.mrf.mxu0
        %v998 = vadd.f32 %v969, %v997
        %v999 = vpop.f32.mrf.mxu0
        %v1000 = vadd.f32 %v971, %v999
        %1001 = vmatmul.bf16.gmra.mxu0 %v555
        %v1002 = vpop.f32.mrf.mxu0
        %v1003 = vadd.f32 %v974, %v1002
        %v1004 = vpop.f32.mrf.mxu0
        %v1005 = vadd.f32 %v976, %v1004
        %1006 = vmatmul.bf16.gmra.mxu0 %v559
        %v1007 = vpop.f32.mrf.mxu0
        %v1008 = vadd.f32 %v979, %v1007
        %v1009 = vpop.f32.mrf.mxu0
        %v1010 = vadd.f32 %v981, %v1009
        %1011 = vdwg.mxu0
        %1012 = vmatpush.bf16.msra.mxu0 %v783
        %1013 = vmatpush.bf16.msra.mxu0 %v781
        %1014 = vmatpush.bf16.msra.mxu0 %v779
        %1015 = vmatpush.bf16.msra.mxu0 %v777
        %1016 = vmatpush.bf16.msra.mxu0 %v775
        %1017 = vmatpush.bf16.msra.mxu0 %v773
        %1018 = vmatpush.bf16.msra.mxu0 %v771
        %1019 = vmatpush.bf16.msra.mxu0 %v769
        %1020 = vmatmul.bf16.gmra.mxu0 %v544
        %v1021 = vpop.f32.mrf.mxu0
        %v1022 = vadd.f32 0.0, %v1021
        %v1023 = vpop.f32.mrf.mxu0
        %v1024 = vadd.f32 0.0, %v1023
        %1025 = vmatmul.bf16.gmra.mxu0 %v548
        %v1026 = vpop.f32.mrf.mxu0
        %v1027 = vadd.f32 0.0, %v1026
        %v1028 = vpop.f32.mrf.mxu0
        %v1029 = vadd.f32 0.0, %v1028
        %1030 = vmatmul.bf16.gmra.mxu0 %v552
        %v1031 = vpop.f32.mrf.mxu0
        %v1032 = vadd.f32 0.0, %v1031
        %v1033 = vpop.f32.mrf.mxu0
        %v1034 = vadd.f32 0.0, %v1033
        %1035 = vmatmul.bf16.gmra.mxu0 %v556
        %v1036 = vpop.f32.mrf.mxu0
        %v1037 = vadd.f32 0.0, %v1036
        %v1038 = vpop.f32.mrf.mxu0
        %v1039 = vadd.f32 0.0, %v1038
        %1040 = vdwg.mxu0
        %1041 = vmatpush.bf16.msra.mxu0 %v799
        %1042 = vmatpush.bf16.msra.mxu0 %v797
        %1043 = vmatpush.bf16.msra.mxu0 %v795
        %1044 = vmatpush.bf16.msra.mxu0 %v793
        %1045 = vmatpush.bf16.msra.mxu0 %v791
        %1046 = vmatpush.bf16.msra.mxu0 %v789
        %1047 = vmatpush.bf16.msra.mxu0 %v787
        %1048 = vmatpush.bf16.msra.mxu0 %v785
        %1049 = vmatmul.bf16.gmra.mxu0 %v545
        %v1050 = vpop.f32.mrf.mxu0
        %v1051 = vadd.f32 %v1022, %v1050
        %v1052 = vpop.f32.mrf.mxu0
        %v1053 = vadd.f32 %v1024, %v1052
        %1054 = vmatmul.bf16.gmra.mxu0 %v549
        %v1055 = vpop.f32.mrf.mxu0
        %v1056 = vadd.f32 %v1027, %v1055
        %v1057 = vpop.f32.mrf.mxu0
        %v1058 = vadd.f32 %v1029, %v1057
        %1059 = vmatmul.bf16.gmra.mxu0 %v553
        %v1060 = vpop.f32.mrf.mxu0
        %v1061 = vadd.f32 %v1032, %v1060
        %v1062 = vpop.f32.mrf.mxu0
        %v1063 = vadd.f32 %v1034, %v1062
        %1064 = vmatmul.bf16.gmra.mxu0 %v557
        %v1065 = vpop.f32.mrf.mxu0
        %v1066 = vadd.f32 %v1037, %v1065
        %v1067 = vpop.f32.mrf.mxu0
        %v1068 = vadd.f32 %v1039, %v1067
        %1069 = vdwg.mxu0
        %1070 = vmatpush.bf16.msra.mxu0 %v815
        %1071 = vmatpush.bf16.msra.mxu0 %v813
        %1072 = vmatpush.bf16.msra.mxu0 %v811
        %1073 = vmatpush.bf16.msra.mxu0 %v809
        %1074 = vmatpush.bf16.msra.mxu0 %v807
        %1075 = vmatpush.bf16.msra.mxu0 %v805
        %1076 = vmatpush.bf16.msra.mxu0 %v803
        %1077 = vmatpush.bf16.msra.mxu0 %v801
        %1078 = vmatmul.bf16.gmra.mxu0 %v546
        %v1079 = vpop.f32.mrf.mxu0
        %v1080 = vadd.f32 %v1051, %v1079
        %v1081 = vpop.f32.mrf.mxu0
        %v1082 = vadd.f32 %v1053, %v1081
        %1083 = vmatmul.bf16.gmra.mxu0 %v550
        %v1084 = vpop.f32.mrf.mxu0
        %v1085 = vadd.f32 %v1056, %v1084
        %v1086 = vpop.f32.mrf.mxu0
        %v1087 = vadd.f32 %v1058, %v1086
        %1088 = vmatmul.bf16.gmra.mxu0 %v554
        %v1089 = vpop.f32.mrf.mxu0
        %v1090 = vadd.f32 %v1061, %v1089
        %v1091 = vpop.f32.mrf.mxu0
        %v1092 = vadd.f32 %v1063, %v1091
        %1093 = vmatmul.bf16.gmra.mxu0 %v558
        %v1094 = vpop.f32.mrf.mxu0
        %v1095 = vadd.f32 %v1066, %v1094
        %v1096 = vpop.f32.mrf.mxu0
        %v1097 = vadd.f32 %v1068, %v1096
        %1098 = vdwg.mxu0
        %1099 = vmatpush.bf16.msra.mxu0 %v831
        %1100 = vmatpush.bf16.msra.mxu0 %v829
        %1101 = vmatpush.bf16.msra.mxu0 %v827
        %1102 = vmatpush.bf16.msra.mxu0 %v825
        %1103 = vmatpush.bf16.msra.mxu0 %v823
        %1104 = vmatpush.bf16.msra.mxu0 %v821
        %1105 = vmatpush.bf16.msra.mxu0 %v819
        %1106 = vmatpush.bf16.msra.mxu0 %v817
        %1107 = vmatmul.bf16.gmra.mxu0 %v547
        %v1108 = vpop.f32.mrf.mxu0
        %v1109 = vadd.f32 %v1080, %v1108
        %v1110 = vpop.f32.mrf.mxu0
        %v1111 = vadd.f32 %v1082, %v1110
        %1112 = vmatmul.bf16.gmra.mxu0 %v551
        %v1113 = vpop.f32.mrf.mxu0
        %v1114 = vadd.f32 %v1085, %v1113
        %v1115 = vpop.f32.mrf.mxu0
        %v1116 = vadd.f32 %v1087, %v1115
        %1117 = vmatmul.bf16.gmra.mxu0 %v555
        %v1118 = vpop.f32.mrf.mxu0
        %v1119 = vadd.f32 %v1090, %v1118
        %v1120 = vpop.f32.mrf.mxu0
        %v1121 = vadd.f32 %v1092, %v1120
        %1122 = vmatmul.bf16.gmra.mxu0 %v559
        %v1123 = vpop.f32.mrf.mxu0
        %v1124 = vadd.f32 %v1095, %v1123
        %v1125 = vpop.f32.mrf.mxu0
        %v1126 = vadd.f32 %v1097, %v1125
        %1127 = vdwg.mxu0
        %v1128 = vadd.f32 %v400, %v993
        %v1129 = vadd.f32 %v401, %v1109
        %v1130 = vadd.f32 %v402, %v995
        %v1131 = vadd.f32 %v403, %v1111
        %v1132 = vadd.f32 %v404, %v998
        %v1133 = vadd.f32 %v405, %v1114
        %v1134 = vadd.f32 %v406, %v1000
        %v1135 = vadd.f32 %v407, %v1116
        %v1136 = vadd.f32 %v408, %v1003
        %v1137 = vadd.f32 %v409, %v1119
        %v1138 = vadd.f32 %v410, %v1005
        %v1139 = vadd.f32 %v411, %v1121
        %v1140 = vadd.f32 %v412, %v1008
        %v1141 = vadd.f32 %v413, %v1124
        %v1142 = vadd.f32 %v414, %v1010
        %v1143 = vadd.f32 %v415, %v1126
        %1144 = vst [vmem:[#allocation2] sm:$0xff] %v1128
        %1145 = vst [vmem:[#allocation2 + $0x8] sm:$0xff] %v1129
        %1146 = vst [vmem:[#allocation2 + $0x10] sm:$0xff] %v1130
        %1147 = vst [vmem:[#allocation2 + $0x18] sm:$0xff] %v1131
        %1148 = vst [vmem:[#allocation2 + $0x20] sm:$0xff] %v1132
        %1149 = vst [vmem:[#allocation2 + $0x28] sm:$0xff] %v1133
        %1150 = vst [vmem:[#allocation2 + $0x30] sm:$0xff] %v1134
        %1151 = vst [vmem:[#allocation2 + $0x38] sm:$0xff] %v1135
        %1152 = vst [vmem:[#allocation2 + $0x40] sm:$0xff] %v1136
        %1153 = vst [vmem:[#allocation2 + $0x48] sm:$0xff] %v1137
        %1154 = vst [vmem:[#allocation2 + $0x50] sm:$0xff] %v1138
        %1155 = vst [vmem:[#allocation2 + $0x58] sm:$0xff] %v1139
        %1156 = vst [vmem:[#allocation2 + $0x60] sm:$0xff] %v1140
        %1157 = vst [vmem:[#allocation2 + $0x68] sm:$0xff] %v1141
        %1158 = vst [vmem:[#allocation2 + $0x70] sm:$0xff] %v1142
        %1159 = vst [vmem:[#allocation2 + $0x78] sm:$0xff] %v1143
        %p1160 = scmp.eq.s32.totalorder %s28, 1
        // Predicated region
        $region72: #{res_classifier_forward.3} parent=54 // pred_check
          %p1161 = pneg %p1160
        $region73: #{res_classifier_forward.3} parent=54 // pred_check_branch
          %1163 = sbr.rel (%p1161) target = $region75
        $region74: #{res_classifier_forward.3} parent=54 // pred_region
          %v1164 = vld [vmem:[#allocation2] sm:$0xff]
          %v1165 = vld [vmem:[#allocation2 + $0x8] sm:$0xff]
          %v1166 = vld [vmem:[#allocation2 + $0x10] sm:$0xff]
          %v1167 = vld [vmem:[#allocation2 + $0x18] sm:$0xff]
          %v1168 = vld [vmem:[#allocation2 + $0x20] sm:$0xff]
          %v1169 = vld [vmem:[#allocation2 + $0x28] sm:$0xff]
          %v1170 = vld [vmem:[#allocation2 + $0x30] sm:$0xff]
          %v1171 = vld [vmem:[#allocation2 + $0x38] sm:$0xff]
          %v1172 = vld [vmem:[#allocation2 + $0x40] sm:$0xff]
          %v1173 = vld [vmem:[#allocation2 + $0x48] sm:$0xff]
          %v1174 = vld [vmem:[#allocation2 + $0x50] sm:$0xff]
          %v1175 = vld [vmem:[#allocation2 + $0x58] sm:$0xff]
          %v1176 = vld [vmem:[#allocation2 + $0x60] sm:$0xff]
          %v1177 = vld [vmem:[#allocation2 + $0x68] sm:$0xff]
          %v1178 = vld [vmem:[#allocation2 + $0x70] sm:$0xff]
          %v1179 = vld [vmem:[#allocation2 + $0x78] sm:$0xff]
          %v1180 = vld [vmem:[%s375] sm:$0x3]
          %v1182 = vperm.slane %v1180, 0
          %v1183 = vperm.slane %v1180, 1
          %v1186 = vmul.f32 %v1164, %v1182
          %v1187 = vmul.f32 %v1165, %v1183
          %v1188 = vmul.f32 %v1166, %v1182
          %v1189 = vmul.f32 %v1167, %v1183
          %v1190 = vmul.f32 %v1168, %v1182
          %v1191 = vmul.f32 %v1169, %v1183
          %v1192 = vmul.f32 %v1170, %v1182
          %v1193 = vmul.f32 %v1171, %v1183
          %v1194 = vmul.f32 %v1172, %v1182
          %v1195 = vmul.f32 %v1173, %v1183
          %v1196 = vmul.f32 %v1174, %v1182
          %v1197 = vmul.f32 %v1175, %v1183
          %v1198 = vmul.f32 %v1176, %v1182
          %v1199 = vmul.f32 %v1177, %v1183
          %v1200 = vmul.f32 %v1178, %v1182
          %v1201 = vmul.f32 %v1179, %v1183
          %v1202 = vld [vmem:[%s330] sm:$0x3]
          %v1204 = vperm.slane %v1202, 0
          %v1205 = vperm.slane %v1202, 1
          %v1208 = vadd.f32 %v1186, %v1204
          %v1209 = vadd.f32 %v1187, %v1205
          %v1210 = vadd.f32 %v1188, %v1204
          %v1211 = vadd.f32 %v1189, %v1205
          %v1212 = vadd.f32 %v1190, %v1204
          %v1213 = vadd.f32 %v1191, %v1205
          %v1214 = vadd.f32 %v1192, %v1204
          %v1215 = vadd.f32 %v1193, %v1205
          %v1216 = vadd.f32 %v1194, %v1204
          %v1217 = vadd.f32 %v1195, %v1205
          %v1218 = vadd.f32 %v1196, %v1204
          %v1219 = vadd.f32 %v1197, %v1205
          %v1220 = vadd.f32 %v1198, %v1204
          %v1221 = vadd.f32 %v1199, %v1205
          %v1222 = vadd.f32 %v1200, %v1204
          %v1223 = vadd.f32 %v1201, %v1205
          %v1224 = vmax.f32 %v1208, 0.0
          %v1225 = vmax.f32 %v1209, 0.0
          %v1226 = vmax.f32 %v1210, 0.0
          %v1227 = vmax.f32 %v1211, 0.0
          %v1228 = vmax.f32 %v1212, 0.0
          %v1229 = vmax.f32 %v1213, 0.0
          %v1230 = vmax.f32 %v1214, 0.0
          %v1231 = vmax.f32 %v1215, 0.0
          %v1232 = vmax.f32 %v1216, 0.0
          %v1233 = vmax.f32 %v1217, 0.0
          %v1234 = vmax.f32 %v1218, 0.0
          %v1235 = vmax.f32 %v1219, 0.0
          %v1236 = vmax.f32 %v1220, 0.0
          %v1237 = vmax.f32 %v1221, 0.0
          %v1238 = vmax.f32 %v1222, 0.0
          %v1239 = vmax.f32 %v1223, 0.0
          %1240 = vst [vmem:[%s367] sm:$0xff] %v1224
          %1241 = vst [vmem:[%s367 + $0x8] sm:$0xff] %v1225
          %1242 = vst [vmem:[%s367 + $0x10] sm:$0xff] %v1226
          %1243 = vst [vmem:[%s367 + $0x18] sm:$0xff] %v1227
          %1244 = vst [vmem:[%s367 + $0x20] sm:$0xff] %v1228
          %1245 = vst [vmem:[%s367 + $0x28] sm:$0xff] %v1229
          %1246 = vst [vmem:[%s367 + $0x30] sm:$0xff] %v1230
          %1247 = vst [vmem:[%s367 + $0x38] sm:$0xff] %v1231
          %1248 = vst [vmem:[%s367 + $0x40] sm:$0xff] %v1232
          %1249 = vst [vmem:[%s367 + $0x48] sm:$0xff] %v1233
          %1250 = vst [vmem:[%s367 + $0x50] sm:$0xff] %v1234
          %1251 = vst [vmem:[%s367 + $0x58] sm:$0xff] %v1235
          %1252 = vst [vmem:[%s367 + $0x60] sm:$0xff] %v1236
          %1253 = vst [vmem:[%s367 + $0x68] sm:$0xff] %v1237
          %1254 = vst [vmem:[%s367 + $0x70] sm:$0xff] %v1238
          %1255 = vst [vmem:[%s367 + $0x78] sm:$0xff] %v1239
        $region75: #{res_classifier_forward.3} parent=54 // pred_fallthru
          _
        %s1256 = sand.u32 %s158, 1
        %s1257 = sand.u32 %s158, 1
        %s1258 = smul.addr %s1257, 128
        %s1259 = scalar_lea.vmem [#allocation8], %s1258
        // Predicated region
        $region76: #{res_classifier_forward.3} parent=54 // pred_check
          %p1260 = pneg %p168
        $region77: #{res_classifier_forward.3} parent=54 // pred_check_branch
          %1262 = sbr.rel (%p1260) target = $region79
        $region78: #{res_classifier_forward.3} parent=54 // pred_region
          %s1263 = smul.u32 8, %s26
          %s1264 = smul.u32 2, %s27
          %s1265 = smul.addr %s1263, 4
          %s1266 = sadd.s32 %s1264, %s1265
          %s1267 = smul.addr %s1266, 8
          %s1268 = scalar_lea.vmem %s4, %s1267
          // Predicated region
          $region80: #{res_classifier_forward.3} parent=78 // pred_check
            _
          $region81: #{res_classifier_forward.3} parent=78 // pred_check_branch
            %1270 = sbr.rel (0) target = $region83
          $region82: #{res_classifier_forward.3} parent=78 // pred_region
            // Predicated region
            $region84: #{res_classifier_forward.3} parent=82 // pred_check
              _
            $region85: #{res_classifier_forward.3} parent=82 // pred_check_branch
              %1272 = sbr.rel (0) target = $region87
            $region86: #{res_classifier_forward.3} parent=82 // pred_region
              loop: start=0, step=1, limit=1
              $region88: #{res_classifier_forward.3} parent=86 // loop_pre_header
                _
              $region89: #{res_classifier_forward.3} parent=86 // loop_header
                %s1274 = sphi 0, %s1278
                %p1275 = scmp.ge.s32.totalorder %s1274, 1
                %s1279 = sphi %s1259, %s1259
                %s1280 = sphi %s1268, %s1268
              $region90: #{res_classifier_forward.3} parent=86 // loop_header_branch
                %1277 = sbr.rel (%p1275) target = $region94
              $region91: #{res_classifier_forward.3} parent=86 // loop_body
                %v1281 = vld [vmem:[%s1279] sm:$0xff]
                %1282 = vst [vmem:[%s1280] sm:$0xff] %v1281
                %v1283 = vld [vmem:[%s1279 + $0x8] sm:$0xff]
                %1284 = vst [vmem:[%s1280 + $0x8] sm:$0xff] %v1283
                %v1285 = vld [vmem:[%s1279 + $0x10] sm:$0xff]
                %1286 = vst [vmem:[%s1280 + $0x20] sm:$0xff] %v1285
                %v1287 = vld [vmem:[%s1279 + $0x18] sm:$0xff]
                %1288 = vst [vmem:[%s1280 + $0x28] sm:$0xff] %v1287
                %v1289 = vld [vmem:[%s1279 + $0x20] sm:$0xff]
                %1290 = vst [vmem:[%s1280 + $0x40] sm:$0xff] %v1289
                %v1291 = vld [vmem:[%s1279 + $0x28] sm:$0xff]
                %1292 = vst [vmem:[%s1280 + $0x48] sm:$0xff] %v1291
                %v1293 = vld [vmem:[%s1279 + $0x30] sm:$0xff]
                %1294 = vst [vmem:[%s1280 + $0x60] sm:$0xff] %v1293
                %v1295 = vld [vmem:[%s1279 + $0x38] sm:$0xff]
                %1296 = vst [vmem:[%s1280 + $0x68] sm:$0xff] %v1295
                %v1297 = vld [vmem:[%s1279 + $0x40] sm:$0xff]
                %1298 = vst [vmem:[%s1280 + $0x80] sm:$0xff] %v1297
                %v1299 = vld [vmem:[%s1279 + $0x48] sm:$0xff]
                %1300 = vst [vmem:[%s1280 + $0x88] sm:$0xff] %v1299
                %v1301 = vld [vmem:[%s1279 + $0x50] sm:$0xff]
                %1302 = vst [vmem:[%s1280 + $0xa0] sm:$0xff] %v1301
                %v1303 = vld [vmem:[%s1279 + $0x58] sm:$0xff]
                %1304 = vst [vmem:[%s1280 + $0xa8] sm:$0xff] %v1303
                %v1305 = vld [vmem:[%s1279 + $0x60] sm:$0xff]
                %1306 = vst [vmem:[%s1280 + $0xc0] sm:$0xff] %v1305
                %v1307 = vld [vmem:[%s1279 + $0x68] sm:$0xff]
                %1308 = vst [vmem:[%s1280 + $0xc8] sm:$0xff] %v1307
                %v1309 = vld [vmem:[%s1279 + $0x70] sm:$0xff]
                %1310 = vst [vmem:[%s1280 + $0xe0] sm:$0xff] %v1309
                %v1311 = vld [vmem:[%s1279 + $0x78] sm:$0xff]
                %1312 = vst [vmem:[%s1280 + $0xe8] sm:$0xff] %v1311
              $region92: #{res_classifier_forward.3} parent=86 // loop_footer
                %s1278 = sadd.s32 1, %s1274
              $region93: #{res_classifier_forward.3} parent=86 // loop_footer_branch
                %1273 = sbr.rel target = $region89
              $region94: #{res_classifier_forward.3} parent=86 // loop_exit
                _
            $region87: #{res_classifier_forward.3} parent=82 // pred_fallthru
              _
            // Predicated region
            $region95: #{res_classifier_forward.3} parent=82 // pred_check
              _
            $region96: #{res_classifier_forward.3} parent=82 // pred_check_branch
              %1314 = sbr.rel target = $region98
            $region97: #{res_classifier_forward.3} parent=82 // pred_region
              _
            $region98: #{res_classifier_forward.3} parent=82 // pred_fallthru
              _
          $region83: #{res_classifier_forward.3} parent=78 // pred_fallthru
            _
          %1315 = vnop
        $region79: #{res_classifier_forward.3} parent=54 // pred_fallthru
          _
      $region55: #{res_classifier_forward.3} parent=5 // pred_fallthru
        _
      %p1316 = scmp.le.s32.totalorder 2, %s16
      // Predicated region
      $region99: #{res_classifier_forward.3} parent=5 // pred_check
        %p1317 = pneg %p1316
      $region100: #{res_classifier_forward.3} parent=5 // pred_check_branch
        %1319 = sbr.rel (%p1317) target = $region102
      $region101: #{res_classifier_forward.3} parent=5 // pred_region
        %s1320 = ssub.s32 %s16, 2
        // Predicated region
        $region103: #{res_classifier_forward.3} parent=101 // pred_check
          %p1321 = pneg %p174
        $region104: #{res_classifier_forward.3} parent=101 // pred_check_branch
          %1323 = sbr.rel (%p1321) target = $region106
        $region105: #{res_classifier_forward.3} parent=101 // pred_region
          %s1324 = sand.u32 %s159, 1
          %s1325 = sand.u32 %s159, 1
          %s1326 = smul.addr %s1325, 128
          %s1327 = scalar_lea.vmem [#allocation8], %s1326
        $region106: #{res_classifier_forward.3} parent=101 // pred_fallthru
          _
      $region102: #{res_classifier_forward.3} parent=5 // pred_fallthru
        _
    $region6: #{res_classifier_forward.3} parent=1 // loop_footer
      %s20 = sadd.s32 1, %s16
    $region7: #{res_classifier_forward.3} parent=1 // loop_footer_branch
      %15 = sbr.rel target = $region3
    $region8: #{res_classifier_forward.3} parent=1 // loop_exit
      _
    %1328 = vsyncpa [#allocation5], 1
    %s1329 = scalar_lea.sflag [#allocation5], 1
    %1330 = vsyncpa %s1329, 1
    %1331 = vsyncpa [#allocation7], 1
    %s1332 = scalar_lea.sflag [#allocation7], 1
    %1333 = vsyncpa %s1332, 1

// kernel: res_classifier_forward.5
$region0: #{res_classifier_forward.5}
  #allocation0 [shape = 'u32[]', space=smem, size = 0x4, offset = 0x4, fixed_abs, tag = 'smem constant byte address 0x4 - core index']
  #allocation1 [shape = 'u32[72,128]{1,0:T(1,128)}', space=vmem, size = 0x9000, scoped, tag = 'internal scratch']
  #allocation2 [shape = 'f32[64,128]{1,0:T(8,128)}', space=vmem, size = 0x8000, scoped, tag = 'scratch operand']
  %s0 = inlined_call_operand.vmem [shape: bf16[64,512], index: 0, kind: input, shape index: {}]
  %s1 = inlined_call_operand.vmem [shape: bf16[512,128], index: 1, kind: input, shape index: {}]
  %s2 = inlined_call_operand.vmem [shape: f32[1,128], index: 2, kind: input, shape index: {}]
  %s3 = inlined_call_operand.vmem [shape: f32[64,128], index: 3, kind: output, shape index: {}]
  %s4 = sld [smem:[#allocation0]]
  $region30: #{res_classifier_forward.5} parent=0
    _
  %s6 = ssub.s32 1, %s4
  %s7 = scalar_select 0, %s6, %s4
  // Predicated region
  $region2: #{res_classifier_forward.5} parent=0 // pred_check
    _
  $region3: #{res_classifier_forward.5} parent=0 // pred_check_branch
    %9 = sbr.rel (0) target = $region5
  $region4: #{res_classifier_forward.5} parent=0 // pred_region
    _
  $region5: #{res_classifier_forward.5} parent=0 // pred_fallthru
    _
  // Predicated region
  $region6: #{res_classifier_forward.5} parent=0 // pred_check
    _
  $region7: #{res_classifier_forward.5} parent=0 // pred_check_branch
    %11 = sbr.rel (0) target = $region9
  $region8: #{res_classifier_forward.5} parent=0 // pred_region
    _
  $region9: #{res_classifier_forward.5} parent=0 // pred_fallthru
    _
  // Predicated region
  $region10: #{res_classifier_forward.5} parent=0 // pred_check
    _
  $region11: #{res_classifier_forward.5} parent=0 // pred_check_branch
    %13 = sbr.rel (0) target = $region13
  $region12: #{res_classifier_forward.5} parent=0 // pred_region
    _
  $region13: #{res_classifier_forward.5} parent=0 // pred_fallthru
    _
  %p14 = scmp.eq.s32.totalorder 0, 0
  // Predicated region
  $region14: #{res_classifier_forward.5} parent=0 // pred_check
    %p15 = pneg %p14
  $region15: #{res_classifier_forward.5} parent=0 // pred_check_branch
    %17 = sbr.rel (%p15) target = $region17
  $region16: #{res_classifier_forward.5} parent=0 // pred_region
    %18 = vst [vmem:[#allocation2] sm:$0xff] 0.0
    %19 = vst [vmem:[#allocation2 + $0x8] sm:$0xff] 0.0
    %20 = vst [vmem:[#allocation2 + $0x10] sm:$0xff] 0.0
    %21 = vst [vmem:[#allocation2 + $0x18] sm:$0xff] 0.0
    %22 = vst [vmem:[#allocation2 + $0x20] sm:$0xff] 0.0
    %23 = vst [vmem:[#allocation2 + $0x28] sm:$0xff] 0.0
    %24 = vst [vmem:[#allocation2 + $0x30] sm:$0xff] 0.0
    %25 = vst [vmem:[#allocation2 + $0x38] sm:$0xff] 0.0
  $region17: #{res_classifier_forward.5} parent=0 // pred_fallthru
    _
  %v26 = vld [vmem:[#allocation2] sm:$0xff]
  %v27 = vld [vmem:[#allocation2 + $0x8] sm:$0xff]
  %v28 = vld [vmem:[#allocation2 + $0x10] sm:$0xff]
  %v29 = vld [vmem:[#allocation2 + $0x18] sm:$0xff]
  %v30 = vld [vmem:[#allocation2 + $0x20] sm:$0xff]
  %v31 = vld [vmem:[#allocation2 + $0x28] sm:$0xff]
  %v32 = vld [vmem:[#allocation2 + $0x30] sm:$0xff]
  %v33 = vld [vmem:[#allocation2 + $0x38] sm:$0xff]
  %v34 = vld [vmem:[%s0] sm:$0xff]
  %v35 = vld [vmem:[%s0 + $0x8] sm:$0xff]
  %v36 = vld [vmem:[%s0 + $0x10] sm:$0xff]
  %v37 = vld [vmem:[%s0 + $0x18] sm:$0xff]
  %v38 = vld [vmem:[%s0 + $0x20] sm:$0xff]
  %v39 = vld [vmem:[%s0 + $0x28] sm:$0xff]
  %v40 = vld [vmem:[%s0 + $0x30] sm:$0xff]
  %v41 = vld [vmem:[%s0 + $0x38] sm:$0xff]
  %v42 = vld [vmem:[%s0 + $0x40] sm:$0xff]
  %v43 = vld [vmem:[%s0 + $0x48] sm:$0xff]
  %v44 = vld [vmem:[%s0 + $0x50] sm:$0xff]
  %v45 = vld [vmem:[%s0 + $0x58] sm:$0xff]
  %v46 = vld [vmem:[%s0 + $0x60] sm:$0xff]
  %v47 = vld [vmem:[%s0 + $0x68] sm:$0xff]
  %v48 = vld [vmem:[%s0 + $0x70] sm:$0xff]
  %v49 = vld [vmem:[%s0 + $0x78] sm:$0xff]
  %v50 = vld [vmem:[%s1] sm:$0xf]
  %v51 = vld [vmem:[%s1 + $0x4] sm:$0xf]
  %v52 = vld [vmem:[%s1 + $0x8] sm:$0xf]
  %v53 = vld [vmem:[%s1 + $0xc] sm:$0xf]
  %v54 = vld [vmem:[%s1 + $0x10] sm:$0xf]
  %v55 = vld [vmem:[%s1 + $0x14] sm:$0xf]
  %v56 = vld [vmem:[%s1 + $0x18] sm:$0xf]
  %v57 = vld [vmem:[%s1 + $0x1c] sm:$0xf]
  %v58 = vld [vmem:[%s1 + $0x20] sm:$0xf]
  %v59 = vld [vmem:[%s1 + $0x24] sm:$0xf]
  %v60 = vld [vmem:[%s1 + $0x28] sm:$0xf]
  %v61 = vld [vmem:[%s1 + $0x2c] sm:$0xf]
  %v62 = vld [vmem:[%s1 + $0x30] sm:$0xf]
  %v63 = vld [vmem:[%s1 + $0x34] sm:$0xf]
  %v64 = vld [vmem:[%s1 + $0x38] sm:$0xf]
  %v65 = vld [vmem:[%s1 + $0x3c] sm:$0xf]
  %v66 = vld [vmem:[%s1 + $0x40] sm:$0xf]
  %v67 = vld [vmem:[%s1 + $0x44] sm:$0xf]
  %v68 = vld [vmem:[%s1 + $0x48] sm:$0xf]
  %v69 = vld [vmem:[%s1 + $0x4c] sm:$0xf]
  %v70 = vld [vmem:[%s1 + $0x50] sm:$0xf]
  %v71 = vld [vmem:[%s1 + $0x54] sm:$0xf]
  %v72 = vld [vmem:[%s1 + $0x58] sm:$0xf]
  %v73 = vld [vmem:[%s1 + $0x5c] sm:$0xf]
  %v74 = vld [vmem:[%s1 + $0x60] sm:$0xf]
  %v75 = vld [vmem:[%s1 + $0x64] sm:$0xf]
  %v76 = vld [vmem:[%s1 + $0x68] sm:$0xf]
  %v77 = vld [vmem:[%s1 + $0x6c] sm:$0xf]
  %v78 = vld [vmem:[%s1 + $0x70] sm:$0xf]
  %v79 = vld [vmem:[%s1 + $0x74] sm:$0xf]
  %v80 = vld [vmem:[%s1 + $0x78] sm:$0xf]
  %v81 = vld [vmem:[%s1 + $0x7c] sm:$0xf]
  %v82 = vld [vmem:[%s1 + $0x80] sm:$0xf]
  %v83 = vld [vmem:[%s1 + $0x84] sm:$0xf]
  %v84 = vld [vmem:[%s1 + $0x88] sm:$0xf]
  %v85 = vld [vmem:[%s1 + $0x8c] sm:$0xf]
  %v86 = vld [vmem:[%s1 + $0x90] sm:$0xf]
  %v87 = vld [vmem:[%s1 + $0x94] sm:$0xf]
  %v88 = vld [vmem:[%s1 + $0x98] sm:$0xf]
  %v89 = vld [vmem:[%s1 + $0x9c] sm:$0xf]
  %v90 = vld [vmem:[%s1 + $0xa0] sm:$0xf]
  %v91 = vld [vmem:[%s1 + $0xa4] sm:$0xf]
  %v92 = vld [vmem:[%s1 + $0xa8] sm:$0xf]
  %v93 = vld [vmem:[%s1 + $0xac] sm:$0xf]
  %v94 = vld [vmem:[%s1 + $0xb0] sm:$0xf]
  %v95 = vld [vmem:[%s1 + $0xb4] sm:$0xf]
  %v96 = vld [vmem:[%s1 + $0xb8] sm:$0xf]
  %v97 = vld [vmem:[%s1 + $0xbc] sm:$0xf]
  %v98 = vld [vmem:[%s1 + $0xc0] sm:$0xf]
  %v99 = vld [vmem:[%s1 + $0xc4] sm:$0xf]
  %v100 = vld [vmem:[%s1 + $0xc8] sm:$0xf]
  %v101 = vld [vmem:[%s1 + $0xcc] sm:$0xf]
  %v102 = vld [vmem:[%s1 + $0xd0] sm:$0xf]
  %v103 = vld [vmem:[%s1 + $0xd4] sm:$0xf]
  %v104 = vld [vmem:[%s1 + $0xd8] sm:$0xf]
  %v105 = vld [vmem:[%s1 + $0xdc] sm:$0xf]
  %v106 = vld [vmem:[%s1 + $0xe0] sm:$0xf]
  %v107 = vld [vmem:[%s1 + $0xe4] sm:$0xf]
  %v108 = vld [vmem:[%s1 + $0xe8] sm:$0xf]
  %v109 = vld [vmem:[%s1 + $0xec] sm:$0xf]
  %v110 = vld [vmem:[%s1 + $0xf0] sm:$0xf]
  %v111 = vld [vmem:[%s1 + $0xf4] sm:$0xf]
  %v112 = vld [vmem:[%s1 + $0xf8] sm:$0xf]
  %v113 = vld [vmem:[%s1 + $0xfc] sm:$0xf]
  %v130 = vunpack.c.l.b16 %v34
  %v131 = vunpack.c.h.b16 %v34
  %v132 = vunpack.c.l.b16 %v35
  %v133 = vunpack.c.h.b16 %v35
  %v134 = vunpack.c.l.b16 %v36
  %v135 = vunpack.c.h.b16 %v36
  %v136 = vunpack.c.l.b16 %v37
  %v137 = vunpack.c.h.b16 %v37
  %v138 = vunpack.c.l.b16 %v38
  %v139 = vunpack.c.h.b16 %v38
  %v140 = vunpack.c.l.b16 %v39
  %v141 = vunpack.c.h.b16 %v39
  %v142 = vunpack.c.l.b16 %v40
  %v143 = vunpack.c.h.b16 %v40
  %v144 = vunpack.c.l.b16 %v41
  %v145 = vunpack.c.h.b16 %v41
  %v146 = vunpack.c.l.b16 %v42
  %v147 = vunpack.c.h.b16 %v42
  %v148 = vunpack.c.l.b16 %v43
  %v149 = vunpack.c.h.b16 %v43
  %v150 = vunpack.c.l.b16 %v44
  %v151 = vunpack.c.h.b16 %v44
  %v152 = vunpack.c.l.b16 %v45
  %v153 = vunpack.c.h.b16 %v45
  %v154 = vunpack.c.l.b16 %v46
  %v155 = vunpack.c.h.b16 %v46
  %v156 = vunpack.c.l.b16 %v47
  %v157 = vunpack.c.h.b16 %v47
  %v158 = vunpack.c.l.b16 %v48
  %v159 = vunpack.c.h.b16 %v48
  %v160 = vunpack.c.l.b16 %v49
  %v161 = vunpack.c.h.b16 %v49
  %v162 = vpack.c.b16 %v134, %v130
  %v163 = vpack.c.b16 %v135, %v131
  %v164 = vpack.c.b16 %v136, %v132
  %v165 = vpack.c.b16 %v137, %v133
  %v166 = vpack.c.b16 %v142, %v138
  %v167 = vpack.c.b16 %v143, %v139
  %v168 = vpack.c.b16 %v144, %v140
  %v169 = vpack.c.b16 %v145, %v141
  %v170 = vpack.c.b16 %v150, %v146
  %v171 = vpack.c.b16 %v151, %v147
  %v172 = vpack.c.b16 %v152, %v148
  %v173 = vpack.c.b16 %v153, %v149
  %v174 = vpack.c.b16 %v158, %v154
  %v175 = vpack.c.b16 %v159, %v155
  %v176 = vpack.c.b16 %v160, %v156
  %v177 = vpack.c.b16 %v161, %v157
  %v258 = vunpack.c.l.b16 %v50
  %v259 = vunpack.c.l.b16 %v51
  %v260 = vunpack.c.l.b16 %v52
  %v261 = vunpack.c.l.b16 %v53
  %v262 = vunpack.c.l.b16 %v54
  %v263 = vunpack.c.l.b16 %v55
  %v264 = vunpack.c.l.b16 %v56
  %v265 = vunpack.c.l.b16 %v57
  %v266 = vunpack.c.l.b16 %v58
  %v267 = vunpack.c.l.b16 %v59
  %v268 = vunpack.c.l.b16 %v60
  %v269 = vunpack.c.l.b16 %v61
  %v270 = vunpack.c.l.b16 %v62
  %v271 = vunpack.c.l.b16 %v63
  %v272 = vunpack.c.l.b16 %v64
  %v273 = vunpack.c.l.b16 %v65
  %v274 = vunpack.c.l.b16 %v66
  %v275 = vunpack.c.l.b16 %v67
  %v276 = vunpack.c.l.b16 %v68
  %v277 = vunpack.c.l.b16 %v69
  %v278 = vunpack.c.l.b16 %v70
  %v279 = vunpack.c.l.b16 %v71
  %v280 = vunpack.c.l.b16 %v72
  %v281 = vunpack.c.l.b16 %v73
  %v282 = vunpack.c.l.b16 %v74
  %v283 = vunpack.c.l.b16 %v75
  %v284 = vunpack.c.l.b16 %v76
  %v285 = vunpack.c.l.b16 %v77
  %v286 = vunpack.c.l.b16 %v78
  %v287 = vunpack.c.l.b16 %v79
  %v288 = vunpack.c.l.b16 %v80
  %v289 = vunpack.c.l.b16 %v81
  %v290 = vunpack.c.l.b16 %v82
  %v291 = vunpack.c.l.b16 %v83
  %v292 = vunpack.c.l.b16 %v84
  %v293 = vunpack.c.l.b16 %v85
  %v294 = vunpack.c.l.b16 %v86
  %v295 = vunpack.c.l.b16 %v87
  %v296 = vunpack.c.l.b16 %v88
  %v297 = vunpack.c.l.b16 %v89
  %v298 = vunpack.c.l.b16 %v90
  %v299 = vunpack.c.l.b16 %v91
  %v300 = vunpack.c.l.b16 %v92
  %v301 = vunpack.c.l.b16 %v93
  %v302 = vunpack.c.l.b16 %v94
  %v303 = vunpack.c.l.b16 %v95
  %v304 = vunpack.c.l.b16 %v96
  %v305 = vunpack.c.l.b16 %v97
  %v306 = vunpack.c.l.b16 %v98
  %v307 = vunpack.c.l.b16 %v99
  %v308 = vunpack.c.l.b16 %v100
  %v309 = vunpack.c.l.b16 %v101
  %v310 = vunpack.c.l.b16 %v102
  %v311 = vunpack.c.l.b16 %v103
  %v312 = vunpack.c.l.b16 %v104
  %v313 = vunpack.c.l.b16 %v105
  %v314 = vunpack.c.l.b16 %v106
  %v315 = vunpack.c.l.b16 %v107
  %v316 = vunpack.c.l.b16 %v108
  %v317 = vunpack.c.l.b16 %v109
  %v318 = vunpack.c.l.b16 %v110
  %v319 = vunpack.c.l.b16 %v111
  %v320 = vunpack.c.l.b16 %v112
  %v321 = vunpack.c.l.b16 %v113
  %v322 = vpack.c.b16 %v259, %v258
  %v323 = vpack.c.b16 %v261, %v260
  %v324 = vpack.c.b16 %v263, %v262
  %v325 = vpack.c.b16 %v265, %v264
  %v326 = vpack.c.b16 %v267, %v266
  %v327 = vpack.c.b16 %v269, %v268
  %v328 = vpack.c.b16 %v271, %v270
  %v329 = vpack.c.b16 %v273, %v272
  %v330 = vpack.c.b16 %v275, %v274
  %v331 = vpack.c.b16 %v277, %v276
  %v332 = vpack.c.b16 %v279, %v278
  %v333 = vpack.c.b16 %v281, %v280
  %v334 = vpack.c.b16 %v283, %v282
  %v335 = vpack.c.b16 %v285, %v284
  %v336 = vpack.c.b16 %v287, %v286
  %v337 = vpack.c.b16 %v289, %v288
  %v338 = vpack.c.b16 %v291, %v290
  %v339 = vpack.c.b16 %v293, %v292
  %v340 = vpack.c.b16 %v295, %v294
  %v341 = vpack.c.b16 %v297, %v296
  %v342 = vpack.c.b16 %v299, %v298
  %v343 = vpack.c.b16 %v301, %v300
  %v344 = vpack.c.b16 %v303, %v302
  %v345 = vpack.c.b16 %v305, %v304
  %v346 = vpack.c.b16 %v307, %v306
  %v347 = vpack.c.b16 %v309, %v308
  %v348 = vpack.c.b16 %v311, %v310
  %v349 = vpack.c.b16 %v313, %v312
  %v350 = vpack.c.b16 %v315, %v314
  %v351 = vpack.c.b16 %v317, %v316
  %v352 = vpack.c.b16 %v319, %v318
  %v353 = vpack.c.b16 %v321, %v320
  %386 = vmatpush.bf16.msra.mxu0 %v329
  %387 = vmatpush.bf16.msra.mxu0 %v328
  %388 = vmatpush.bf16.msra.mxu0 %v327
  %389 = vmatpush.bf16.msra.mxu0 %v326
  %390 = vmatpush.bf16.msra.mxu0 %v325
  %391 = vmatpush.bf16.msra.mxu0 %v324
  %392 = vmatpush.bf16.msra.mxu0 %v323
  %393 = vmatpush.bf16.msra.mxu0 %v322
  %394 = vmatmul.bf16.gmra.mxu0 %v162
  %v395 = vpop.f32.mrf.mxu0
  %v396 = vadd.f32 0.0, %v395
  %v397 = vpop.f32.mrf.mxu0
  %v398 = vadd.f32 0.0, %v397
  %399 = vmatmul.bf16.gmra.mxu0 %v166
  %v400 = vpop.f32.mrf.mxu0
  %v401 = vadd.f32 0.0, %v400
  %v402 = vpop.f32.mrf.mxu0
  %v403 = vadd.f32 0.0, %v402
  %404 = vmatmul.bf16.gmra.mxu0 %v170
  %v405 = vpop.f32.mrf.mxu0
  %v406 = vadd.f32 0.0, %v405
  %v407 = vpop.f32.mrf.mxu0
  %v408 = vadd.f32 0.0, %v407
  %409 = vmatmul.bf16.gmra.mxu0 %v174
  %v410 = vpop.f32.mrf.mxu0
  %v411 = vadd.f32 0.0, %v410
  %v412 = vpop.f32.mrf.mxu0
  %v413 = vadd.f32 0.0, %v412
  %414 = vdwg.mxu0
  %415 = vmatpush.bf16.msra.mxu0 %v337
  %416 = vmatpush.bf16.msra.mxu0 %v336
  %417 = vmatpush.bf16.msra.mxu0 %v335
  %418 = vmatpush.bf16.msra.mxu0 %v334
  %419 = vmatpush.bf16.msra.mxu0 %v333
  %420 = vmatpush.bf16.msra.mxu0 %v332
  %421 = vmatpush.bf16.msra.mxu0 %v331
  %422 = vmatpush.bf16.msra.mxu0 %v330
  %423 = vmatmul.bf16.gmra.mxu0 %v163
  %v424 = vpop.f32.mrf.mxu0
  %v425 = vadd.f32 %v396, %v424
  %v426 = vpop.f32.mrf.mxu0
  %v427 = vadd.f32 %v398, %v426
  %428 = vmatmul.bf16.gmra.mxu0 %v167
  %v429 = vpop.f32.mrf.mxu0
  %v430 = vadd.f32 %v401, %v429
  %v431 = vpop.f32.mrf.mxu0
  %v432 = vadd.f32 %v403, %v431
  %433 = vmatmul.bf16.gmra.mxu0 %v171
  %v434 = vpop.f32.mrf.mxu0
  %v435 = vadd.f32 %v406, %v434
  %v436 = vpop.f32.mrf.mxu0
  %v437 = vadd.f32 %v408, %v436
  %438 = vmatmul.bf16.gmra.mxu0 %v175
  %v439 = vpop.f32.mrf.mxu0
  %v440 = vadd.f32 %v411, %v439
  %v441 = vpop.f32.mrf.mxu0
  %v442 = vadd.f32 %v413, %v441
  %443 = vdwg.mxu0
  %444 = vmatpush.bf16.msra.mxu0 %v345
  %445 = vmatpush.bf16.msra.mxu0 %v344
  %446 = vmatpush.bf16.msra.mxu0 %v343
  %447 = vmatpush.bf16.msra.mxu0 %v342
  %448 = vmatpush.bf16.msra.mxu0 %v341
  %449 = vmatpush.bf16.msra.mxu0 %v340
  %450 = vmatpush.bf16.msra.mxu0 %v339
  %451 = vmatpush.bf16.msra.mxu0 %v338
  %452 = vmatmul.bf16.gmra.mxu0 %v164
  %v453 = vpop.f32.mrf.mxu0
  %v454 = vadd.f32 %v425, %v453
  %v455 = vpop.f32.mrf.mxu0
  %v456 = vadd.f32 %v427, %v455
  %457 = vmatmul.bf16.gmra.mxu0 %v168
  %v458 = vpop.f32.mrf.mxu0
  %v459 = vadd.f32 %v430, %v458
  %v460 = vpop.f32.mrf.mxu0
  %v461 = vadd.f32 %v432, %v460
  %462 = vmatmul.bf16.gmra.mxu0 %v172
  %v463 = vpop.f32.mrf.mxu0
  %v464 = vadd.f32 %v435, %v463
  %v465 = vpop.f32.mrf.mxu0
  %v466 = vadd.f32 %v437, %v465
  %467 = vmatmul.bf16.gmra.mxu0 %v176
  %v468 = vpop.f32.mrf.mxu0
  %v469 = vadd.f32 %v440, %v468
  %v470 = vpop.f32.mrf.mxu0
  %v471 = vadd.f32 %v442, %v470
  %472 = vdwg.mxu0
  %473 = vmatpush.bf16.msra.mxu0 %v353
  %474 = vmatpush.bf16.msra.mxu0 %v352
  %475 = vmatpush.bf16.msra.mxu0 %v351
  %476 = vmatpush.bf16.msra.mxu0 %v350
  %477 = vmatpush.bf16.msra.mxu0 %v349
  %478 = vmatpush.bf16.msra.mxu0 %v348
  %479 = vmatpush.bf16.msra.mxu0 %v347
  %480 = vmatpush.bf16.msra.mxu0 %v346
  %481 = vmatmul.bf16.gmra.mxu0 %v165
  %v482 = vpop.f32.mrf.mxu0
  %v483 = vadd.f32 %v454, %v482
  %v484 = vpop.f32.mrf.mxu0
  %v485 = vadd.f32 %v456, %v484
  %486 = vmatmul.bf16.gmra.mxu0 %v169
  %v487 = vpop.f32.mrf.mxu0
  %v488 = vadd.f32 %v459, %v487
  %v489 = vpop.f32.mrf.mxu0
  %v490 = vadd.f32 %v461, %v489
  %491 = vmatmul.bf16.gmra.mxu0 %v173
  %v492 = vpop.f32.mrf.mxu0
  %v493 = vadd.f32 %v464, %v492
  %v494 = vpop.f32.mrf.mxu0
  %v495 = vadd.f32 %v466, %v494
  %496 = vmatmul.bf16.gmra.mxu0 %v177
  %v497 = vpop.f32.mrf.mxu0
  %v498 = vadd.f32 %v469, %v497
  %v499 = vpop.f32.mrf.mxu0
  %v500 = vadd.f32 %v471, %v499
  %501 = vdwg.mxu0
  %v502 = vadd.f32 %v26, %v483
  %v503 = vadd.f32 %v27, %v485
  %v504 = vadd.f32 %v28, %v488
  %v505 = vadd.f32 %v29, %v490
  %v506 = vadd.f32 %v30, %v493
  %v507 = vadd.f32 %v31, %v495
  %v508 = vadd.f32 %v32, %v498
  %v509 = vadd.f32 %v33, %v500
  %510 = vst [vmem:[#allocation2] sm:$0xff] %v502
  %511 = vst [vmem:[#allocation2 + $0x8] sm:$0xff] %v503
  %512 = vst [vmem:[#allocation2 + $0x10] sm:$0xff] %v504
  %513 = vst [vmem:[#allocation2 + $0x18] sm:$0xff] %v505
  %514 = vst [vmem:[#allocation2 + $0x20] sm:$0xff] %v506
  %515 = vst [vmem:[#allocation2 + $0x28] sm:$0xff] %v507
  %516 = vst [vmem:[#allocation2 + $0x30] sm:$0xff] %v508
  %517 = vst [vmem:[#allocation2 + $0x38] sm:$0xff] %v509
  // Predicated region
  $region18: #{res_classifier_forward.5} parent=0 // pred_check
    %p518 = pneg %p14
  $region19: #{res_classifier_forward.5} parent=0 // pred_check_branch
    %520 = sbr.rel (%p518) target = $region21
  $region20: #{res_classifier_forward.5} parent=0 // pred_region
    %v521 = vld [vmem:[#allocation2] sm:$0xff]
    %v522 = vld [vmem:[#allocation2 + $0x8] sm:$0xff]
    %v523 = vld [vmem:[#allocation2 + $0x10] sm:$0xff]
    %v524 = vld [vmem:[#allocation2 + $0x18] sm:$0xff]
    %v525 = vld [vmem:[#allocation2 + $0x20] sm:$0xff]
    %v526 = vld [vmem:[#allocation2 + $0x28] sm:$0xff]
    %v527 = vld [vmem:[#allocation2 + $0x30] sm:$0xff]
    %v528 = vld [vmem:[#allocation2 + $0x38] sm:$0xff]
    %v529 = vld [vmem:[%s2] sm:$0x1]
    %v531 = vperm.slane %v529, 0
    %v533 = vadd.f32 %v521, %v531
    %v534 = vadd.f32 %v522, %v531
    %v535 = vadd.f32 %v523, %v531
    %v536 = vadd.f32 %v524, %v531
    %v537 = vadd.f32 %v525, %v531
    %v538 = vadd.f32 %v526, %v531
    %v539 = vadd.f32 %v527, %v531
    %v540 = vadd.f32 %v528, %v531
    %541 = vst [vmem:[%s3] sm:$0xff] %v533
    %542 = vst [vmem:[%s3 + $0x8] sm:$0xff] %v534
    %543 = vst [vmem:[%s3 + $0x10] sm:$0xff] %v535
    %544 = vst [vmem:[%s3 + $0x18] sm:$0xff] %v536
    %545 = vst [vmem:[%s3 + $0x20] sm:$0xff] %v537
    %546 = vst [vmem:[%s3 + $0x28] sm:$0xff] %v538
    %547 = vst [vmem:[%s3 + $0x30] sm:$0xff] %v539
    %548 = vst [vmem:[%s3 + $0x38] sm:$0xff] %v540
  $region21: #{res_classifier_forward.5} parent=0 // pred_fallthru
    _
  // Predicated region
  $region22: #{res_classifier_forward.5} parent=0 // pred_check
    _
  $region23: #{res_classifier_forward.5} parent=0 // pred_check_branch
    %550 = sbr.rel (0) target = $region25
  $region24: #{res_classifier_forward.5} parent=0 // pred_region
    _
  $region25: #{res_classifier_forward.5} parent=0 // pred_fallthru
    _
  // Predicated region
  $region26: #{res_classifier_forward.5} parent=0 // pred_check
    _
  $region27: #{res_classifier_forward.5} parent=0 // pred_check_branch
    %552 = sbr.rel (0) target = $region29
  $region28: #{res_classifier_forward.5} parent=0 // pred_region
    _
  $region29: #{res_classifier_forward.5} parent=0 // pred_fallthru
    _

// kernel: res_classifier_forward.4
$region0: #{res_classifier_forward.4}
  #allocation0 [shape = 'u32[]', space=smem, size = 0x4, offset = 0x4, fixed_abs, tag = 'smem constant byte address 0x4 - core index']
  #allocation1 [shape = 'u32[72,128]{1,0:T(1,128)}', space=vmem, size = 0x9000, scoped, tag = 'internal scratch']
  #allocation2 [shape = 'f32[64,256]{1,0:T(8,128)}', space=vmem, size = 0x10000, scoped, tag = 'scratch operand']
  %s0 = inlined_call_operand.vmem [shape: bf16[64,512], index: 0, kind: input, shape index: {}]
  %s1 = inlined_call_operand.vmem [shape: bf16[512,512], index: 1, kind: input, shape index: {}]
  %s2 = inlined_call_operand.vmem [shape: f32[1,512], index: 2, kind: input, shape index: {}]
  %s3 = inlined_call_operand.vmem [shape: f32[1,512], index: 3, kind: input, shape index: {}]
  %s4 = inlined_call_operand.vmem [shape: f32[64,512], index: 4, kind: output, shape index: {}]
  %s5 = sld [smem:[#allocation0]]
  $region114: #{res_classifier_forward.4} parent=0
    _
  %s7 = ssub.s32 1, %s5
  %s8 = scalar_select 0, %s7, %s5
  $region1: #{res_classifier_forward.4} parent=0
    #allocation3 [shape = 'u8[524288]{0}', space=vmem, size = 0x80000, scoped, tag = 'input window, operand 1']
    #allocation4 [shape = 'u8[131072]{0}', space=vmem, size = 0x20000, scoped, tag = 'output window, operand 0']
    loop: start=0, step=1, limit=4
    $region2: #{res_classifier_forward.4} parent=1 // loop_pre_header
      _
    $region3: #{res_classifier_forward.4} parent=1 // loop_header
      %s10 = sphi 0, %s14
      %p11 = scmp.ge.s32.totalorder %s10, 4
      %s17 = sphi 0, %s36
      %s18 = sphi 0, %s32
      %s19 = sphi 0, %s28
      %s20 = sphi 0, %s17
      %s21 = sphi 0, %s18
      %s22 = sphi 0, %s19
      %s23 = sphi 0, %s20
      %s24 = sphi 0, %s21
      %s25 = sphi 0, %s22
      %s41 = sphi 0, %s43
      %s44 = sphi 0, %s41
      %s45 = sphi 0, %s44
      %s61 = sphi 0, %s45
      %s69 = sphi 0, %s71
      %s72 = sphi 0, %s69
      %s73 = sphi 0, %s72
      %s89 = sphi 0, %s73
      %s95 = sphi 0, %s97
      %s98 = sphi 0, %s95
      %s99 = sphi 0, %s98
      %s115 = sphi 0, %s99
      %s121 = sphi 0, %s123
      %s124 = sphi 0, %s121
      %s125 = sphi 0, %s124
      %s141 = sphi 0, %s125
      %s149 = sphi 0, %s151
      %s152 = sphi 0, %s149
      %s153 = sphi 0, %s152
      %s169 = sphi 0, %s153
    $region4: #{res_classifier_forward.4} parent=1 // loop_header_branch
      %13 = sbr.rel (%p11) target = $region8
    $region5: #{res_classifier_forward.4} parent=1 // loop_body
      %s15 = ssub.s32 %s10, 1
      %s16 = ssub.s32 %s10, 2
      %s26 = sadd.s32 1, %s19
      %p27 = scmp.ge.s32.totalorder %s26, 1
      %s28 = scalar_select %p27, 0, %s26
      %s29 = sadd.s32 1, %s18
      %s30 = scalar_select %p27, %s29, %s18
      %p31 = scmp.ge.s32.totalorder %s30, 2
      %s32 = scalar_select %p31, 0, %s30
      %s33 = sadd.s32 1, %s17
      %s34 = scalar_select %p31, %s33, %s17
      %p35 = scmp.ge.s32.totalorder %s34, 1
      %s36 = scalar_select %p35, 0, %s34
      %s37 = ssub.s32 %s17, %s36
      %s38 = ssub.s32 %s19, %s28
      %s39 = sor.u32 %s37, %s38
      %p40 = scmp.eq.s32.totalorder %s39, 0
      %s42 = sadd.s32 %s41, 1
      %s43 = scalar_select %p40, %s41, %s42
      %p46 = pneg %p40
      %p47 = scmp.eq.s32.totalorder %s10, 1
      %p48 = por %p46, %p47
      %p49 = scmp.ne.s32.totalorder %s41, %s44
      %p50 = scmp.eq.s32.totalorder %s10, 0
      %p51 = por %p49, %p50
      %p52 = scmp.ne.s32.totalorder %s41, %s44
      %p53 = scmp.eq.s32.totalorder %s15, 1
      %p54 = por %p52, %p53
      %p55 = scmp.ne.s32.totalorder %s44, %s45
      %p56 = scmp.eq.s32.totalorder %s15, 0
      %p57 = por %p55, %p56
      %p58 = scmp.ne.s32.totalorder %s44, %s45
      %p59 = scmp.eq.s32.totalorder %s16, 1
      %p60 = por %p58, %p59
      %p62 = scmp.ne.s32.totalorder %s45, %s61
      %p63 = scmp.eq.s32.totalorder %s16, 0
      %p64 = por %p62, %p63
      %s65 = ssub.s32 %s19, %s28
      %s66 = ssub.s32 %s18, %s32
      %s67 = sor.u32 %s65, %s66
      %p68 = scmp.eq.s32.totalorder %s67, 0
      %s70 = sadd.s32 %s69, 1
      %s71 = scalar_select %p68, %s69, %s70
      %p74 = pneg %p68
      %p75 = scmp.eq.s32.totalorder %s10, 1
      %p76 = por %p74, %p75
      %p77 = scmp.ne.s32.totalorder %s69, %s72
      %p78 = scmp.eq.s32.totalorder %s10, 0
      %p79 = por %p77, %p78
      %p80 = scmp.ne.s32.totalorder %s69, %s72
      %p81 = scmp.eq.s32.totalorder %s15, 1
      %p82 = por %p80, %p81
      %p83 = scmp.ne.s32.totalorder %s72, %s73
      %p84 = scmp.eq.s32.totalorder %s15, 0
      %p85 = por %p83, %p84
      %p86 = scmp.ne.s32.totalorder %s72, %s73
      %p87 = scmp.eq.s32.totalorder %s16, 1
      %p88 = por %p86, %p87
      %p90 = scmp.ne.s32.totalorder %s73, %s89
      %p91 = scmp.eq.s32.totalorder %s16, 0
      %p92 = por %p90, %p91
      %s93 = ssub.s32 %s18, %s32
      %p94 = scmp.eq.s32.totalorder %s93, 0
      %s96 = sadd.s32 %s95, 1
      %s97 = scalar_select %p94, %s95, %s96
      %p100 = pneg %p94
      %p101 = scmp.eq.s32.totalorder %s10, 1
      %p102 = por %p100, %p101
      %p103 = scmp.ne.s32.totalorder %s95, %s98
      %p104 = scmp.eq.s32.totalorder %s10, 0
      %p105 = por %p103, %p104
      %p106 = scmp.ne.s32.totalorder %s95, %s98
      %p107 = scmp.eq.s32.totalorder %s15, 1
      %p108 = por %p106, %p107
      %p109 = scmp.ne.s32.totalorder %s98, %s99
      %p110 = scmp.eq.s32.totalorder %s15, 0
      %p111 = por %p109, %p110
      %p112 = scmp.ne.s32.totalorder %s98, %s99
      %p113 = scmp.eq.s32.totalorder %s16, 1
      %p114 = por %p112, %p113
      %p116 = scmp.ne.s32.totalorder %s99, %s115
      %p117 = scmp.eq.s32.totalorder %s16, 0
      %p118 = por %p116, %p117
      %s119 = ssub.s32 %s18, %s32
      %p120 = scmp.eq.s32.totalorder %s119, 0
      %s122 = sadd.s32 %s121, 1
      %s123 = scalar_select %p120, %s121, %s122
      %p126 = pneg %p120
      %p127 = scmp.eq.s32.totalorder %s10, 1
      %p128 = por %p126, %p127
      %p129 = scmp.ne.s32.totalorder %s121, %s124
      %p130 = scmp.eq.s32.totalorder %s10, 0
      %p131 = por %p129, %p130
      %p132 = scmp.ne.s32.totalorder %s121, %s124
      %p133 = scmp.eq.s32.totalorder %s15, 1
      %p134 = por %p132, %p133
      %p135 = scmp.ne.s32.totalorder %s124, %s125
      %p136 = scmp.eq.s32.totalorder %s15, 0
      %p137 = por %p135, %p136
      %p138 = scmp.ne.s32.totalorder %s124, %s125
      %p139 = scmp.eq.s32.totalorder %s16, 1
      %p140 = por %p138, %p139
      %p142 = scmp.ne.s32.totalorder %s125, %s141
      %p143 = scmp.eq.s32.totalorder %s16, 0
      %p144 = por %p142, %p143
      %s145 = ssub.s32 %s17, %s36
      %s146 = ssub.s32 %s18, %s32
      %s147 = sor.u32 %s145, %s146
      %p148 = scmp.eq.s32.totalorder %s147, 0
      %s150 = sadd.s32 %s149, 1
      %s151 = scalar_select %p148, %s149, %s150
      %p154 = pneg %p148
      %p155 = scmp.eq.s32.totalorder %s10, 1
      %p156 = por %p154, %p155
      %p157 = scmp.ne.s32.totalorder %s149, %s152
      %p158 = scmp.eq.s32.totalorder %s10, 0
      %p159 = por %p157, %p158
      %p160 = scmp.ne.s32.totalorder %s149, %s152
      %p161 = scmp.eq.s32.totalorder %s15, 1
      %p162 = por %p160, %p161
      %p163 = scmp.ne.s32.totalorder %s152, %s153
      %p164 = scmp.eq.s32.totalorder %s15, 0
      %p165 = por %p163, %p164
      %p166 = scmp.ne.s32.totalorder %s152, %s153
      %p167 = scmp.eq.s32.totalorder %s16, 1
      %p168 = por %p166, %p167
      %p170 = scmp.ne.s32.totalorder %s153, %s169
      %p171 = scmp.eq.s32.totalorder %s16, 0
      %p172 = por %p170, %p171
      %p173 = scmp.le.s32.totalorder 1, %s10
      %p174 = scmp.lt.s32.totalorder %s10, 3
      %p175 = pnand %p173, %p174
      %p176 = pneg %p175
      // Predicated region
      $region9: #{res_classifier_forward.4} parent=5 // pred_check
        _
      $region10: #{res_classifier_forward.4} parent=5 // pred_check_branch
        %178 = sbr.rel (%p175) target = $region12
      $region11: #{res_classifier_forward.4} parent=5 // pred_region
        %s179 = ssub.s32 %s10, 1
        // Predicated region
        $region13: #{res_classifier_forward.4} parent=11 // pred_check
          %p180 = pneg %p57
        $region14: #{res_classifier_forward.4} parent=11 // pred_check_branch
          %182 = sbr.rel (%p180) target = $region16
        $region15: #{res_classifier_forward.4} parent=11 // pred_region
          %s183 = smul.u32 8, %s20
          %s184 = smul.u32 4, %s22
          %p185 = scmp.lt.s32.totalorder %s183, 7
          %s186 = scalar_select %p185, %s183, 7
          %p187 = scmp.lt.s32.totalorder %s184, 3
          %s188 = scalar_select %p187, %s184, 3
          %s189 = smul.addr %s186, 4
          %s190 = sadd.s32 %s188, %s189
          %s191 = smul.addr %s190, 4
          %s192 = scalar_lea.vmem %s0, %s191
          %s193 = smul.u32 8, %s20
          %s194 = smul.u32 4, %s22
        $region16: #{res_classifier_forward.4} parent=11 // pred_fallthru
          _
      $region12: #{res_classifier_forward.4} parent=5 // pred_fallthru
        _
      %p195 = scmp.lt.s32.totalorder %s10, 2
      // Predicated region
      $region17: #{res_classifier_forward.4} parent=5 // pred_check
        %p196 = pneg %p195
      $region18: #{res_classifier_forward.4} parent=5 // pred_check_branch
        %198 = sbr.rel (%p196) target = $region20
      $region19: #{res_classifier_forward.4} parent=5 // pred_region
        // Predicated region
        $region21: #{res_classifier_forward.4} parent=19 // pred_check
          %p199 = pneg %p79
        $region22: #{res_classifier_forward.4} parent=19 // pred_check_branch
          %201 = sbr.rel (%p199) target = $region24
        $region23: #{res_classifier_forward.4} parent=19 // pred_region
          %s202 = sand.u32 %s69, 1
          %s203 = sand.u32 %s69, 1
          %s204 = smul.addr %s203, 512
          %s205 = scalar_lea.vmem [#allocation3], %s204
          %s206 = smul.u32 64, %s19
          %s207 = smul.u32 2, %s18
          %s208 = smul.addr %s206, 4
          %s209 = sadd.s32 %s207, %s208
          %s210 = smul.addr %s209, 4
          %s211 = scalar_lea.vmem %s1, %s210
          // Predicated region
          $region25: #{res_classifier_forward.4} parent=23 // pred_check
            _
          $region26: #{res_classifier_forward.4} parent=23 // pred_check_branch
            %213 = sbr.rel (0) target = $region28
          $region27: #{res_classifier_forward.4} parent=23 // pred_region
            // Predicated region
            $region29: #{res_classifier_forward.4} parent=27 // pred_check
              _
            $region30: #{res_classifier_forward.4} parent=27 // pred_check_branch
              %215 = sbr.rel (0) target = $region32
            $region31: #{res_classifier_forward.4} parent=27 // pred_region
              // Predicated region
              $region44: #{res_classifier_forward.4} parent=31 // pred_check
                _
              $region45: #{res_classifier_forward.4} parent=31 // pred_check_branch
                %357 = sbr.rel (0) target = $region47
              $region46: #{res_classifier_forward.4} parent=31 // pred_region
                loop: start=0, step=1, limit=1
                $region48: #{res_classifier_forward.4} parent=46 // loop_pre_header
                  _
                $region49: #{res_classifier_forward.4} parent=46 // loop_header
                  %s359 = sphi 0, %s363
                  %p360 = scmp.ge.s32.totalorder %s359, 1
                  %s364 = sphi %s211, %s211
                  %s365 = sphi %s205, %s205
                $region50: #{res_classifier_forward.4} parent=46 // loop_header_branch
                  %362 = sbr.rel (%p360) target = $region54
                $region51: #{res_classifier_forward.4} parent=46 // loop_body
                  %v366 = vld [vmem:[%s364] sm:$0xff]
                  %367 = vst [vmem:[%s365] sm:$0xff] %v366
                  %v368 = vld [vmem:[%s364 + $0x10] sm:$0xff]
                  %369 = vst [vmem:[%s365 + $0x8] sm:$0xff] %v368
                  %v370 = vld [vmem:[%s364 + $0x20] sm:$0xff]
                  %371 = vst [vmem:[%s365 + $0x10] sm:$0xff] %v370
                  %v372 = vld [vmem:[%s364 + $0x30] sm:$0xff]
                  %373 = vst [vmem:[%s365 + $0x18] sm:$0xff] %v372
                  %v374 = vld [vmem:[%s364 + $0x40] sm:$0xff]
                  %375 = vst [vmem:[%s365 + $0x20] sm:$0xff] %v374
                  %v376 = vld [vmem:[%s364 + $0x50] sm:$0xff]
                  %377 = vst [vmem:[%s365 + $0x28] sm:$0xff] %v376
                  %v378 = vld [vmem:[%s364 + $0x60] sm:$0xff]
                  %379 = vst [vmem:[%s365 + $0x30] sm:$0xff] %v378
                  %v380 = vld [vmem:[%s364 + $0x70] sm:$0xff]
                  %381 = vst [vmem:[%s365 + $0x38] sm:$0xff] %v380
                  %v382 = vld [vmem:[%s364 + $0x80] sm:$0xff]
                  %383 = vst [vmem:[%s365 + $0x40] sm:$0xff] %v382
                  %v384 = vld [vmem:[%s364 + $0x90] sm:$0xff]
                  %385 = vst [vmem:[%s365 + $0x48] sm:$0xff] %v384
                  %v386 = vld [vmem:[%s364 + $0xa0] sm:$0xff]
                  %387 = vst [vmem:[%s365 + $0x50] sm:$0xff] %v386
                  %v388 = vld [vmem:[%s364 + $0xb0] sm:$0xff]
                  %389 = vst [vmem:[%s365 + $0x58] sm:$0xff] %v388
                  %v390 = vld [vmem:[%s364 + $0xc0] sm:$0xff]
                  %391 = vst [vmem:[%s365 + $0x60] sm:$0xff] %v390
                  %v392 = vld [vmem:[%s364 + $0xd0] sm:$0xff]
                  %393 = vst [vmem:[%s365 + $0x68] sm:$0xff] %v392
                  %v394 = vld [vmem:[%s364 + $0xe0] sm:$0xff]
                  %395 = vst [vmem:[%s365 + $0x70] sm:$0xff] %v394
                  %v396 = vld [vmem:[%s364 + $0xf0] sm:$0xff]
                  %397 = vst [vmem:[%s365 + $0x78] sm:$0xff] %v396
                  %v398 = vld [vmem:[%s364 + $0x100] sm:$0xff]
                  %399 = vst [vmem:[%s365 + $0x80] sm:$0xff] %v398
                  %v400 = vld [vmem:[%s364 + $0x110] sm:$0xff]
                  %401 = vst [vmem:[%s365 + $0x88] sm:$0xff] %v400
                  %v402 = vld [vmem:[%s364 + $0x120] sm:$0xff]
                  %403 = vst [vmem:[%s365 + $0x90] sm:$0xff] %v402
                  %v404 = vld [vmem:[%s364 + $0x130] sm:$0xff]
                  %405 = vst [vmem:[%s365 + $0x98] sm:$0xff] %v404
                  %v406 = vld [vmem:[%s364 + $0x140] sm:$0xff]
                  %407 = vst [vmem:[%s365 + $0xa0] sm:$0xff] %v406
                  %v408 = vld [vmem:[%s364 + $0x150] sm:$0xff]
                  %409 = vst [vmem:[%s365 + $0xa8] sm:$0xff] %v408
                  %v410 = vld [vmem:[%s364 + $0x160] sm:$0xff]
                  %411 = vst [vmem:[%s365 + $0xb0] sm:$0xff] %v410
                  %v412 = vld [vmem:[%s364 + $0x170] sm:$0xff]
                  %413 = vst [vmem:[%s365 + $0xb8] sm:$0xff] %v412
                  %v414 = vld [vmem:[%s364 + $0x180] sm:$0xff]
                  %415 = vst [vmem:[%s365 + $0xc0] sm:$0xff] %v414
                  %v416 = vld [vmem:[%s364 + $0x190] sm:$0xff]
                  %417 = vst [vmem:[%s365 + $0xc8] sm:$0xff] %v416
                  %v418 = vld [vmem:[%s364 + $0x1a0] sm:$0xff]
                  %419 = vst [vmem:[%s365 + $0xd0] sm:$0xff] %v418
                  %v420 = vld [vmem:[%s364 + $0x1b0] sm:$0xff]
                  %421 = vst [vmem:[%s365 + $0xd8] sm:$0xff] %v420
                  %v422 = vld [vmem:[%s364 + $0x1c0] sm:$0xff]
                  %423 = vst [vmem:[%s365 + $0xe0] sm:$0xff] %v422
                  %v424 = vld [vmem:[%s364 + $0x1d0] sm:$0xff]
                  %425 = vst [vmem:[%s365 + $0xe8] sm:$0xff] %v424
                  %v426 = vld [vmem:[%s364 + $0x1e0] sm:$0xff]
                  %427 = vst [vmem:[%s365 + $0xf0] sm:$0xff] %v426
                  %v428 = vld [vmem:[%s364 + $0x1f0] sm:$0xff]
                  %429 = vst [vmem:[%s365 + $0xf8] sm:$0xff] %v428
                  %v430 = vld [vmem:[%s364 + $0x200] sm:$0xff]
                  %431 = vst [vmem:[%s365 + $0x100] sm:$0xff] %v430
                  %v432 = vld [vmem:[%s364 + $0x210] sm:$0xff]
                  %433 = vst [vmem:[%s365 + $0x108] sm:$0xff] %v432
                  %v434 = vld [vmem:[%s364 + $0x220] sm:$0xff]
                  %435 = vst [vmem:[%s365 + $0x110] sm:$0xff] %v434
                  %v436 = vld [vmem:[%s364 + $0x230] sm:$0xff]
                  %437 = vst [vmem:[%s365 + $0x118] sm:$0xff] %v436
                  %v438 = vld [vmem:[%s364 + $0x240] sm:$0xff]
                  %439 = vst [vmem:[%s365 + $0x120] sm:$0xff] %v438
                  %v440 = vld [vmem:[%s364 + $0x250] sm:$0xff]
                  %441 = vst [vmem:[%s365 + $0x128] sm:$0xff] %v440
                  %v442 = vld [vmem:[%s364 + $0x260] sm:$0xff]
                  %443 = vst [vmem:[%s365 + $0x130] sm:$0xff] %v442
                  %v444 = vld [vmem:[%s364 + $0x270] sm:$0xff]
                  %445 = vst [vmem:[%s365 + $0x138] sm:$0xff] %v444
                  %v446 = vld [vmem:[%s364 + $0x280] sm:$0xff]
                  %447 = vst [vmem:[%s365 + $0x140] sm:$0xff] %v446
                  %v448 = vld [vmem:[%s364 + $0x290] sm:$0xff]
                  %449 = vst [vmem:[%s365 + $0x148] sm:$0xff] %v448
                  %v450 = vld [vmem:[%s364 + $0x2a0] sm:$0xff]
                  %451 = vst [vmem:[%s365 + $0x150] sm:$0xff] %v450
                  %v452 = vld [vmem:[%s364 + $0x2b0] sm:$0xff]
                  %453 = vst [vmem:[%s365 + $0x158] sm:$0xff] %v452
                  %v454 = vld [vmem:[%s364 + $0x2c0] sm:$0xff]
                  %455 = vst [vmem:[%s365 + $0x160] sm:$0xff] %v454
                  %v456 = vld [vmem:[%s364 + $0x2d0] sm:$0xff]
                  %457 = vst [vmem:[%s365 + $0x168] sm:$0xff] %v456
                  %v458 = vld [vmem:[%s364 + $0x2e0] sm:$0xff]
                  %459 = vst [vmem:[%s365 + $0x170] sm:$0xff] %v458
                  %v460 = vld [vmem:[%s364 + $0x2f0] sm:$0xff]
                  %461 = vst [vmem:[%s365 + $0x178] sm:$0xff] %v460
                  %v462 = vld [vmem:[%s364 + $0x300] sm:$0xff]
                  %463 = vst [vmem:[%s365 + $0x180] sm:$0xff] %v462
                  %v464 = vld [vmem:[%s364 + $0x310] sm:$0xff]
                  %465 = vst [vmem:[%s365 + $0x188] sm:$0xff] %v464
                  %v466 = vld [vmem:[%s364 + $0x320] sm:$0xff]
                  %467 = vst [vmem:[%s365 + $0x190] sm:$0xff] %v466
                  %v468 = vld [vmem:[%s364 + $0x330] sm:$0xff]
                  %469 = vst [vmem:[%s365 + $0x198] sm:$0xff] %v468
                  %v470 = vld [vmem:[%s364 + $0x340] sm:$0xff]
                  %471 = vst [vmem:[%s365 + $0x1a0] sm:$0xff] %v470
                  %v472 = vld [vmem:[%s364 + $0x350] sm:$0xff]
                  %473 = vst [vmem:[%s365 + $0x1a8] sm:$0xff] %v472
                  %v474 = vld [vmem:[%s364 + $0x360] sm:$0xff]
                  %475 = vst [vmem:[%s365 + $0x1b0] sm:$0xff] %v474
                  %v476 = vld [vmem:[%s364 + $0x370] sm:$0xff]
                  %477 = vst [vmem:[%s365 + $0x1b8] sm:$0xff] %v476
                  %v478 = vld [vmem:[%s364 + $0x380] sm:$0xff]
                  %479 = vst [vmem:[%s365 + $0x1c0] sm:$0xff] %v478
                  %v480 = vld [vmem:[%s364 + $0x390] sm:$0xff]
                  %481 = vst [vmem:[%s365 + $0x1c8] sm:$0xff] %v480
                  %v482 = vld [vmem:[%s364 + $0x3a0] sm:$0xff]
                  %483 = vst [vmem:[%s365 + $0x1d0] sm:$0xff] %v482
                  %v484 = vld [vmem:[%s364 + $0x3b0] sm:$0xff]
                  %485 = vst [vmem:[%s365 + $0x1d8] sm:$0xff] %v484
                  %v486 = vld [vmem:[%s364 + $0x3c0] sm:$0xff]
                  %487 = vst [vmem:[%s365 + $0x1e0] sm:$0xff] %v486
                  %v488 = vld [vmem:[%s364 + $0x3d0] sm:$0xff]
                  %489 = vst [vmem:[%s365 + $0x1e8] sm:$0xff] %v488
                  %v490 = vld [vmem:[%s364 + $0x3e0] sm:$0xff]
                  %491 = vst [vmem:[%s365 + $0x1f0] sm:$0xff] %v490
                  %v492 = vld [vmem:[%s364 + $0x3f0] sm:$0xff]
                  %493 = vst [vmem:[%s365 + $0x1f8] sm:$0xff] %v492
                $region52: #{res_classifier_forward.4} parent=46 // loop_footer
                  %s363 = sadd.s32 1, %s359
                $region53: #{res_classifier_forward.4} parent=46 // loop_footer_branch
                  %358 = sbr.rel target = $region49
                $region54: #{res_classifier_forward.4} parent=46 // loop_exit
                  _
              $region47: #{res_classifier_forward.4} parent=31 // pred_fallthru
                _
              // Predicated region
              $region55: #{res_classifier_forward.4} parent=31 // pred_check
                _
              $region56: #{res_classifier_forward.4} parent=31 // pred_check_branch
                %495 = sbr.rel target = $region58
              $region57: #{res_classifier_forward.4} parent=31 // pred_region
                _
              $region58: #{res_classifier_forward.4} parent=31 // pred_fallthru
                _
            $region32: #{res_classifier_forward.4} parent=27 // pred_fallthru
              _
            // Predicated region
            $region33: #{res_classifier_forward.4} parent=27 // pred_check
              _
            $region34: #{res_classifier_forward.4} parent=27 // pred_check_branch
              %217 = sbr.rel target = $region36
            $region35: #{res_classifier_forward.4} parent=27 // pred_region
              %s219 = ssub.s32 256, 1
              loop: start=0, step=1, limit=1
              $region37: #{res_classifier_forward.4} parent=35 // loop_pre_header
                _
              $region38: #{res_classifier_forward.4} parent=35 // loop_header
                %s221 = sphi 0, %s225
                %p222 = scmp.ge.s32.totalorder %s221, 1
                %s226 = sphi %s211, %s211
                %s227 = sphi %s205, %s205
              $region39: #{res_classifier_forward.4} parent=35 // loop_header_branch
                %224 = sbr.rel (%p222) target = $region43
              $region40: #{res_classifier_forward.4} parent=35 // loop_body
                %v228 = vld [vmem:[%s226] sm:%s219]
                %229 = vst [vmem:[%s227] sm:%s219] %v228
                %v230 = vld [vmem:[%s226 + $0x10] sm:%s219]
                %231 = vst [vmem:[%s227 + $0x8] sm:%s219] %v230
                %v232 = vld [vmem:[%s226 + $0x20] sm:%s219]
                %233 = vst [vmem:[%s227 + $0x10] sm:%s219] %v232
                %v234 = vld [vmem:[%s226 + $0x30] sm:%s219]
                %235 = vst [vmem:[%s227 + $0x18] sm:%s219] %v234
                %v236 = vld [vmem:[%s226 + $0x40] sm:%s219]
                %237 = vst [vmem:[%s227 + $0x20] sm:%s219] %v236
                %v238 = vld [vmem:[%s226 + $0x50] sm:%s219]
                %239 = vst [vmem:[%s227 + $0x28] sm:%s219] %v238
                %v240 = vld [vmem:[%s226 + $0x60] sm:%s219]
                %241 = vst [vmem:[%s227 + $0x30] sm:%s219] %v240
                %v242 = vld [vmem:[%s226 + $0x70] sm:%s219]
                %243 = vst [vmem:[%s227 + $0x38] sm:%s219] %v242
                %v244 = vld [vmem:[%s226 + $0x80] sm:%s219]
                %245 = vst [vmem:[%s227 + $0x40] sm:%s219] %v244
                %v246 = vld [vmem:[%s226 + $0x90] sm:%s219]
                %247 = vst [vmem:[%s227 + $0x48] sm:%s219] %v246
                %v248 = vld [vmem:[%s226 + $0xa0] sm:%s219]
                %249 = vst [vmem:[%s227 + $0x50] sm:%s219] %v248
                %v250 = vld [vmem:[%s226 + $0xb0] sm:%s219]
                %251 = vst [vmem:[%s227 + $0x58] sm:%s219] %v250
                %v252 = vld [vmem:[%s226 + $0xc0] sm:%s219]
                %253 = vst [vmem:[%s227 + $0x60] sm:%s219] %v252
                %v254 = vld [vmem:[%s226 + $0xd0] sm:%s219]
                %255 = vst [vmem:[%s227 + $0x68] sm:%s219] %v254
                %v256 = vld [vmem:[%s226 + $0xe0] sm:%s219]
                %257 = vst [vmem:[%s227 + $0x70] sm:%s219] %v256
                %v258 = vld [vmem:[%s226 + $0xf0] sm:%s219]
                %259 = vst [vmem:[%s227 + $0x78] sm:%s219] %v258
                %v260 = vld [vmem:[%s226 + $0x100] sm:%s219]
                %261 = vst [vmem:[%s227 + $0x80] sm:%s219] %v260
                %v262 = vld [vmem:[%s226 + $0x110] sm:%s219]
                %263 = vst [vmem:[%s227 + $0x88] sm:%s219] %v262
                %v264 = vld [vmem:[%s226 + $0x120] sm:%s219]
                %265 = vst [vmem:[%s227 + $0x90] sm:%s219] %v264
                %v266 = vld [vmem:[%s226 + $0x130] sm:%s219]
                %267 = vst [vmem:[%s227 + $0x98] sm:%s219] %v266
                %v268 = vld [vmem:[%s226 + $0x140] sm:%s219]
                %269 = vst [vmem:[%s227 + $0xa0] sm:%s219] %v268
                %v270 = vld [vmem:[%s226 + $0x150] sm:%s219]
                %271 = vst [vmem:[%s227 + $0xa8] sm:%s219] %v270
                %v272 = vld [vmem:[%s226 + $0x160] sm:%s219]
                %273 = vst [vmem:[%s227 + $0xb0] sm:%s219] %v272
                %v274 = vld [vmem:[%s226 + $0x170] sm:%s219]
                %275 = vst [vmem:[%s227 + $0xb8] sm:%s219] %v274
                %v276 = vld [vmem:[%s226 + $0x180] sm:%s219]
                %277 = vst [vmem:[%s227 + $0xc0] sm:%s219] %v276
                %v278 = vld [vmem:[%s226 + $0x190] sm:%s219]
                %279 = vst [vmem:[%s227 + $0xc8] sm:%s219] %v278
                %v280 = vld [vmem:[%s226 + $0x1a0] sm:%s219]
                %281 = vst [vmem:[%s227 + $0xd0] sm:%s219] %v280
                %v282 = vld [vmem:[%s226 + $0x1b0] sm:%s219]
                %283 = vst [vmem:[%s227 + $0xd8] sm:%s219] %v282
                %v284 = vld [vmem:[%s226 + $0x1c0] sm:%s219]
                %285 = vst [vmem:[%s227 + $0xe0] sm:%s219] %v284
                %v286 = vld [vmem:[%s226 + $0x1d0] sm:%s219]
                %287 = vst [vmem:[%s227 + $0xe8] sm:%s219] %v286
                %v288 = vld [vmem:[%s226 + $0x1e0] sm:%s219]
                %289 = vst [vmem:[%s227 + $0xf0] sm:%s219] %v288
                %v290 = vld [vmem:[%s226 + $0x1f0] sm:%s219]
                %291 = vst [vmem:[%s227 + $0xf8] sm:%s219] %v290
                %v292 = vld [vmem:[%s226 + $0x200] sm:%s219]
                %293 = vst [vmem:[%s227 + $0x100] sm:%s219] %v292
                %v294 = vld [vmem:[%s226 + $0x210] sm:%s219]
                %295 = vst [vmem:[%s227 + $0x108] sm:%s219] %v294
                %v296 = vld [vmem:[%s226 + $0x220] sm:%s219]
                %297 = vst [vmem:[%s227 + $0x110] sm:%s219] %v296
                %v298 = vld [vmem:[%s226 + $0x230] sm:%s219]
                %299 = vst [vmem:[%s227 + $0x118] sm:%s219] %v298
                %v300 = vld [vmem:[%s226 + $0x240] sm:%s219]
                %301 = vst [vmem:[%s227 + $0x120] sm:%s219] %v300
                %v302 = vld [vmem:[%s226 + $0x250] sm:%s219]
                %303 = vst [vmem:[%s227 + $0x128] sm:%s219] %v302
                %v304 = vld [vmem:[%s226 + $0x260] sm:%s219]
                %305 = vst [vmem:[%s227 + $0x130] sm:%s219] %v304
                %v306 = vld [vmem:[%s226 + $0x270] sm:%s219]
                %307 = vst [vmem:[%s227 + $0x138] sm:%s219] %v306
                %v308 = vld [vmem:[%s226 + $0x280] sm:%s219]
                %309 = vst [vmem:[%s227 + $0x140] sm:%s219] %v308
                %v310 = vld [vmem:[%s226 + $0x290] sm:%s219]
                %311 = vst [vmem:[%s227 + $0x148] sm:%s219] %v310
                %v312 = vld [vmem:[%s226 + $0x2a0] sm:%s219]
                %313 = vst [vmem:[%s227 + $0x150] sm:%s219] %v312
                %v314 = vld [vmem:[%s226 + $0x2b0] sm:%s219]
                %315 = vst [vmem:[%s227 + $0x158] sm:%s219] %v314
                %v316 = vld [vmem:[%s226 + $0x2c0] sm:%s219]
                %317 = vst [vmem:[%s227 + $0x160] sm:%s219] %v316
                %v318 = vld [vmem:[%s226 + $0x2d0] sm:%s219]
                %319 = vst [vmem:[%s227 + $0x168] sm:%s219] %v318
                %v320 = vld [vmem:[%s226 + $0x2e0] sm:%s219]
                %321 = vst [vmem:[%s227 + $0x170] sm:%s219] %v320
                %v322 = vld [vmem:[%s226 + $0x2f0] sm:%s219]
                %323 = vst [vmem:[%s227 + $0x178] sm:%s219] %v322
                %v324 = vld [vmem:[%s226 + $0x300] sm:%s219]
                %325 = vst [vmem:[%s227 + $0x180] sm:%s219] %v324
                %v326 = vld [vmem:[%s226 + $0x310] sm:%s219]
                %327 = vst [vmem:[%s227 + $0x188] sm:%s219] %v326
                %v328 = vld [vmem:[%s226 + $0x320] sm:%s219]
                %329 = vst [vmem:[%s227 + $0x190] sm:%s219] %v328
                %v330 = vld [vmem:[%s226 + $0x330] sm:%s219]
                %331 = vst [vmem:[%s227 + $0x198] sm:%s219] %v330
                %v332 = vld [vmem:[%s226 + $0x340] sm:%s219]
                %333 = vst [vmem:[%s227 + $0x1a0] sm:%s219] %v332
                %v334 = vld [vmem:[%s226 + $0x350] sm:%s219]
                %335 = vst [vmem:[%s227 + $0x1a8] sm:%s219] %v334
                %v336 = vld [vmem:[%s226 + $0x360] sm:%s219]
                %337 = vst [vmem:[%s227 + $0x1b0] sm:%s219] %v336
                %v338 = vld [vmem:[%s226 + $0x370] sm:%s219]
                %339 = vst [vmem:[%s227 + $0x1b8] sm:%s219] %v338
                %v340 = vld [vmem:[%s226 + $0x380] sm:%s219]
                %341 = vst [vmem:[%s227 + $0x1c0] sm:%s219] %v340
                %v342 = vld [vmem:[%s226 + $0x390] sm:%s219]
                %343 = vst [vmem:[%s227 + $0x1c8] sm:%s219] %v342
                %v344 = vld [vmem:[%s226 + $0x3a0] sm:%s219]
                %345 = vst [vmem:[%s227 + $0x1d0] sm:%s219] %v344
                %v346 = vld [vmem:[%s226 + $0x3b0] sm:%s219]
                %347 = vst [vmem:[%s227 + $0x1d8] sm:%s219] %v346
                %v348 = vld [vmem:[%s226 + $0x3c0] sm:%s219]
                %349 = vst [vmem:[%s227 + $0x1e0] sm:%s219] %v348
                %v350 = vld [vmem:[%s226 + $0x3d0] sm:%s219]
                %351 = vst [vmem:[%s227 + $0x1e8] sm:%s219] %v350
                %v352 = vld [vmem:[%s226 + $0x3e0] sm:%s219]
                %353 = vst [vmem:[%s227 + $0x1f0] sm:%s219] %v352
                %v354 = vld [vmem:[%s226 + $0x3f0] sm:%s219]
                %355 = vst [vmem:[%s227 + $0x1f8] sm:%s219] %v354
              $region41: #{res_classifier_forward.4} parent=35 // loop_footer
                %s225 = sadd.s32 1, %s221
              $region42: #{res_classifier_forward.4} parent=35 // loop_footer_branch
                %220 = sbr.rel target = $region38
              $region43: #{res_classifier_forward.4} parent=35 // loop_exit
                _
            $region36: #{res_classifier_forward.4} parent=27 // pred_fallthru
              _
          $region28: #{res_classifier_forward.4} parent=23 // pred_fallthru
            _
          %496 = vnop
        $region24: #{res_classifier_forward.4} parent=19 // pred_fallthru
          _
        // Predicated region
        $region59: #{res_classifier_forward.4} parent=19 // pred_check
          %p497 = pneg %p105
        $region60: #{res_classifier_forward.4} parent=19 // pred_check_branch
          %499 = sbr.rel (%p497) target = $region62
        $region61: #{res_classifier_forward.4} parent=19 // pred_region
          %s500 = smul.u32 2, %s18
          %p501 = scmp.lt.s32.totalorder %s500, 3
          %s502 = scalar_select %p501, %s500, 3
          %s503 = scalar_lea.vmem %s2, %s502
          %s504 = smul.u32 2, %s18
        $region62: #{res_classifier_forward.4} parent=19 // pred_fallthru
          _
        // Predicated region
        $region63: #{res_classifier_forward.4} parent=19 // pred_check
          %p505 = pneg %p131
        $region64: #{res_classifier_forward.4} parent=19 // pred_check_branch
          %507 = sbr.rel (%p505) target = $region66
        $region65: #{res_classifier_forward.4} parent=19 // pred_region
          %s508 = smul.u32 2, %s18
          %p509 = scmp.lt.s32.totalorder %s508, 3
          %s510 = scalar_select %p509, %s508, 3
          %s511 = scalar_lea.vmem %s3, %s510
          %s512 = smul.u32 2, %s18
        $region66: #{res_classifier_forward.4} parent=19 // pred_fallthru
          _
      $region20: #{res_classifier_forward.4} parent=5 // pred_fallthru
        _
      %p513 = scmp.le.s32.totalorder 1, %s10
      %p514 = scmp.lt.s32.totalorder %s10, 3
      %p515 = pnand %p513, %p514
      %p516 = pneg %p515
      // Predicated region
      $region67: #{res_classifier_forward.4} parent=5 // pred_check
        _
      $region68: #{res_classifier_forward.4} parent=5 // pred_check_branch
        %518 = sbr.rel (%p515) target = $region70
      $region69: #{res_classifier_forward.4} parent=5 // pred_region
        %s519 = ssub.s32 %s10, 1
        %s520 = sand.u32 %s72, 1
        %s521 = sand.u32 %s72, 1
        %s522 = smul.addr %s521, 512
        %s523 = scalar_lea.vmem [#allocation3], %s522
        // Predicated region
        $region71: #{res_classifier_forward.4} parent=69 // pred_check
          %p524 = pneg %p85
        $region72: #{res_classifier_forward.4} parent=69 // pred_check_branch
          %526 = sbr.rel (%p524) target = $region74
        $region73: #{res_classifier_forward.4} parent=69 // pred_region
          _
        $region74: #{res_classifier_forward.4} parent=69 // pred_fallthru
          _
        %s527 = smul.u32 8, %s20
        %s528 = smul.u32 4, %s22
        %p529 = scmp.lt.s32.totalorder %s527, 7
        %s530 = scalar_select %p529, %s527, 7
        %p531 = scmp.lt.s32.totalorder %s528, 3
        %s532 = scalar_select %p531, %s528, 3
        %s533 = smul.addr %s530, 4
        %s534 = sadd.s32 %s532, %s533
        %s535 = smul.addr %s534, 4
        %s536 = scalar_lea.vmem %s0, %s535
        %p537 = pneg %p57
        %p538 = pneg %p54
        %s539 = sand.u32 %s72, 1
        %s540 = sand.u32 %s72, 1
        %s541 = smul.addr %s540, 512
        %s542 = scalar_lea.vmem [#allocation3], %s541
        %p543 = pneg %p85
        %p544 = pneg %p82
        %s545 = smul.u32 2, %s21
        %p546 = scmp.lt.s32.totalorder %s545, 3
        %s547 = scalar_select %p546, %s545, 3
        %s548 = scalar_lea.vmem %s2, %s547
        %p549 = pneg %p111
        %p550 = pneg %p108
        %s551 = smul.u32 2, %s21
        %p552 = scmp.lt.s32.totalorder %s551, 3
        %s553 = scalar_select %p552, %s551, 3
        %s554 = scalar_lea.vmem %s3, %s553
        %p555 = pneg %p137
        %p556 = pneg %p134
        %p557 = pneg %p165
        %p558 = pneg %p162
        %s559 = sand.u32 %s152, 1
        %s560 = sand.u32 %s152, 1
        %s561 = smul.addr %s560, 128
        %s562 = scalar_lea.vmem [#allocation4], %s561
        %s563 = smul.u32 8, %s20
        %s564 = smul.u32 4, %s22
        %p565 = scmp.lt.s32.totalorder %s563, 7
        %s566 = scalar_select %p565, %s563, 7
        %p567 = scmp.lt.s32.totalorder %s564, 3
        %s568 = scalar_select %p567, %s564, 3
        %s569 = smul.addr %s566, 4
        %s570 = sadd.s32 %s568, %s569
        %s571 = smul.addr %s570, 4
        %s572 = scalar_lea.vmem %s0, %s571
        %s573 = smul.u32 8, %s20
        %s574 = smul.u32 4, %s22
        %s575 = smul.u32 64, %s22
        %s576 = smul.u32 2, %s21
        %s577 = smul.u32 2, %s21
        %p578 = scmp.lt.s32.totalorder %s577, 3
        %s579 = scalar_select %p578, %s577, 3
        %s580 = scalar_lea.vmem %s2, %s579
        %s581 = smul.u32 2, %s21
        %s582 = smul.u32 2, %s21
        %p583 = scmp.lt.s32.totalorder %s582, 3
        %s584 = scalar_select %p583, %s582, 3
        %s585 = scalar_lea.vmem %s3, %s584
        %s586 = smul.u32 2, %s21
        %s587 = smul.u32 8, %s20
        %s588 = smul.u32 2, %s21
        %p589 = scmp.eq.s32.totalorder %s22, 0
        // Predicated region
        $region75: #{res_classifier_forward.4} parent=69 // pred_check
          %p590 = pneg %p589
        $region76: #{res_classifier_forward.4} parent=69 // pred_check_branch
          %592 = sbr.rel (%p590) target = $region78
        $region77: #{res_classifier_forward.4} parent=69 // pred_region
          %593 = vst [vmem:[#allocation2] sm:$0xff] 0.0
          %594 = vst [vmem:[#allocation2 + $0x8] sm:$0xff] 0.0
          %595 = vst [vmem:[#allocation2 + $0x10] sm:$0xff] 0.0
          %596 = vst [vmem:[#allocation2 + $0x18] sm:$0xff] 0.0
          %597 = vst [vmem:[#allocation2 + $0x20] sm:$0xff] 0.0
          %598 = vst [vmem:[#allocation2 + $0x28] sm:$0xff] 0.0
          %599 = vst [vmem:[#allocation2 + $0x30] sm:$0xff] 0.0
          %600 = vst [vmem:[#allocation2 + $0x38] sm:$0xff] 0.0
          %601 = vst [vmem:[#allocation2 + $0x40] sm:$0xff] 0.0
          %602 = vst [vmem:[#allocation2 + $0x48] sm:$0xff] 0.0
          %603 = vst [vmem:[#allocation2 + $0x50] sm:$0xff] 0.0
          %604 = vst [vmem:[#allocation2 + $0x58] sm:$0xff] 0.0
          %605 = vst [vmem:[#allocation2 + $0x60] sm:$0xff] 0.0
          %606 = vst [vmem:[#allocation2 + $0x68] sm:$0xff] 0.0
          %607 = vst [vmem:[#allocation2 + $0x70] sm:$0xff] 0.0
          %608 = vst [vmem:[#allocation2 + $0x78] sm:$0xff] 0.0
        $region78: #{res_classifier_forward.4} parent=69 // pred_fallthru
          _
        %v609 = vld [vmem:[#allocation2] sm:$0xff]
        %v610 = vld [vmem:[#allocation2 + $0x8] sm:$0xff]
        %v611 = vld [vmem:[#allocation2 + $0x10] sm:$0xff]
        %v612 = vld [vmem:[#allocation2 + $0x18] sm:$0xff]
        %v613 = vld [vmem:[#allocation2 + $0x20] sm:$0xff]
        %v614 = vld [vmem:[#allocation2 + $0x28] sm:$0xff]
        %v615 = vld [vmem:[#allocation2 + $0x30] sm:$0xff]
        %v616 = vld [vmem:[#allocation2 + $0x38] sm:$0xff]
        %v617 = vld [vmem:[#allocation2 + $0x40] sm:$0xff]
        %v618 = vld [vmem:[#allocation2 + $0x48] sm:$0xff]
        %v619 = vld [vmem:[#allocation2 + $0x50] sm:$0xff]
        %v620 = vld [vmem:[#allocation2 + $0x58] sm:$0xff]
        %v621 = vld [vmem:[#allocation2 + $0x60] sm:$0xff]
        %v622 = vld [vmem:[#allocation2 + $0x68] sm:$0xff]
        %v623 = vld [vmem:[#allocation2 + $0x70] sm:$0xff]
        %v624 = vld [vmem:[#allocation2 + $0x78] sm:$0xff]
        %v625 = vld [vmem:[%s572] sm:$0xff]
        %v626 = vld [vmem:[%s572 + $0x8] sm:$0xff]
        %v627 = vld [vmem:[%s572 + $0x10] sm:$0xff]
        %v628 = vld [vmem:[%s572 + $0x18] sm:$0xff]
        %v629 = vld [vmem:[%s572 + $0x20] sm:$0xff]
        %v630 = vld [vmem:[%s572 + $0x28] sm:$0xff]
        %v631 = vld [vmem:[%s572 + $0x30] sm:$0xff]
        %v632 = vld [vmem:[%s572 + $0x38] sm:$0xff]
        %v633 = vld [vmem:[%s572 + $0x40] sm:$0xff]
        %v634 = vld [vmem:[%s572 + $0x48] sm:$0xff]
        %v635 = vld [vmem:[%s572 + $0x50] sm:$0xff]
        %v636 = vld [vmem:[%s572 + $0x58] sm:$0xff]
        %v637 = vld [vmem:[%s572 + $0x60] sm:$0xff]
        %v638 = vld [vmem:[%s572 + $0x68] sm:$0xff]
        %v639 = vld [vmem:[%s572 + $0x70] sm:$0xff]
        %v640 = vld [vmem:[%s572 + $0x78] sm:$0xff]
        %v641 = vld [vmem:[%s523] sm:$0xff]
        %v642 = vld [vmem:[%s523 + $0x8] sm:$0xff]
        %v643 = vld [vmem:[%s523 + $0x10] sm:$0xff]
        %v644 = vld [vmem:[%s523 + $0x18] sm:$0xff]
        %v645 = vld [vmem:[%s523 + $0x20] sm:$0xff]
        %v646 = vld [vmem:[%s523 + $0x28] sm:$0xff]
        %v647 = vld [vmem:[%s523 + $0x30] sm:$0xff]
        %v648 = vld [vmem:[%s523 + $0x38] sm:$0xff]
        %v649 = vld [vmem:[%s523 + $0x40] sm:$0xff]
        %v650 = vld [vmem:[%s523 + $0x48] sm:$0xff]
        %v651 = vld [vmem:[%s523 + $0x50] sm:$0xff]
        %v652 = vld [vmem:[%s523 + $0x58] sm:$0xff]
        %v653 = vld [vmem:[%s523 + $0x60] sm:$0xff]
        %v654 = vld [vmem:[%s523 + $0x68] sm:$0xff]
        %v655 = vld [vmem:[%s523 + $0x70] sm:$0xff]
        %v656 = vld [vmem:[%s523 + $0x78] sm:$0xff]
        %v657 = vld [vmem:[%s523 + $0x80] sm:$0xff]
        %v658 = vld [vmem:[%s523 + $0x88] sm:$0xff]
        %v659 = vld [vmem:[%s523 + $0x90] sm:$0xff]
        %v660 = vld [vmem:[%s523 + $0x98] sm:$0xff]
        %v661 = vld [vmem:[%s523 + $0xa0] sm:$0xff]
        %v662 = vld [vmem:[%s523 + $0xa8] sm:$0xff]
        %v663 = vld [vmem:[%s523 + $0xb0] sm:$0xff]
        %v664 = vld [vmem:[%s523 + $0xb8] sm:$0xff]
        %v665 = vld [vmem:[%s523 + $0xc0] sm:$0xff]
        %v666 = vld [vmem:[%s523 + $0xc8] sm:$0xff]
        %v667 = vld [vmem:[%s523 + $0xd0] sm:$0xff]
        %v668 = vld [vmem:[%s523 + $0xd8] sm:$0xff]
        %v669 = vld [vmem:[%s523 + $0xe0] sm:$0xff]
        %v670 = vld [vmem:[%s523 + $0xe8] sm:$0xff]
        %v671 = vld [vmem:[%s523 + $0xf0] sm:$0xff]
        %v672 = vld [vmem:[%s523 + $0xf8] sm:$0xff]
        %v673 = vld [vmem:[%s523 + $0x100] sm:$0xff]
        %v674 = vld [vmem:[%s523 + $0x108] sm:$0xff]
        %v675 = vld [vmem:[%s523 + $0x110] sm:$0xff]
        %v676 = vld [vmem:[%s523 + $0x118] sm:$0xff]
        %v677 = vld [vmem:[%s523 + $0x120] sm:$0xff]
        %v678 = vld [vmem:[%s523 + $0x128] sm:$0xff]
        %v679 = vld [vmem:[%s523 + $0x130] sm:$0xff]
        %v680 = vld [vmem:[%s523 + $0x138] sm:$0xff]
        %v681 = vld [vmem:[%s523 + $0x140] sm:$0xff]
        %v682 = vld [vmem:[%s523 + $0x148] sm:$0xff]
        %v683 = vld [vmem:[%s523 + $0x150] sm:$0xff]
        %v684 = vld [vmem:[%s523 + $0x158] sm:$0xff]
        %v685 = vld [vmem:[%s523 + $0x160] sm:$0xff]
        %v686 = vld [vmem:[%s523 + $0x168] sm:$0xff]
        %v687 = vld [vmem:[%s523 + $0x170] sm:$0xff]
        %v688 = vld [vmem:[%s523 + $0x178] sm:$0xff]
        %v689 = vld [vmem:[%s523 + $0x180] sm:$0xff]
        %v690 = vld [vmem:[%s523 + $0x188] sm:$0xff]
        %v691 = vld [vmem:[%s523 + $0x190] sm:$0xff]
        %v692 = vld [vmem:[%s523 + $0x198] sm:$0xff]
        %v693 = vld [vmem:[%s523 + $0x1a0] sm:$0xff]
        %v694 = vld [vmem:[%s523 + $0x1a8] sm:$0xff]
        %v695 = vld [vmem:[%s523 + $0x1b0] sm:$0xff]
        %v696 = vld [vmem:[%s523 + $0x1b8] sm:$0xff]
        %v697 = vld [vmem:[%s523 + $0x1c0] sm:$0xff]
        %v698 = vld [vmem:[%s523 + $0x1c8] sm:$0xff]
        %v699 = vld [vmem:[%s523 + $0x1d0] sm:$0xff]
        %v700 = vld [vmem:[%s523 + $0x1d8] sm:$0xff]
        %v701 = vld [vmem:[%s523 + $0x1e0] sm:$0xff]
        %v702 = vld [vmem:[%s523 + $0x1e8] sm:$0xff]
        %v703 = vld [vmem:[%s523 + $0x1f0] sm:$0xff]
        %v704 = vld [vmem:[%s523 + $0x1f8] sm:$0xff]
        %v721 = vunpack.c.l.b16 %v625
        %v722 = vunpack.c.h.b16 %v625
        %v723 = vunpack.c.l.b16 %v626
        %v724 = vunpack.c.h.b16 %v626
        %v725 = vunpack.c.l.b16 %v627
        %v726 = vunpack.c.h.b16 %v627
        %v727 = vunpack.c.l.b16 %v628
        %v728 = vunpack.c.h.b16 %v628
        %v729 = vunpack.c.l.b16 %v629
        %v730 = vunpack.c.h.b16 %v629
        %v731 = vunpack.c.l.b16 %v630
        %v732 = vunpack.c.h.b16 %v630
        %v733 = vunpack.c.l.b16 %v631
        %v734 = vunpack.c.h.b16 %v631
        %v735 = vunpack.c.l.b16 %v632
        %v736 = vunpack.c.h.b16 %v632
        %v737 = vunpack.c.l.b16 %v633
        %v738 = vunpack.c.h.b16 %v633
        %v739 = vunpack.c.l.b16 %v634
        %v740 = vunpack.c.h.b16 %v634
        %v741 = vunpack.c.l.b16 %v635
        %v742 = vunpack.c.h.b16 %v635
        %v743 = vunpack.c.l.b16 %v636
        %v744 = vunpack.c.h.b16 %v636
        %v745 = vunpack.c.l.b16 %v637
        %v746 = vunpack.c.h.b16 %v637
        %v747 = vunpack.c.l.b16 %v638
        %v748 = vunpack.c.h.b16 %v638
        %v749 = vunpack.c.l.b16 %v639
        %v750 = vunpack.c.h.b16 %v639
        %v751 = vunpack.c.l.b16 %v640
        %v752 = vunpack.c.h.b16 %v640
        %v753 = vpack.c.b16 %v725, %v721
        %v754 = vpack.c.b16 %v726, %v722
        %v755 = vpack.c.b16 %v727, %v723
        %v756 = vpack.c.b16 %v728, %v724
        %v757 = vpack.c.b16 %v733, %v729
        %v758 = vpack.c.b16 %v734, %v730
        %v759 = vpack.c.b16 %v735, %v731
        %v760 = vpack.c.b16 %v736, %v732
        %v761 = vpack.c.b16 %v741, %v737
        %v762 = vpack.c.b16 %v742, %v738
        %v763 = vpack.c.b16 %v743, %v739
        %v764 = vpack.c.b16 %v744, %v740
        %v765 = vpack.c.b16 %v749, %v745
        %v766 = vpack.c.b16 %v750, %v746
        %v767 = vpack.c.b16 %v751, %v747
        %v768 = vpack.c.b16 %v752, %v748
        %v849 = vunpack.c.l.b16 %v641
        %v850 = vunpack.c.h.b16 %v641
        %v851 = vunpack.c.l.b16 %v642
        %v852 = vunpack.c.h.b16 %v642
        %v853 = vunpack.c.l.b16 %v643
        %v854 = vunpack.c.h.b16 %v643
        %v855 = vunpack.c.l.b16 %v644
        %v856 = vunpack.c.h.b16 %v644
        %v857 = vunpack.c.l.b16 %v645
        %v858 = vunpack.c.h.b16 %v645
        %v859 = vunpack.c.l.b16 %v646
        %v860 = vunpack.c.h.b16 %v646
        %v861 = vunpack.c.l.b16 %v647
        %v862 = vunpack.c.h.b16 %v647
        %v863 = vunpack.c.l.b16 %v648
        %v864 = vunpack.c.h.b16 %v648
        %v865 = vunpack.c.l.b16 %v649
        %v866 = vunpack.c.h.b16 %v649
        %v867 = vunpack.c.l.b16 %v650
        %v868 = vunpack.c.h.b16 %v650
        %v869 = vunpack.c.l.b16 %v651
        %v870 = vunpack.c.h.b16 %v651
        %v871 = vunpack.c.l.b16 %v652
        %v872 = vunpack.c.h.b16 %v652
        %v873 = vunpack.c.l.b16 %v653
        %v874 = vunpack.c.h.b16 %v653
        %v875 = vunpack.c.l.b16 %v654
        %v876 = vunpack.c.h.b16 %v654
        %v877 = vunpack.c.l.b16 %v655
        %v878 = vunpack.c.h.b16 %v655
        %v879 = vunpack.c.l.b16 %v656
        %v880 = vunpack.c.h.b16 %v656
        %v881 = vunpack.c.l.b16 %v657
        %v882 = vunpack.c.h.b16 %v657
        %v883 = vunpack.c.l.b16 %v658
        %v884 = vunpack.c.h.b16 %v658
        %v885 = vunpack.c.l.b16 %v659
        %v886 = vunpack.c.h.b16 %v659
        %v887 = vunpack.c.l.b16 %v660
        %v888 = vunpack.c.h.b16 %v660
        %v889 = vunpack.c.l.b16 %v661
        %v890 = vunpack.c.h.b16 %v661
        %v891 = vunpack.c.l.b16 %v662
        %v892 = vunpack.c.h.b16 %v662
        %v893 = vunpack.c.l.b16 %v663
        %v894 = vunpack.c.h.b16 %v663
        %v895 = vunpack.c.l.b16 %v664
        %v896 = vunpack.c.h.b16 %v664
        %v897 = vunpack.c.l.b16 %v665
        %v898 = vunpack.c.h.b16 %v665
        %v899 = vunpack.c.l.b16 %v666
        %v900 = vunpack.c.h.b16 %v666
        %v901 = vunpack.c.l.b16 %v667
        %v902 = vunpack.c.h.b16 %v667
        %v903 = vunpack.c.l.b16 %v668
        %v904 = vunpack.c.h.b16 %v668
        %v905 = vunpack.c.l.b16 %v669
        %v906 = vunpack.c.h.b16 %v669
        %v907 = vunpack.c.l.b16 %v670
        %v908 = vunpack.c.h.b16 %v670
        %v909 = vunpack.c.l.b16 %v671
        %v910 = vunpack.c.h.b16 %v671
        %v911 = vunpack.c.l.b16 %v672
        %v912 = vunpack.c.h.b16 %v672
        %v913 = vunpack.c.l.b16 %v673
        %v914 = vunpack.c.h.b16 %v673
        %v915 = vunpack.c.l.b16 %v674
        %v916 = vunpack.c.h.b16 %v674
        %v917 = vunpack.c.l.b16 %v675
        %v918 = vunpack.c.h.b16 %v675
        %v919 = vunpack.c.l.b16 %v676
        %v920 = vunpack.c.h.b16 %v676
        %v921 = vunpack.c.l.b16 %v677
        %v922 = vunpack.c.h.b16 %v677
        %v923 = vunpack.c.l.b16 %v678
        %v924 = vunpack.c.h.b16 %v678
        %v925 = vunpack.c.l.b16 %v679
        %v926 = vunpack.c.h.b16 %v679
        %v927 = vunpack.c.l.b16 %v680
        %v928 = vunpack.c.h.b16 %v680
        %v929 = vunpack.c.l.b16 %v681
        %v930 = vunpack.c.h.b16 %v681
        %v931 = vunpack.c.l.b16 %v682
        %v932 = vunpack.c.h.b16 %v682
        %v933 = vunpack.c.l.b16 %v683
        %v934 = vunpack.c.h.b16 %v683
        %v935 = vunpack.c.l.b16 %v684
        %v936 = vunpack.c.h.b16 %v684
        %v937 = vunpack.c.l.b16 %v685
        %v938 = vunpack.c.h.b16 %v685
        %v939 = vunpack.c.l.b16 %v686
        %v940 = vunpack.c.h.b16 %v686
        %v941 = vunpack.c.l.b16 %v687
        %v942 = vunpack.c.h.b16 %v687
        %v943 = vunpack.c.l.b16 %v688
        %v944 = vunpack.c.h.b16 %v688
        %v945 = vunpack.c.l.b16 %v689
        %v946 = vunpack.c.h.b16 %v689
        %v947 = vunpack.c.l.b16 %v690
        %v948 = vunpack.c.h.b16 %v690
        %v949 = vunpack.c.l.b16 %v691
        %v950 = vunpack.c.h.b16 %v691
        %v951 = vunpack.c.l.b16 %v692
        %v952 = vunpack.c.h.b16 %v692
        %v953 = vunpack.c.l.b16 %v693
        %v954 = vunpack.c.h.b16 %v693
        %v955 = vunpack.c.l.b16 %v694
        %v956 = vunpack.c.h.b16 %v694
        %v957 = vunpack.c.l.b16 %v695
        %v958 = vunpack.c.h.b16 %v695
        %v959 = vunpack.c.l.b16 %v696
        %v960 = vunpack.c.h.b16 %v696
        %v961 = vunpack.c.l.b16 %v697
        %v962 = vunpack.c.h.b16 %v697
        %v963 = vunpack.c.l.b16 %v698
        %v964 = vunpack.c.h.b16 %v698
        %v965 = vunpack.c.l.b16 %v699
        %v966 = vunpack.c.h.b16 %v699
        %v967 = vunpack.c.l.b16 %v700
        %v968 = vunpack.c.h.b16 %v700
        %v969 = vunpack.c.l.b16 %v701
        %v970 = vunpack.c.h.b16 %v701
        %v971 = vunpack.c.l.b16 %v702
        %v972 = vunpack.c.h.b16 %v702
        %v973 = vunpack.c.l.b16 %v703
        %v974 = vunpack.c.h.b16 %v703
        %v975 = vunpack.c.l.b16 %v704
        %v976 = vunpack.c.h.b16 %v704
        %v977 = vpack.c.b16 %v851, %v849
        %v978 = vpack.c.b16 %v852, %v850
        %v979 = vpack.c.b16 %v855, %v853
        %v980 = vpack.c.b16 %v856, %v854
        %v981 = vpack.c.b16 %v859, %v857
        %v982 = vpack.c.b16 %v860, %v858
        %v983 = vpack.c.b16 %v863, %v861
        %v984 = vpack.c.b16 %v864, %v862
        %v985 = vpack.c.b16 %v867, %v865
        %v986 = vpack.c.b16 %v868, %v866
        %v987 = vpack.c.b16 %v871, %v869
        %v988 = vpack.c.b16 %v872, %v870
        %v989 = vpack.c.b16 %v875, %v873
        %v990 = vpack.c.b16 %v876, %v874
        %v991 = vpack.c.b16 %v879, %v877
        %v992 = vpack.c.b16 %v880, %v878
        %v993 = vpack.c.b16 %v883, %v881
        %v994 = vpack.c.b16 %v884, %v882
        %v995 = vpack.c.b16 %v887, %v885
        %v996 = vpack.c.b16 %v888, %v886
        %v997 = vpack.c.b16 %v891, %v889
        %v998 = vpack.c.b16 %v892, %v890
        %v999 = vpack.c.b16 %v895, %v893
        %v1000 = vpack.c.b16 %v896, %v894
        %v1001 = vpack.c.b16 %v899, %v897
        %v1002 = vpack.c.b16 %v900, %v898
        %v1003 = vpack.c.b16 %v903, %v901
        %v1004 = vpack.c.b16 %v904, %v902
        %v1005 = vpack.c.b16 %v907, %v905
        %v1006 = vpack.c.b16 %v908, %v906
        %v1007 = vpack.c.b16 %v911, %v909
        %v1008 = vpack.c.b16 %v912, %v910
        %v1009 = vpack.c.b16 %v915, %v913
        %v1010 = vpack.c.b16 %v916, %v914
        %v1011 = vpack.c.b16 %v919, %v917
        %v1012 = vpack.c.b16 %v920, %v918
        %v1013 = vpack.c.b16 %v923, %v921
        %v1014 = vpack.c.b16 %v924, %v922
        %v1015 = vpack.c.b16 %v927, %v925
        %v1016 = vpack.c.b16 %v928, %v926
        %v1017 = vpack.c.b16 %v931, %v929
        %v1018 = vpack.c.b16 %v932, %v930
        %v1019 = vpack.c.b16 %v935, %v933
        %v1020 = vpack.c.b16 %v936, %v934
        %v1021 = vpack.c.b16 %v939, %v937
        %v1022 = vpack.c.b16 %v940, %v938
        %v1023 = vpack.c.b16 %v943, %v941
        %v1024 = vpack.c.b16 %v944, %v942
        %v1025 = vpack.c.b16 %v947, %v945
        %v1026 = vpack.c.b16 %v948, %v946
        %v1027 = vpack.c.b16 %v951, %v949
        %v1028 = vpack.c.b16 %v952, %v950
        %v1029 = vpack.c.b16 %v955, %v953
        %v1030 = vpack.c.b16 %v956, %v954
        %v1031 = vpack.c.b16 %v959, %v957
        %v1032 = vpack.c.b16 %v960, %v958
        %v1033 = vpack.c.b16 %v963, %v961
        %v1034 = vpack.c.b16 %v964, %v962
        %v1035 = vpack.c.b16 %v967, %v965
        %v1036 = vpack.c.b16 %v968, %v966
        %v1037 = vpack.c.b16 %v971, %v969
        %v1038 = vpack.c.b16 %v972, %v970
        %v1039 = vpack.c.b16 %v975, %v973
        %v1040 = vpack.c.b16 %v976, %v974
        %1105 = vmatpush.bf16.msra.mxu0 %v991
        %1106 = vmatpush.bf16.msra.mxu0 %v989
        %1107 = vmatpush.bf16.msra.mxu0 %v987
        %1108 = vmatpush.bf16.msra.mxu0 %v985
        %1109 = vmatpush.bf16.msra.mxu0 %v983
        %1110 = vmatpush.bf16.msra.mxu0 %v981
        %1111 = vmatpush.bf16.msra.mxu0 %v979
        %1112 = vmatpush.bf16.msra.mxu0 %v977
        %1113 = vmatmul.bf16.gmra.mxu0 %v753
        %v1114 = vpop.f32.mrf.mxu0
        %v1115 = vadd.f32 0.0, %v1114
        %v1116 = vpop.f32.mrf.mxu0
        %v1117 = vadd.f32 0.0, %v1116
        %1118 = vmatmul.bf16.gmra.mxu0 %v757
        %v1119 = vpop.f32.mrf.mxu0
        %v1120 = vadd.f32 0.0, %v1119
        %v1121 = vpop.f32.mrf.mxu0
        %v1122 = vadd.f32 0.0, %v1121
        %1123 = vmatmul.bf16.gmra.mxu0 %v761
        %v1124 = vpop.f32.mrf.mxu0
        %v1125 = vadd.f32 0.0, %v1124
        %v1126 = vpop.f32.mrf.mxu0
        %v1127 = vadd.f32 0.0, %v1126
        %1128 = vmatmul.bf16.gmra.mxu0 %v765
        %v1129 = vpop.f32.mrf.mxu0
        %v1130 = vadd.f32 0.0, %v1129
        %v1131 = vpop.f32.mrf.mxu0
        %v1132 = vadd.f32 0.0, %v1131
        %1133 = vdwg.mxu0
        %1134 = vmatpush.bf16.msra.mxu0 %v1007
        %1135 = vmatpush.bf16.msra.mxu0 %v1005
        %1136 = vmatpush.bf16.msra.mxu0 %v1003
        %1137 = vmatpush.bf16.msra.mxu0 %v1001
        %1138 = vmatpush.bf16.msra.mxu0 %v999
        %1139 = vmatpush.bf16.msra.mxu0 %v997
        %1140 = vmatpush.bf16.msra.mxu0 %v995
        %1141 = vmatpush.bf16.msra.mxu0 %v993
        %1142 = vmatmul.bf16.gmra.mxu0 %v754
        %v1143 = vpop.f32.mrf.mxu0
        %v1144 = vadd.f32 %v1115, %v1143
        %v1145 = vpop.f32.mrf.mxu0
        %v1146 = vadd.f32 %v1117, %v1145
        %1147 = vmatmul.bf16.gmra.mxu0 %v758
        %v1148 = vpop.f32.mrf.mxu0
        %v1149 = vadd.f32 %v1120, %v1148
        %v1150 = vpop.f32.mrf.mxu0
        %v1151 = vadd.f32 %v1122, %v1150
        %1152 = vmatmul.bf16.gmra.mxu0 %v762
        %v1153 = vpop.f32.mrf.mxu0
        %v1154 = vadd.f32 %v1125, %v1153
        %v1155 = vpop.f32.mrf.mxu0
        %v1156 = vadd.f32 %v1127, %v1155
        %1157 = vmatmul.bf16.gmra.mxu0 %v766
        %v1158 = vpop.f32.mrf.mxu0
        %v1159 = vadd.f32 %v1130, %v1158
        %v1160 = vpop.f32.mrf.mxu0
        %v1161 = vadd.f32 %v1132, %v1160
        %1162 = vdwg.mxu0
        %1163 = vmatpush.bf16.msra.mxu0 %v1023
        %1164 = vmatpush.bf16.msra.mxu0 %v1021
        %1165 = vmatpush.bf16.msra.mxu0 %v1019
        %1166 = vmatpush.bf16.msra.mxu0 %v1017
        %1167 = vmatpush.bf16.msra.mxu0 %v1015
        %1168 = vmatpush.bf16.msra.mxu0 %v1013
        %1169 = vmatpush.bf16.msra.mxu0 %v1011
        %1170 = vmatpush.bf16.msra.mxu0 %v1009
        %1171 = vmatmul.bf16.gmra.mxu0 %v755
        %v1172 = vpop.f32.mrf.mxu0
        %v1173 = vadd.f32 %v1144, %v1172
        %v1174 = vpop.f32.mrf.mxu0
        %v1175 = vadd.f32 %v1146, %v1174
        %1176 = vmatmul.bf16.gmra.mxu0 %v759
        %v1177 = vpop.f32.mrf.mxu0
        %v1178 = vadd.f32 %v1149, %v1177
        %v1179 = vpop.f32.mrf.mxu0
        %v1180 = vadd.f32 %v1151, %v1179
        %1181 = vmatmul.bf16.gmra.mxu0 %v763
        %v1182 = vpop.f32.mrf.mxu0
        %v1183 = vadd.f32 %v1154, %v1182
        %v1184 = vpop.f32.mrf.mxu0
        %v1185 = vadd.f32 %v1156, %v1184
        %1186 = vmatmul.bf16.gmra.mxu0 %v767
        %v1187 = vpop.f32.mrf.mxu0
        %v1188 = vadd.f32 %v1159, %v1187
        %v1189 = vpop.f32.mrf.mxu0
        %v1190 = vadd.f32 %v1161, %v1189
        %1191 = vdwg.mxu0
        %1192 = vmatpush.bf16.msra.mxu0 %v1039
        %1193 = vmatpush.bf16.msra.mxu0 %v1037
        %1194 = vmatpush.bf16.msra.mxu0 %v1035
        %1195 = vmatpush.bf16.msra.mxu0 %v1033
        %1196 = vmatpush.bf16.msra.mxu0 %v1031
        %1197 = vmatpush.bf16.msra.mxu0 %v1029
        %1198 = vmatpush.bf16.msra.mxu0 %v1027
        %1199 = vmatpush.bf16.msra.mxu0 %v1025
        %1200 = vmatmul.bf16.gmra.mxu0 %v756
        %v1201 = vpop.f32.mrf.mxu0
        %v1202 = vadd.f32 %v1173, %v1201
        %v1203 = vpop.f32.mrf.mxu0
        %v1204 = vadd.f32 %v1175, %v1203
        %1205 = vmatmul.bf16.gmra.mxu0 %v760
        %v1206 = vpop.f32.mrf.mxu0
        %v1207 = vadd.f32 %v1178, %v1206
        %v1208 = vpop.f32.mrf.mxu0
        %v1209 = vadd.f32 %v1180, %v1208
        %1210 = vmatmul.bf16.gmra.mxu0 %v764
        %v1211 = vpop.f32.mrf.mxu0
        %v1212 = vadd.f32 %v1183, %v1211
        %v1213 = vpop.f32.mrf.mxu0
        %v1214 = vadd.f32 %v1185, %v1213
        %1215 = vmatmul.bf16.gmra.mxu0 %v768
        %v1216 = vpop.f32.mrf.mxu0
        %v1217 = vadd.f32 %v1188, %v1216
        %v1218 = vpop.f32.mrf.mxu0
        %v1219 = vadd.f32 %v1190, %v1218
        %1220 = vdwg.mxu0
        %1221 = vmatpush.bf16.msra.mxu0 %v992
        %1222 = vmatpush.bf16.msra.mxu0 %v990
        %1223 = vmatpush.bf16.msra.mxu0 %v988
        %1224 = vmatpush.bf16.msra.mxu0 %v986
        %1225 = vmatpush.bf16.msra.mxu0 %v984
        %1226 = vmatpush.bf16.msra.mxu0 %v982
        %1227 = vmatpush.bf16.msra.mxu0 %v980
        %1228 = vmatpush.bf16.msra.mxu0 %v978
        %1229 = vmatmul.bf16.gmra.mxu0 %v753
        %v1230 = vpop.f32.mrf.mxu0
        %v1231 = vadd.f32 0.0, %v1230
        %v1232 = vpop.f32.mrf.mxu0
        %v1233 = vadd.f32 0.0, %v1232
        %1234 = vmatmul.bf16.gmra.mxu0 %v757
        %v1235 = vpop.f32.mrf.mxu0
        %v1236 = vadd.f32 0.0, %v1235
        %v1237 = vpop.f32.mrf.mxu0
        %v1238 = vadd.f32 0.0, %v1237
        %1239 = vmatmul.bf16.gmra.mxu0 %v761
        %v1240 = vpop.f32.mrf.mxu0
        %v1241 = vadd.f32 0.0, %v1240
        %v1242 = vpop.f32.mrf.mxu0
        %v1243 = vadd.f32 0.0, %v1242
        %1244 = vmatmul.bf16.gmra.mxu0 %v765
        %v1245 = vpop.f32.mrf.mxu0
        %v1246 = vadd.f32 0.0, %v1245
        %v1247 = vpop.f32.mrf.mxu0
        %v1248 = vadd.f32 0.0, %v1247
        %1249 = vdwg.mxu0
        %1250 = vmatpush.bf16.msra.mxu0 %v1008
        %1251 = vmatpush.bf16.msra.mxu0 %v1006
        %1252 = vmatpush.bf16.msra.mxu0 %v1004
        %1253 = vmatpush.bf16.msra.mxu0 %v1002
        %1254 = vmatpush.bf16.msra.mxu0 %v1000
        %1255 = vmatpush.bf16.msra.mxu0 %v998
        %1256 = vmatpush.bf16.msra.mxu0 %v996
        %1257 = vmatpush.bf16.msra.mxu0 %v994
        %1258 = vmatmul.bf16.gmra.mxu0 %v754
        %v1259 = vpop.f32.mrf.mxu0
        %v1260 = vadd.f32 %v1231, %v1259
        %v1261 = vpop.f32.mrf.mxu0
        %v1262 = vadd.f32 %v1233, %v1261
        %1263 = vmatmul.bf16.gmra.mxu0 %v758
        %v1264 = vpop.f32.mrf.mxu0
        %v1265 = vadd.f32 %v1236, %v1264
        %v1266 = vpop.f32.mrf.mxu0
        %v1267 = vadd.f32 %v1238, %v1266
        %1268 = vmatmul.bf16.gmra.mxu0 %v762
        %v1269 = vpop.f32.mrf.mxu0
        %v1270 = vadd.f32 %v1241, %v1269
        %v1271 = vpop.f32.mrf.mxu0
        %v1272 = vadd.f32 %v1243, %v1271
        %1273 = vmatmul.bf16.gmra.mxu0 %v766
        %v1274 = vpop.f32.mrf.mxu0
        %v1275 = vadd.f32 %v1246, %v1274
        %v1276 = vpop.f32.mrf.mxu0
        %v1277 = vadd.f32 %v1248, %v1276
        %1278 = vdwg.mxu0
        %1279 = vmatpush.bf16.msra.mxu0 %v1024
        %1280 = vmatpush.bf16.msra.mxu0 %v1022
        %1281 = vmatpush.bf16.msra.mxu0 %v1020
        %1282 = vmatpush.bf16.msra.mxu0 %v1018
        %1283 = vmatpush.bf16.msra.mxu0 %v1016
        %1284 = vmatpush.bf16.msra.mxu0 %v1014
        %1285 = vmatpush.bf16.msra.mxu0 %v1012
        %1286 = vmatpush.bf16.msra.mxu0 %v1010
        %1287 = vmatmul.bf16.gmra.mxu0 %v755
        %v1288 = vpop.f32.mrf.mxu0
        %v1289 = vadd.f32 %v1260, %v1288
        %v1290 = vpop.f32.mrf.mxu0
        %v1291 = vadd.f32 %v1262, %v1290
        %1292 = vmatmul.bf16.gmra.mxu0 %v759
        %v1293 = vpop.f32.mrf.mxu0
        %v1294 = vadd.f32 %v1265, %v1293
        %v1295 = vpop.f32.mrf.mxu0
        %v1296 = vadd.f32 %v1267, %v1295
        %1297 = vmatmul.bf16.gmra.mxu0 %v763
        %v1298 = vpop.f32.mrf.mxu0
        %v1299 = vadd.f32 %v1270, %v1298
        %v1300 = vpop.f32.mrf.mxu0
        %v1301 = vadd.f32 %v1272, %v1300
        %1302 = vmatmul.bf16.gmra.mxu0 %v767
        %v1303 = vpop.f32.mrf.mxu0
        %v1304 = vadd.f32 %v1275, %v1303
        %v1305 = vpop.f32.mrf.mxu0
        %v1306 = vadd.f32 %v1277, %v1305
        %1307 = vdwg.mxu0
        %1308 = vmatpush.bf16.msra.mxu0 %v1040
        %1309 = vmatpush.bf16.msra.mxu0 %v1038
        %1310 = vmatpush.bf16.msra.mxu0 %v1036
        %1311 = vmatpush.bf16.msra.mxu0 %v1034
        %1312 = vmatpush.bf16.msra.mxu0 %v1032
        %1313 = vmatpush.bf16.msra.mxu0 %v1030
        %1314 = vmatpush.bf16.msra.mxu0 %v1028
        %1315 = vmatpush.bf16.msra.mxu0 %v1026
        %1316 = vmatmul.bf16.gmra.mxu0 %v756
        %v1317 = vpop.f32.mrf.mxu0
        %v1318 = vadd.f32 %v1289, %v1317
        %v1319 = vpop.f32.mrf.mxu0
        %v1320 = vadd.f32 %v1291, %v1319
        %1321 = vmatmul.bf16.gmra.mxu0 %v760
        %v1322 = vpop.f32.mrf.mxu0
        %v1323 = vadd.f32 %v1294, %v1322
        %v1324 = vpop.f32.mrf.mxu0
        %v1325 = vadd.f32 %v1296, %v1324
        %1326 = vmatmul.bf16.gmra.mxu0 %v764
        %v1327 = vpop.f32.mrf.mxu0
        %v1328 = vadd.f32 %v1299, %v1327
        %v1329 = vpop.f32.mrf.mxu0
        %v1330 = vadd.f32 %v1301, %v1329
        %1331 = vmatmul.bf16.gmra.mxu0 %v768
        %v1332 = vpop.f32.mrf.mxu0
        %v1333 = vadd.f32 %v1304, %v1332
        %v1334 = vpop.f32.mrf.mxu0
        %v1335 = vadd.f32 %v1306, %v1334
        %1336 = vdwg.mxu0
        %v1337 = vadd.f32 %v609, %v1202
        %v1338 = vadd.f32 %v610, %v1318
        %v1339 = vadd.f32 %v611, %v1204
        %v1340 = vadd.f32 %v612, %v1320
        %v1341 = vadd.f32 %v613, %v1207
        %v1342 = vadd.f32 %v614, %v1323
        %v1343 = vadd.f32 %v615, %v1209
        %v1344 = vadd.f32 %v616, %v1325
        %v1345 = vadd.f32 %v617, %v1212
        %v1346 = vadd.f32 %v618, %v1328
        %v1347 = vadd.f32 %v619, %v1214
        %v1348 = vadd.f32 %v620, %v1330
        %v1349 = vadd.f32 %v621, %v1217
        %v1350 = vadd.f32 %v622, %v1333
        %v1351 = vadd.f32 %v623, %v1219
        %v1352 = vadd.f32 %v624, %v1335
        %1353 = vst [vmem:[#allocation2] sm:$0xff] %v1337
        %1354 = vst [vmem:[#allocation2 + $0x8] sm:$0xff] %v1338
        %1355 = vst [vmem:[#allocation2 + $0x10] sm:$0xff] %v1339
        %1356 = vst [vmem:[#allocation2 + $0x18] sm:$0xff] %v1340
        %1357 = vst [vmem:[#allocation2 + $0x20] sm:$0xff] %v1341
        %1358 = vst [vmem:[#allocation2 + $0x28] sm:$0xff] %v1342
        %1359 = vst [vmem:[#allocation2 + $0x30] sm:$0xff] %v1343
        %1360 = vst [vmem:[#allocation2 + $0x38] sm:$0xff] %v1344
        %1361 = vst [vmem:[#allocation2 + $0x40] sm:$0xff] %v1345
        %1362 = vst [vmem:[#allocation2 + $0x48] sm:$0xff] %v1346
        %1363 = vst [vmem:[#allocation2 + $0x50] sm:$0xff] %v1347
        %1364 = vst [vmem:[#allocation2 + $0x58] sm:$0xff] %v1348
        %1365 = vst [vmem:[#allocation2 + $0x60] sm:$0xff] %v1349
        %1366 = vst [vmem:[#allocation2 + $0x68] sm:$0xff] %v1350
        %1367 = vst [vmem:[#allocation2 + $0x70] sm:$0xff] %v1351
        %1368 = vst [vmem:[#allocation2 + $0x78] sm:$0xff] %v1352
        // Predicated region
        $region79: #{res_classifier_forward.4} parent=69 // pred_check
          %p1369 = pneg %p589
        $region80: #{res_classifier_forward.4} parent=69 // pred_check_branch
          %1371 = sbr.rel (%p1369) target = $region82
        $region81: #{res_classifier_forward.4} parent=69 // pred_region
          %v1372 = vld [vmem:[#allocation2] sm:$0xff]
          %v1373 = vld [vmem:[#allocation2 + $0x8] sm:$0xff]
          %v1374 = vld [vmem:[#allocation2 + $0x10] sm:$0xff]
          %v1375 = vld [vmem:[#allocation2 + $0x18] sm:$0xff]
          %v1376 = vld [vmem:[#allocation2 + $0x20] sm:$0xff]
          %v1377 = vld [vmem:[#allocation2 + $0x28] sm:$0xff]
          %v1378 = vld [vmem:[#allocation2 + $0x30] sm:$0xff]
          %v1379 = vld [vmem:[#allocation2 + $0x38] sm:$0xff]
          %v1380 = vld [vmem:[#allocation2 + $0x40] sm:$0xff]
          %v1381 = vld [vmem:[#allocation2 + $0x48] sm:$0xff]
          %v1382 = vld [vmem:[#allocation2 + $0x50] sm:$0xff]
          %v1383 = vld [vmem:[#allocation2 + $0x58] sm:$0xff]
          %v1384 = vld [vmem:[#allocation2 + $0x60] sm:$0xff]
          %v1385 = vld [vmem:[#allocation2 + $0x68] sm:$0xff]
          %v1386 = vld [vmem:[#allocation2 + $0x70] sm:$0xff]
          %v1387 = vld [vmem:[#allocation2 + $0x78] sm:$0xff]
          %v1388 = vld [vmem:[%s580] sm:$0x3]
          %v1390 = vperm.slane %v1388, 0
          %v1391 = vperm.slane %v1388, 1
          %v1394 = vmul.f32 %v1372, %v1390
          %v1395 = vmul.f32 %v1373, %v1391
          %v1396 = vmul.f32 %v1374, %v1390
          %v1397 = vmul.f32 %v1375, %v1391
          %v1398 = vmul.f32 %v1376, %v1390
          %v1399 = vmul.f32 %v1377, %v1391
          %v1400 = vmul.f32 %v1378, %v1390
          %v1401 = vmul.f32 %v1379, %v1391
          %v1402 = vmul.f32 %v1380, %v1390
          %v1403 = vmul.f32 %v1381, %v1391
          %v1404 = vmul.f32 %v1382, %v1390
          %v1405 = vmul.f32 %v1383, %v1391
          %v1406 = vmul.f32 %v1384, %v1390
          %v1407 = vmul.f32 %v1385, %v1391
          %v1408 = vmul.f32 %v1386, %v1390
          %v1409 = vmul.f32 %v1387, %v1391
          %v1410 = vld [vmem:[%s585] sm:$0x3]
          %v1412 = vperm.slane %v1410, 0
          %v1413 = vperm.slane %v1410, 1
          %v1416 = vadd.f32 %v1394, %v1412
          %v1417 = vadd.f32 %v1395, %v1413
          %v1418 = vadd.f32 %v1396, %v1412
          %v1419 = vadd.f32 %v1397, %v1413
          %v1420 = vadd.f32 %v1398, %v1412
          %v1421 = vadd.f32 %v1399, %v1413
          %v1422 = vadd.f32 %v1400, %v1412
          %v1423 = vadd.f32 %v1401, %v1413
          %v1424 = vadd.f32 %v1402, %v1412
          %v1425 = vadd.f32 %v1403, %v1413
          %v1426 = vadd.f32 %v1404, %v1412
          %v1427 = vadd.f32 %v1405, %v1413
          %v1428 = vadd.f32 %v1406, %v1412
          %v1429 = vadd.f32 %v1407, %v1413
          %v1430 = vadd.f32 %v1408, %v1412
          %v1431 = vadd.f32 %v1409, %v1413
          %v1432 = vmax.f32 %v1416, 0.0
          %v1433 = vmax.f32 %v1417, 0.0
          %v1434 = vmax.f32 %v1418, 0.0
          %v1435 = vmax.f32 %v1419, 0.0
          %v1436 = vmax.f32 %v1420, 0.0
          %v1437 = vmax.f32 %v1421, 0.0
          %v1438 = vmax.f32 %v1422, 0.0
          %v1439 = vmax.f32 %v1423, 0.0
          %v1440 = vmax.f32 %v1424, 0.0
          %v1441 = vmax.f32 %v1425, 0.0
          %v1442 = vmax.f32 %v1426, 0.0
          %v1443 = vmax.f32 %v1427, 0.0
          %v1444 = vmax.f32 %v1428, 0.0
          %v1445 = vmax.f32 %v1429, 0.0
          %v1446 = vmax.f32 %v1430, 0.0
          %v1447 = vmax.f32 %v1431, 0.0
          %1448 = vst [vmem:[%s562] sm:$0xff] %v1432
          %1449 = vst [vmem:[%s562 + $0x8] sm:$0xff] %v1433
          %1450 = vst [vmem:[%s562 + $0x10] sm:$0xff] %v1434
          %1451 = vst [vmem:[%s562 + $0x18] sm:$0xff] %v1435
          %1452 = vst [vmem:[%s562 + $0x20] sm:$0xff] %v1436
          %1453 = vst [vmem:[%s562 + $0x28] sm:$0xff] %v1437
          %1454 = vst [vmem:[%s562 + $0x30] sm:$0xff] %v1438
          %1455 = vst [vmem:[%s562 + $0x38] sm:$0xff] %v1439
          %1456 = vst [vmem:[%s562 + $0x40] sm:$0xff] %v1440
          %1457 = vst [vmem:[%s562 + $0x48] sm:$0xff] %v1441
          %1458 = vst [vmem:[%s562 + $0x50] sm:$0xff] %v1442
          %1459 = vst [vmem:[%s562 + $0x58] sm:$0xff] %v1443
          %1460 = vst [vmem:[%s562 + $0x60] sm:$0xff] %v1444
          %1461 = vst [vmem:[%s562 + $0x68] sm:$0xff] %v1445
          %1462 = vst [vmem:[%s562 + $0x70] sm:$0xff] %v1446
          %1463 = vst [vmem:[%s562 + $0x78] sm:$0xff] %v1447
        $region82: #{res_classifier_forward.4} parent=69 // pred_fallthru
          _
        %s1464 = sand.u32 %s152, 1
        %s1465 = sand.u32 %s152, 1
        %s1466 = smul.addr %s1465, 128
        %s1467 = scalar_lea.vmem [#allocation4], %s1466
        // Predicated region
        $region83: #{res_classifier_forward.4} parent=69 // pred_check
          %p1468 = pneg %p162
        $region84: #{res_classifier_forward.4} parent=69 // pred_check_branch
          %1470 = sbr.rel (%p1468) target = $region86
        $region85: #{res_classifier_forward.4} parent=69 // pred_region
          %s1471 = smul.u32 8, %s20
          %s1472 = smul.u32 2, %s21
          %s1473 = smul.addr %s1471, 4
          %s1474 = sadd.s32 %s1472, %s1473
          %s1475 = smul.addr %s1474, 8
          %s1476 = scalar_lea.vmem %s4, %s1475
          // Predicated region
          $region87: #{res_classifier_forward.4} parent=85 // pred_check
            _
          $region88: #{res_classifier_forward.4} parent=85 // pred_check_branch
            %1478 = sbr.rel (0) target = $region90
          $region89: #{res_classifier_forward.4} parent=85 // pred_region
            // Predicated region
            $region91: #{res_classifier_forward.4} parent=89 // pred_check
              _
            $region92: #{res_classifier_forward.4} parent=89 // pred_check_branch
              %1480 = sbr.rel (0) target = $region94
            $region93: #{res_classifier_forward.4} parent=89 // pred_region
              loop: start=0, step=1, limit=1
              $region95: #{res_classifier_forward.4} parent=93 // loop_pre_header
                _
              $region96: #{res_classifier_forward.4} parent=93 // loop_header
                %s1482 = sphi 0, %s1486
                %p1483 = scmp.ge.s32.totalorder %s1482, 1
                %s1487 = sphi %s1467, %s1467
                %s1488 = sphi %s1476, %s1476
              $region97: #{res_classifier_forward.4} parent=93 // loop_header_branch
                %1485 = sbr.rel (%p1483) target = $region101
              $region98: #{res_classifier_forward.4} parent=93 // loop_body
                %v1489 = vld [vmem:[%s1487] sm:$0xff]
                %1490 = vst [vmem:[%s1488] sm:$0xff] %v1489
                %v1491 = vld [vmem:[%s1487 + $0x8] sm:$0xff]
                %1492 = vst [vmem:[%s1488 + $0x8] sm:$0xff] %v1491
                %v1493 = vld [vmem:[%s1487 + $0x10] sm:$0xff]
                %1494 = vst [vmem:[%s1488 + $0x20] sm:$0xff] %v1493
                %v1495 = vld [vmem:[%s1487 + $0x18] sm:$0xff]
                %1496 = vst [vmem:[%s1488 + $0x28] sm:$0xff] %v1495
                %v1497 = vld [vmem:[%s1487 + $0x20] sm:$0xff]
                %1498 = vst [vmem:[%s1488 + $0x40] sm:$0xff] %v1497
                %v1499 = vld [vmem:[%s1487 + $0x28] sm:$0xff]
                %1500 = vst [vmem:[%s1488 + $0x48] sm:$0xff] %v1499
                %v1501 = vld [vmem:[%s1487 + $0x30] sm:$0xff]
                %1502 = vst [vmem:[%s1488 + $0x60] sm:$0xff] %v1501
                %v1503 = vld [vmem:[%s1487 + $0x38] sm:$0xff]
                %1504 = vst [vmem:[%s1488 + $0x68] sm:$0xff] %v1503
                %v1505 = vld [vmem:[%s1487 + $0x40] sm:$0xff]
                %1506 = vst [vmem:[%s1488 + $0x80] sm:$0xff] %v1505
                %v1507 = vld [vmem:[%s1487 + $0x48] sm:$0xff]
                %1508 = vst [vmem:[%s1488 + $0x88] sm:$0xff] %v1507
                %v1509 = vld [vmem:[%s1487 + $0x50] sm:$0xff]
                %1510 = vst [vmem:[%s1488 + $0xa0] sm:$0xff] %v1509
                %v1511 = vld [vmem:[%s1487 + $0x58] sm:$0xff]
                %1512 = vst [vmem:[%s1488 + $0xa8] sm:$0xff] %v1511
                %v1513 = vld [vmem:[%s1487 + $0x60] sm:$0xff]
                %1514 = vst [vmem:[%s1488 + $0xc0] sm:$0xff] %v1513
                %v1515 = vld [vmem:[%s1487 + $0x68] sm:$0xff]
                %1516 = vst [vmem:[%s1488 + $0xc8] sm:$0xff] %v1515
                %v1517 = vld [vmem:[%s1487 + $0x70] sm:$0xff]
                %1518 = vst [vmem:[%s1488 + $0xe0] sm:$0xff] %v1517
                %v1519 = vld [vmem:[%s1487 + $0x78] sm:$0xff]
                %1520 = vst [vmem:[%s1488 + $0xe8] sm:$0xff] %v1519
              $region99: #{res_classifier_forward.4} parent=93 // loop_footer
                %s1486 = sadd.s32 1, %s1482
              $region100: #{res_classifier_forward.4} parent=93 // loop_footer_branch
                %1481 = sbr.rel target = $region96
              $region101: #{res_classifier_forward.4} parent=93 // loop_exit
                _
            $region94: #{res_classifier_forward.4} parent=89 // pred_fallthru
              _
            // Predicated region
            $region102: #{res_classifier_forward.4} parent=89 // pred_check
              _
            $region103: #{res_classifier_forward.4} parent=89 // pred_check_branch
              %1522 = sbr.rel target = $region105
            $region104: #{res_classifier_forward.4} parent=89 // pred_region
              _
            $region105: #{res_classifier_forward.4} parent=89 // pred_fallthru
              _
          $region90: #{res_classifier_forward.4} parent=85 // pred_fallthru
            _
          %1523 = vnop
        $region86: #{res_classifier_forward.4} parent=69 // pred_fallthru
          _
      $region70: #{res_classifier_forward.4} parent=5 // pred_fallthru
        _
      %p1524 = scmp.le.s32.totalorder 2, %s10
      // Predicated region
      $region106: #{res_classifier_forward.4} parent=5 // pred_check
        %p1525 = pneg %p1524
      $region107: #{res_classifier_forward.4} parent=5 // pred_check_branch
        %1527 = sbr.rel (%p1525) target = $region109
      $region108: #{res_classifier_forward.4} parent=5 // pred_region
        %s1528 = ssub.s32 %s10, 2
        // Predicated region
        $region110: #{res_classifier_forward.4} parent=108 // pred_check
          %p1529 = pneg %p168
        $region111: #{res_classifier_forward.4} parent=108 // pred_check_branch
          %1531 = sbr.rel (%p1529) target = $region113
        $region112: #{res_classifier_forward.4} parent=108 // pred_region
          %s1532 = sand.u32 %s153, 1
          %s1533 = sand.u32 %s153, 1
          %s1534 = smul.addr %s1533, 128
          %s1535 = scalar_lea.vmem [#allocation4], %s1534
        $region113: #{res_classifier_forward.4} parent=108 // pred_fallthru
          _
      $region109: #{res_classifier_forward.4} parent=5 // pred_fallthru
        _
    $region6: #{res_classifier_forward.4} parent=1 // loop_footer
      %s14 = sadd.s32 1, %s10
    $region7: #{res_classifier_forward.4} parent=1 // loop_footer_branch
      %9 = sbr.rel target = $region3
    $region8: #{res_classifier_forward.4} parent=1 // loop_exit
      _

</llo_original>
